<compile_context>
chip_gen: v5e
topology: v5e:2x2
jax: 0.10.0
libtpu: 0.0.40
codegen_flags: <defaults>
</compile_context>

<pallas_src>
import functools

import jax
import jax.numpy as jnp
from jax.experimental import pallas as pl
from jax.experimental.pallas import tpu as pltpu

LSTM_HIDDEN = 20
LSTM_LAYER = 2
INPUT_SIZE = 6
GATE_PAD = 128          # each gate padded to one full 128-lane block


def cpg_kernel(x_ref, wih0_ref, whh0_ref, b0_ref, wcat1_ref, b1_ref,
               wcls_ref, bcls_ref, out_ref, *, gate_pad):
    GP = gate_pad
    G4 = 4 * GP
    T, B, F = x_ref.shape

    # ---- hoisted layer-0 input projection (one matmul for all T steps) ----
    x_flat = x_ref[...].reshape(T * B, F)                       # (T*B, F)
    gin0 = jnp.dot(x_flat, wih0_ref[...],
                   preferred_element_type=jnp.float32)          # (T*B, 4*GP)
    gin0 = (gin0 + b0_ref[...]).reshape(T, B, G4)               # bias folded in once

    whh0 = whh0_ref[...]                                        # (GP, 4*GP)
    wcat1 = wcat1_ref[...]                                      # (2*GP, 4*GP)
    b1 = jnp.broadcast_to(b1_ref[...], (B, G4))                 # hoisted broadcast

    h0 = jnp.zeros((B, GP), jnp.float32)
    c0 = jnp.zeros((B, GP), jnp.float32)
    h1 = jnp.zeros((B, GP), jnp.float32)
    c1 = jnp.zeros((B, GP), jnp.float32)

    def gates_to_ifgo(gates):
        # PyTorch gate order i, f, g, o; each gate is a full 128-lane block,
        # so these slices are vreg-aligned (no lane realignment).
        i = jax.nn.sigmoid(gates[:, 0 * GP:1 * GP])
        f = jax.nn.sigmoid(gates[:, 1 * GP:2 * GP])
        g = jnp.tanh(gates[:, 2 * GP:3 * GP])
        o = jax.nn.sigmoid(gates[:, 3 * GP:4 * GP])
        return i, f, g, o

    # ---- fully unrolled time loop (T is static and small) ----
    for t in range(T):
        # layer 0: input projection hoisted; only the recurrent matmul remains
        g0 = gin0[t] + jnp.dot(h0, whh0, preferred_element_type=jnp.float32)
        i0, f0, gg0, o0 = gates_to_ifgo(g0)
        c0 = f0 * c0 + i0 * gg0
        h0 = o0 * jnp.tanh(c0)

        # layer 1: fused input + recurrent matmul on concat([h0, h1])
        xh = jnp.concatenate([h0, h1], axis=-1)                 # (B, 2*GP)
        g1 = jnp.dot(xh, wcat1, preferred_element_type=jnp.float32) + b1
        i1, f1, gg1, o1 = gates_to_ifgo(g1)
        c1 = f1 * c1 + i1 * gg1
        h1 = o1 * jnp.tanh(c1)

    # ---- classifier on the VPU (avoid a 1-lane MXU result) + ReLU ----
    logits = jnp.sum(h1 * wcls_ref[...], axis=-1, keepdims=True) + bcls_ref[...]
    out_ref[...] = jnp.maximum(logits, 0.0)


def init_params(key, hidden=LSTM_HIDDEN, input_size=INPUT_SIZE):
    """Deterministic params matching torch.nn.LSTM / nn.Linear default shapes."""
    k_lstm = 1.0 / jnp.sqrt(hidden)
    k_cls = 1.0 / jnp.sqrt(hidden)
    keys = jax.random.split(key, 12)
    u = lambda k, shape, bound: jax.random.uniform(
        k, shape, jnp.float32, minval=-bound, maxval=bound)
    params = {
        "w_ih_l0": u(keys[0], (4 * hidden, input_size), k_lstm),
        "w_hh_l0": u(keys[1], (4 * hidden, hidden), k_lstm),
        "b_ih_l0": u(keys[2], (4 * hidden,), k_lstm),
        "b_hh_l0": u(keys[3], (4 * hidden,), k_lstm),
        "w_ih_l1": u(keys[4], (4 * hidden, hidden), k_lstm),
        "w_hh_l1": u(keys[5], (4 * hidden, hidden), k_lstm),
        "b_ih_l1": u(keys[6], (4 * hidden,), k_lstm),
        "b_hh_l1": u(keys[7], (4 * hidden,), k_lstm),
        "w_cls": u(keys[8], (1, hidden), k_cls),
        "b_cls": u(keys[9], (1,), k_cls),
    }
    return params


def cpg_predictor(x, params, hidden=LSTM_HIDDEN):
    """x: (B, T, 6) float32, batch_first like the PyTorch module."""
    B, T, F = x.shape
    H = hidden
    GP = GATE_PAD
    x_tm = jnp.transpose(x, (1, 0, 2)).astype(jnp.float32)      # (T, B, F)

    # --- weight prep: transpose, fuse biases, pad each gate to 128 lanes ---
    wih0_t = params["w_ih_l0"].T.astype(jnp.float32)            # (F, 4H)
    whh0_t = params["w_hh_l0"].T.astype(jnp.float32)            # (H, 4H)
    wih1_t = params["w_ih_l1"].T.astype(jnp.float32)            # (H, 4H)
    whh1_t = params["w_hh_l1"].T.astype(jnp.float32)            # (H, 4H)
    b0 = (params["b_ih_l0"] + params["b_hh_l0"]).astype(jnp.float32)
    b1 = (params["b_ih_l1"] + params["b_hh_l1"]).astype(jnp.float32)

    def pad_gate_w(w_t, rows_out):
        # (rows_in, 4H) -> (rows_out, 4*GP); gate k occupies lanes [k*GP, k*GP+H)
        rows_in = w_t.shape[0]
        w4 = w_t.reshape(rows_in, 4, H)
        out = jnp.zeros((rows_out, 4, GP), jnp.float32)
        out = out.at[:rows_in, :, :H].set(w4)
        return out.reshape(rows_out, 4 * GP)

    def pad_gate_b(b):
        b4 = b.reshape(4, H)
        out = jnp.zeros((4, GP), jnp.float32).at[:, :H].set(b4)
        return out.reshape(1, 4 * GP)

    wih0_p = pad_gate_w(wih0_t, F)                              # (F, 4*GP)
    whh0_p = pad_gate_w(whh0_t, GP)                             # (GP, 4*GP)
    # layer-1 fused weight: [W_ih_pad ; W_hh_pad] -> (2*GP, 4*GP)
    wcat1_p = jnp.concatenate(
        [pad_gate_w(wih1_t, GP), pad_gate_w(whh1_t, GP)], axis=0)
    b0_p = pad_gate_b(b0)                                       # (1, 4*GP)
    b1_p = pad_gate_b(b1)                                       # (1, 4*GP)

    wcls_p = jnp.zeros((1, GP), jnp.float32).at[0, :H].set(
        params["w_cls"].reshape(H).astype(jnp.float32))         # (1, GP)
    bcls = params["b_cls"].reshape(1, 1).astype(jnp.float32)    # (1, 1)

    # Batch grid: shard big batches across TensorCores (v7x megacore).
    # For small / non-multiple-of-8 batches it collapses to a single block
    # equal to the full arrays (satisfies the (8,128) BlockSpec rule).
    b_tile = 8 if (B % 8 == 0) else B
    n_blocks = B // b_tile

    grid_spec = pltpu.PrefetchScalarGridSpec(
        num_scalar_prefetch=0,
        grid=(n_blocks,),
        in_specs=[
            pl.BlockSpec((T, b_tile, F), lambda i: (0, i, 0)),      # x (time-major)
            pl.BlockSpec((F, 4 * GP), lambda i: (0, 0)),            # wih0 (padded)
            pl.BlockSpec((GP, 4 * GP), lambda i: (0, 0)),           # whh0 (padded)
            pl.BlockSpec((1, 4 * GP), lambda i: (0, 0)),            # b0
            pl.BlockSpec((2 * GP, 4 * GP), lambda i: (0, 0)),       # wcat1 (fused)
            pl.BlockSpec((1, 4 * GP), lambda i: (0, 0)),            # b1
            pl.BlockSpec((1, GP), lambda i: (0, 0)),                # wcls
            pl.BlockSpec((1, 1), lambda i: (0, 0)),                 # bcls
        ],
        out_specs=pl.BlockSpec((b_tile, 1), lambda i: (i, 0)),
    )

    out = pl.pallas_call(
        functools.partial(cpg_kernel, gate_pad=GP),
        out_shape=jax.ShapeDtypeStruct((B, 1), jnp.float32),
        grid_spec=grid_spec,
        compiler_params=pltpu.CompilerParams(
            dimension_semantics=("parallel",)),
    )(x_tm, wih0_p, whh0_p, b0_p, wcat1_p, b1_p, wcls_p, bcls)
    return out


def cpg_predictor_ref(x, params, hidden=LSTM_HIDDEN):
    """Pure-JAX reference (mirrors torch semantics) for a correctness check."""
    B, T, F = x.shape
    H = hidden

    def cell(x_t, h, c, w_ih, w_hh, b_ih, b_hh):
        g = x_t @ w_ih.T + b_ih + h @ w_hh.T + b_hh
        i = jax.nn.sigmoid(g[:, 0:H])
        f = jax.nn.sigmoid(g[:, H:2 * H])
        gg = jnp.tanh(g[:, 2 * H:3 * H])
        o = jax.nn.sigmoid(g[:, 3 * H:4 * H])
        c = f * c + i * gg
        h = o * jnp.tanh(c)
        return h, c

    h0 = c0 = h1 = c1 = jnp.zeros((B, H), jnp.float32)
    for t in range(T):
        h0, c0 = cell(x[:, t, :], h0, c0, params["w_ih_l0"], params["w_hh_l0"],
                      params["b_ih_l0"], params["b_hh_l0"])
        h1, c1 = cell(h0, h1, c1, params["w_ih_l1"], params["w_hh_l1"],
                      params["b_ih_l1"], params["b_hh_l1"])
    logits = h1 @ params["w_cls"].T + params["b_cls"]
    return jnp.maximum(logits, 0.0)


if __name__ == "__main__":
    key = jax.random.PRNGKey(0)
    k_param, k_x = jax.random.split(key)

    B, T = 2, 8
    x = jax.random.normal(k_x, (B, T, INPUT_SIZE), dtype=jnp.float32)
    params = init_params(k_param)

    out = cpg_predictor(x, params)
    out = jax.block_until_ready(out)

    ref = cpg_predictor_ref(x, params)
    assert out.shape == (B, 1), out.shape
    assert jnp.allclose(out, ref, atol=1e-4, rtol=1e-4), (out, ref)

    print("KERNEL_OK")
</pallas_src>

<mosaic_0001>
module attributes {stable_mosaic.version = 11 : i64} {
  func.func @cpg_kernel(%arg0: i32, %arg1: memref<8x2x6xf32, #tpu.memory_space<vmem>>, %arg2: memref<6x512xf32, #tpu.memory_space<vmem>>, %arg3: memref<128x512xf32, #tpu.memory_space<vmem>>, %arg4: memref<1x512xf32, #tpu.memory_space<vmem>>, %arg5: memref<256x512xf32, #tpu.memory_space<vmem>>, %arg6: memref<1x512xf32, #tpu.memory_space<vmem>>, %arg7: memref<1x128xf32, #tpu.memory_space<vmem>>, %arg8: memref<1x1xf32, #tpu.memory_space<vmem>>, %arg9: memref<2x1xf32, #tpu.memory_space<vmem>>) attributes {dimension_semantics = [#tpu.dimension_semantics<parallel>], iteration_bounds = array<i64: 1>, scalar_prefetch = 0 : i64, scratch_operands = 0 : i64, tpu.core_type = #tpu.core_type<tc>, window_params = [{transform_indices = @transform_0, window_bounds = array<i64: 8, 2, 6>}, {pipeline_mode = #tpu.pipeline_mode<synchronous>, transform_indices = @transform_1, window_bounds = array<i64: 6, 512>}, {pipeline_mode = #tpu.pipeline_mode<synchronous>, transform_indices = @transform_2, window_bounds = array<i64: 128, 512>}, {pipeline_mode = #tpu.pipeline_mode<synchronous>, transform_indices = @transform_3, window_bounds = array<i64: 1, 512>}, {pipeline_mode = #tpu.pipeline_mode<synchronous>, transform_indices = @transform_4, window_bounds = array<i64: 256, 512>}, {pipeline_mode = #tpu.pipeline_mode<synchronous>, transform_indices = @transform_5, window_bounds = array<i64: 1, 512>}, {pipeline_mode = #tpu.pipeline_mode<synchronous>, transform_indices = @transform_6, window_bounds = array<i64: 1, 128>}, {pipeline_mode = #tpu.pipeline_mode<synchronous>, transform_indices = @transform_7, window_bounds = array<i64: 1, 1>}, {transform_indices = @transform_8, window_bounds = array<i64: 2, 1>}]} {
    %c0 = arith.constant 0 : index
    %c0_0 = arith.constant 0 : index
    %c0_1 = arith.constant 0 : index
    %0 = vector.load %arg1[%c0, %c0_0, %c0_1] : memref<8x2x6xf32, #tpu.memory_space<vmem>>, vector<8x2x6xf32>
    %1 = vector.shape_cast %0 : vector<8x2x6xf32> to vector<16x6xf32>
    %c0_2 = arith.constant 0 : index
    %c0_3 = arith.constant 0 : index
    %2 = vector.load %arg2[%c0_2, %c0_3] : memref<6x512xf32, #tpu.memory_space<vmem>>, vector<6x512xf32>
    %cst = arith.constant dense<0.000000e+00> : vector<16x512xf32>
    %3 = tpu.matmul %1, %2, %cst {dimension_numbers = #tpu.dot_dimension_numbers<[1], [0], [0], [1], [0, 0, 1, 1], [], []>} : vector<16x6xf32>, vector<6x512xf32>, vector<16x512xf32> -> vector<16x512xf32>
    %c0_4 = arith.constant 0 : index
    %c0_5 = arith.constant 0 : index
    %4 = vector.load %arg4[%c0_4, %c0_5] : memref<1x512xf32, #tpu.memory_space<vmem>>, vector<1x512xf32>
    %5 = vector.broadcast %4 : vector<1x512xf32> to vector<16x512xf32>
    %6 = arith.addf %3, %5 : vector<16x512xf32>
    %7 = vector.shape_cast %6 : vector<16x512xf32> to vector<8x2x512xf32>
    %c0_6 = arith.constant 0 : index
    %c0_7 = arith.constant 0 : index
    %8 = vector.load %arg3[%c0_6, %c0_7] : memref<128x512xf32, #tpu.memory_space<vmem>>, vector<128x512xf32>
    %c0_8 = arith.constant 0 : index
    %c0_9 = arith.constant 0 : index
    %9 = vector.load %arg5[%c0_8, %c0_9] : memref<256x512xf32, #tpu.memory_space<vmem>>, vector<256x512xf32>
    %c0_10 = arith.constant 0 : index
    %c0_11 = arith.constant 0 : index
    %10 = vector.load %arg6[%c0_10, %c0_11] : memref<1x512xf32, #tpu.memory_space<vmem>>, vector<1x512xf32>
    %11 = vector.shape_cast %10 : vector<1x512xf32> to vector<1x512xf32>
    %12 = vector.broadcast %11 : vector<1x512xf32> to vector<2x512xf32>
    %cst_12 = arith.constant 0.000000e+00 : f32
    %13 = vector.broadcast %cst_12 : f32 to vector<2x128xf32>
    %cst_13 = arith.constant 0.000000e+00 : f32
    %14 = vector.broadcast %cst_13 : f32 to vector<2x128xf32>
    %cst_14 = arith.constant 0.000000e+00 : f32
    %15 = vector.broadcast %cst_14 : f32 to vector<2x128xf32>
    %cst_15 = arith.constant 0.000000e+00 : f32
    %16 = vector.broadcast %cst_15 : f32 to vector<2x128xf32>
    %17 = vector.extract_strided_slice %7 {offsets = [0, 0, 0], sizes = [1, 2, 512], strides = [1, 1, 1]} : vector<8x2x512xf32> to vector<1x2x512xf32>
    %18 = vector.shape_cast %17 : vector<1x2x512xf32> to vector<2x512xf32>
    %cst_16 = arith.constant dense<0.000000e+00> : vector<2x512xf32>
    %19 = tpu.matmul %13, %8, %cst_16 {dimension_numbers = #tpu.dot_dimension_numbers<[1], [0], [0], [1], [0, 0, 1, 1], [], []>} : vector<2x128xf32>, vector<128x512xf32>, vector<2x512xf32> -> vector<2x512xf32>
    %20 = arith.addf %18, %19 : vector<2x512xf32>
    %21 = vector.extract_strided_slice %20 {offsets = [0, 0], sizes = [2, 128], strides = [1, 1]} : vector<2x512xf32> to vector<2x128xf32>
    %22 = arith.negf %21 : vector<2x128xf32>
    %23 = math.exp %22 : vector<2x128xf32>
    %cst_17 = arith.constant 1.000000e+00 : f32
    %24 = vector.broadcast %cst_17 : f32 to vector<2x128xf32>
    %25 = arith.addf %24, %23 : vector<2x128xf32>
    %26 = arith.divf %24, %25 : vector<2x128xf32>
    %27 = vector.extract_strided_slice %20 {offsets = [0, 128], sizes = [2, 128], strides = [1, 1]} : vector<2x512xf32> to vector<2x128xf32>
    %28 = arith.negf %27 : vector<2x128xf32>
    %29 = math.exp %28 : vector<2x128xf32>
    %cst_18 = arith.constant 1.000000e+00 : f32
    %30 = vector.broadcast %cst_18 : f32 to vector<2x128xf32>
    %31 = arith.addf %30, %29 : vector<2x128xf32>
    %32 = arith.divf %30, %31 : vector<2x128xf32>
    %33 = vector.extract_strided_slice %20 {offsets = [0, 256], sizes = [2, 128], strides = [1, 1]} : vector<2x512xf32> to vector<2x128xf32>
    %34 = math.tanh %33 : vector<2x128xf32>
    %35 = vector.extract_strided_slice %20 {offsets = [0, 384], sizes = [2, 128], strides = [1, 1]} : vector<2x512xf32> to vector<2x128xf32>
    %36 = arith.negf %35 : vector<2x128xf32>
    %37 = math.exp %36 : vector<2x128xf32>
    %cst_19 = arith.constant 1.000000e+00 : f32
    %38 = vector.broadcast %cst_19 : f32 to vector<2x128xf32>
    %39 = arith.addf %38, %37 : vector<2x128xf32>
    %40 = arith.divf %38, %39 : vector<2x128xf32>
    %41 = arith.mulf %32, %14 : vector<2x128xf32>
    %42 = arith.mulf %26, %34 : vector<2x128xf32>
    %43 = arith.addf %41, %42 : vector<2x128xf32>
    %44 = math.tanh %43 : vector<2x128xf32>
    %45 = arith.mulf %40, %44 : vector<2x128xf32>
    %46 = tpu.concatenate %45, %15 in 1 : vector<2x128xf32>, vector<2x128xf32> -> vector<2x256xf32>
    %cst_20 = arith.constant dense<0.000000e+00> : vector<2x512xf32>
    %47 = tpu.matmul %46, %9, %cst_20 {dimension_numbers = #tpu.dot_dimension_numbers<[1], [0], [0], [1], [0, 0, 1, 1], [], []>} : vector<2x256xf32>, vector<256x512xf32>, vector<2x512xf32> -> vector<2x512xf32>
    %48 = arith.addf %47, %12 : vector<2x512xf32>
    %49 = vector.extract_strided_slice %48 {offsets = [0, 0], sizes = [2, 128], strides = [1, 1]} : vector<2x512xf32> to vector<2x128xf32>
    %50 = arith.negf %49 : vector<2x128xf32>
    %51 = math.exp %50 : vector<2x128xf32>
    %cst_21 = arith.constant 1.000000e+00 : f32
    %52 = vector.broadcast %cst_21 : f32 to vector<2x128xf32>
    %53 = arith.addf %52, %51 : vector<2x128xf32>
    %54 = arith.divf %52, %53 : vector<2x128xf32>
    %55 = vector.extract_strided_slice %48 {offsets = [0, 128], sizes = [2, 128], strides = [1, 1]} : vector<2x512xf32> to vector<2x128xf32>
    %56 = arith.negf %55 : vector<2x128xf32>
    %57 = math.exp %56 : vector<2x128xf32>
    %cst_22 = arith.constant 1.000000e+00 : f32
    %58 = vector.broadcast %cst_22 : f32 to vector<2x128xf32>
    %59 = arith.addf %58, %57 : vector<2x128xf32>
    %60 = arith.divf %58, %59 : vector<2x128xf32>
    %61 = vector.extract_strided_slice %48 {offsets = [0, 256], sizes = [2, 128], strides = [1, 1]} : vector<2x512xf32> to vector<2x128xf32>
    %62 = math.tanh %61 : vector<2x128xf32>
    %63 = vector.extract_strided_slice %48 {offsets = [0, 384], sizes = [2, 128], strides = [1, 1]} : vector<2x512xf32> to vector<2x128xf32>
    %64 = arith.negf %63 : vector<2x128xf32>
    %65 = math.exp %64 : vector<2x128xf32>
    %cst_23 = arith.constant 1.000000e+00 : f32
    %66 = vector.broadcast %cst_23 : f32 to vector<2x128xf32>
    %67 = arith.addf %66, %65 : vector<2x128xf32>
    %68 = arith.divf %66, %67 : vector<2x128xf32>
    %69 = arith.mulf %60, %16 : vector<2x128xf32>
    %70 = arith.mulf %54, %62 : vector<2x128xf32>
    %71 = arith.addf %69, %70 : vector<2x128xf32>
    %72 = math.tanh %71 : vector<2x128xf32>
    %73 = arith.mulf %68, %72 : vector<2x128xf32>
    %74 = vector.extract_strided_slice %7 {offsets = [1, 0, 0], sizes = [1, 2, 512], strides = [1, 1, 1]} : vector<8x2x512xf32> to vector<1x2x512xf32>
    %75 = vector.shape_cast %74 : vector<1x2x512xf32> to vector<2x512xf32>
    %cst_24 = arith.constant dense<0.000000e+00> : vector<2x512xf32>
    %76 = tpu.matmul %45, %8, %cst_24 {dimension_numbers = #tpu.dot_dimension_numbers<[1], [0], [0], [1], [0, 0, 1, 1], [], []>} : vector<2x128xf32>, vector<128x512xf32>, vector<2x512xf32> -> vector<2x512xf32>
    %77 = arith.addf %75, %76 : vector<2x512xf32>
    %78 = vector.extract_strided_slice %77 {offsets = [0, 0], sizes = [2, 128], strides = [1, 1]} : vector<2x512xf32> to vector<2x128xf32>
    %79 = arith.negf %78 : vector<2x128xf32>
    %80 = math.exp %79 : vector<2x128xf32>
    %cst_25 = arith.constant 1.000000e+00 : f32
    %81 = vector.broadcast %cst_25 : f32 to vector<2x128xf32>
    %82 = arith.addf %81, %80 : vector<2x128xf32>
    %83 = arith.divf %81, %82 : vector<2x128xf32>
    %84 = vector.extract_strided_slice %77 {offsets = [0, 128], sizes = [2, 128], strides = [1, 1]} : vector<2x512xf32> to vector<2x128xf32>
    %85 = arith.negf %84 : vector<2x128xf32>
    %86 = math.exp %85 : vector<2x128xf32>
    %cst_26 = arith.constant 1.000000e+00 : f32
    %87 = vector.broadcast %cst_26 : f32 to vector<2x128xf32>
    %88 = arith.addf %87, %86 : vector<2x128xf32>
    %89 = arith.divf %87, %88 : vector<2x128xf32>
    %90 = vector.extract_strided_slice %77 {offsets = [0, 256], sizes = [2, 128], strides = [1, 1]} : vector<2x512xf32> to vector<2x128xf32>
    %91 = math.tanh %90 : vector<2x128xf32>
    %92 = vector.extract_strided_slice %77 {offsets = [0, 384], sizes = [2, 128], strides = [1, 1]} : vector<2x512xf32> to vector<2x128xf32>
    %93 = arith.negf %92 : vector<2x128xf32>
    %94 = math.exp %93 : vector<2x128xf32>
    %cst_27 = arith.constant 1.000000e+00 : f32
    %95 = vector.broadcast %cst_27 : f32 to vector<2x128xf32>
    %96 = arith.addf %95, %94 : vector<2x128xf32>
    %97 = arith.divf %95, %96 : vector<2x128xf32>
    %98 = arith.mulf %89, %43 : vector<2x128xf32>
    %99 = arith.mulf %83, %91 : vector<2x128xf32>
    %100 = arith.addf %98, %99 : vector<2x128xf32>
    %101 = math.tanh %100 : vector<2x128xf32>
    %102 = arith.mulf %97, %101 : vector<2x128xf32>
    %103 = tpu.concatenate %102, %73 in 1 : vector<2x128xf32>, vector<2x128xf32> -> vector<2x256xf32>
    %cst_28 = arith.constant dense<0.000000e+00> : vector<2x512xf32>
    %104 = tpu.matmul %103, %9, %cst_28 {dimension_numbers = #tpu.dot_dimension_numbers<[1], [0], [0], [1], [0, 0, 1, 1], [], []>} : vector<2x256xf32>, vector<256x512xf32>, vector<2x512xf32> -> vector<2x512xf32>
    %105 = arith.addf %104, %12 : vector<2x512xf32>
    %106 = vector.extract_strided_slice %105 {offsets = [0, 0], sizes = [2, 128], strides = [1, 1]} : vector<2x512xf32> to vector<2x128xf32>
    %107 = arith.negf %106 : vector<2x128xf32>
    %108 = math.exp %107 : vector<2x128xf32>
    %cst_29 = arith.constant 1.000000e+00 : f32
    %109 = vector.broadcast %cst_29 : f32 to vector<2x128xf32>
    %110 = arith.addf %109, %108 : vector<2x128xf32>
    %111 = arith.divf %109, %110 : vector<2x128xf32>
    %112 = vector.extract_strided_slice %105 {offsets = [0, 128], sizes = [2, 128], strides = [1, 1]} : vector<2x512xf32> to vector<2x128xf32>
    %113 = arith.negf %112 : vector<2x128xf32>
    %114 = math.exp %113 : vector<2x128xf32>
    %cst_30 = arith.constant 1.000000e+00 : f32
    %115 = vector.broadcast %cst_30 : f32 to vector<2x128xf32>
    %116 = arith.addf %115, %114 : vector<2x128xf32>
    %117 = arith.divf %115, %116 : vector<2x128xf32>
    %118 = vector.extract_strided_slice %105 {offsets = [0, 256], sizes = [2, 128], strides = [1, 1]} : vector<2x512xf32> to vector<2x128xf32>
    %119 = math.tanh %118 : vector<2x128xf32>
    %120 = vector.extract_strided_slice %105 {offsets = [0, 384], sizes = [2, 128], strides = [1, 1]} : vector<2x512xf32> to vector<2x128xf32>
    %121 = arith.negf %120 : vector<2x128xf32>
    %122 = math.exp %121 : vector<2x128xf32>
    %cst_31 = arith.constant 1.000000e+00 : f32
    %123 = vector.broadcast %cst_31 : f32 to vector<2x128xf32>
    %124 = arith.addf %123, %122 : vector<2x128xf32>
    %125 = arith.divf %123, %124 : vector<2x128xf32>
    %126 = arith.mulf %117, %71 : vector<2x128xf32>
    %127 = arith.mulf %111, %119 : vector<2x128xf32>
    %128 = arith.addf %126, %127 : vector<2x128xf32>
    %129 = math.tanh %128 : vector<2x128xf32>
    %130 = arith.mulf %125, %129 : vector<2x128xf32>
    %131 = vector.extract_strided_slice %7 {offsets = [2, 0, 0], sizes = [1, 2, 512], strides = [1, 1, 1]} : vector<8x2x512xf32> to vector<1x2x512xf32>
    %132 = vector.shape_cast %131 : vector<1x2x512xf32> to vector<2x512xf32>
    %cst_32 = arith.constant dense<0.000000e+00> : vector<2x512xf32>
    %133 = tpu.matmul %102, %8, %cst_32 {dimension_numbers = #tpu.dot_dimension_numbers<[1], [0], [0], [1], [0, 0, 1, 1], [], []>} : vector<2x128xf32>, vector<128x512xf32>, vector<2x512xf32> -> vector<2x512xf32>
    %134 = arith.addf %132, %133 : vector<2x512xf32>
    %135 = vector.extract_strided_slice %134 {offsets = [0, 0], sizes = [2, 128], strides = [1, 1]} : vector<2x512xf32> to vector<2x128xf32>
    %136 = arith.negf %135 : vector<2x128xf32>
    %137 = math.exp %136 : vector<2x128xf32>
    %cst_33 = arith.constant 1.000000e+00 : f32
    %138 = vector.broadcast %cst_33 : f32 to vector<2x128xf32>
    %139 = arith.addf %138, %137 : vector<2x128xf32>
    %140 = arith.divf %138, %139 : vector<2x128xf32>
    %141 = vector.extract_strided_slice %134 {offsets = [0, 128], sizes = [2, 128], strides = [1, 1]} : vector<2x512xf32> to vector<2x128xf32>
    %142 = arith.negf %141 : vector<2x128xf32>
    %143 = math.exp %142 : vector<2x128xf32>
    %cst_34 = arith.constant 1.000000e+00 : f32
    %144 = vector.broadcast %cst_34 : f32 to vector<2x128xf32>
    %145 = arith.addf %144, %143 : vector<2x128xf32>
    %146 = arith.divf %144, %145 : vector<2x128xf32>
    %147 = vector.extract_strided_slice %134 {offsets = [0, 256], sizes = [2, 128], strides = [1, 1]} : vector<2x512xf32> to vector<2x128xf32>
    %148 = math.tanh %147 : vector<2x128xf32>
    %149 = vector.extract_strided_slice %134 {offsets = [0, 384], sizes = [2, 128], strides = [1, 1]} : vector<2x512xf32> to vector<2x128xf32>
    %150 = arith.negf %149 : vector<2x128xf32>
    %151 = math.exp %150 : vector<2x128xf32>
    %cst_35 = arith.constant 1.000000e+00 : f32
    %152 = vector.broadcast %cst_35 : f32 to vector<2x128xf32>
    %153 = arith.addf %152, %151 : vector<2x128xf32>
    %154 = arith.divf %152, %153 : vector<2x128xf32>
    %155 = arith.mulf %146, %100 : vector<2x128xf32>
    %156 = arith.mulf %140, %148 : vector<2x128xf32>
    %157 = arith.addf %155, %156 : vector<2x128xf32>
    %158 = math.tanh %157 : vector<2x128xf32>
    %159 = arith.mulf %154, %158 : vector<2x128xf32>
    %160 = tpu.concatenate %159, %130 in 1 : vector<2x128xf32>, vector<2x128xf32> -> vector<2x256xf32>
    %cst_36 = arith.constant dense<0.000000e+00> : vector<2x512xf32>
    %161 = tpu.matmul %160, %9, %cst_36 {dimension_numbers = #tpu.dot_dimension_numbers<[1], [0], [0], [1], [0, 0, 1, 1], [], []>} : vector<2x256xf32>, vector<256x512xf32>, vector<2x512xf32> -> vector<2x512xf32>
    %162 = arith.addf %161, %12 : vector<2x512xf32>
    %163 = vector.extract_strided_slice %162 {offsets = [0, 0], sizes = [2, 128], strides = [1, 1]} : vector<2x512xf32> to vector<2x128xf32>
    %164 = arith.negf %163 : vector<2x128xf32>
    %165 = math.exp %164 : vector<2x128xf32>
    %cst_37 = arith.constant 1.000000e+00 : f32
    %166 = vector.broadcast %cst_37 : f32 to vector<2x128xf32>
    %167 = arith.addf %166, %165 : vector<2x128xf32>
    %168 = arith.divf %166, %167 : vector<2x128xf32>
    %169 = vector.extract_strided_slice %162 {offsets = [0, 128], sizes = [2, 128], strides = [1, 1]} : vector<2x512xf32> to vector<2x128xf32>
    %170 = arith.negf %169 : vector<2x128xf32>
    %171 = math.exp %170 : vector<2x128xf32>
    %cst_38 = arith.constant 1.000000e+00 : f32
    %172 = vector.broadcast %cst_38 : f32 to vector<2x128xf32>
    %173 = arith.addf %172, %171 : vector<2x128xf32>
    %174 = arith.divf %172, %173 : vector<2x128xf32>
    %175 = vector.extract_strided_slice %162 {offsets = [0, 256], sizes = [2, 128], strides = [1, 1]} : vector<2x512xf32> to vector<2x128xf32>
    %176 = math.tanh %175 : vector<2x128xf32>
    %177 = vector.extract_strided_slice %162 {offsets = [0, 384], sizes = [2, 128], strides = [1, 1]} : vector<2x512xf32> to vector<2x128xf32>
    %178 = arith.negf %177 : vector<2x128xf32>
    %179 = math.exp %178 : vector<2x128xf32>
    %cst_39 = arith.constant 1.000000e+00 : f32
    %180 = vector.broadcast %cst_39 : f32 to vector<2x128xf32>
    %181 = arith.addf %180, %179 : vector<2x128xf32>
    %182 = arith.divf %180, %181 : vector<2x128xf32>
    %183 = arith.mulf %174, %128 : vector<2x128xf32>
    %184 = arith.mulf %168, %176 : vector<2x128xf32>
    %185 = arith.addf %183, %184 : vector<2x128xf32>
    %186 = math.tanh %185 : vector<2x128xf32>
    %187 = arith.mulf %182, %186 : vector<2x128xf32>
    %188 = vector.extract_strided_slice %7 {offsets = [3, 0, 0], sizes = [1, 2, 512], strides = [1, 1, 1]} : vector<8x2x512xf32> to vector<1x2x512xf32>
    %189 = vector.shape_cast %188 : vector<1x2x512xf32> to vector<2x512xf32>
    %cst_40 = arith.constant dense<0.000000e+00> : vector<2x512xf32>
    %190 = tpu.matmul %159, %8, %cst_40 {dimension_numbers = #tpu.dot_dimension_numbers<[1], [0], [0], [1], [0, 0, 1, 1], [], []>} : vector<2x128xf32>, vector<128x512xf32>, vector<2x512xf32> -> vector<2x512xf32>
    %191 = arith.addf %189, %190 : vector<2x512xf32>
    %192 = vector.extract_strided_slice %191 {offsets = [0, 0], sizes = [2, 128], strides = [1, 1]} : vector<2x512xf32> to vector<2x128xf32>
    %193 = arith.negf %192 : vector<2x128xf32>
    %194 = math.exp %193 : vector<2x128xf32>
    %cst_41 = arith.constant 1.000000e+00 : f32
    %195 = vector.broadcast %cst_41 : f32 to vector<2x128xf32>
    %196 = arith.addf %195, %194 : vector<2x128xf32>
    %197 = arith.divf %195, %196 : vector<2x128xf32>
    %198 = vector.extract_strided_slice %191 {offsets = [0, 128], sizes = [2, 128], strides = [1, 1]} : vector<2x512xf32> to vector<2x128xf32>
    %199 = arith.negf %198 : vector<2x128xf32>
    %200 = math.exp %199 : vector<2x128xf32>
    %cst_42 = arith.constant 1.000000e+00 : f32
    %201 = vector.broadcast %cst_42 : f32 to vector<2x128xf32>
    %202 = arith.addf %201, %200 : vector<2x128xf32>
    %203 = arith.divf %201, %202 : vector<2x128xf32>
    %204 = vector.extract_strided_slice %191 {offsets = [0, 256], sizes = [2, 128], strides = [1, 1]} : vector<2x512xf32> to vector<2x128xf32>
    %205 = math.tanh %204 : vector<2x128xf32>
    %206 = vector.extract_strided_slice %191 {offsets = [0, 384], sizes = [2, 128], strides = [1, 1]} : vector<2x512xf32> to vector<2x128xf32>
    %207 = arith.negf %206 : vector<2x128xf32>
    %208 = math.exp %207 : vector<2x128xf32>
    %cst_43 = arith.constant 1.000000e+00 : f32
    %209 = vector.broadcast %cst_43 : f32 to vector<2x128xf32>
    %210 = arith.addf %209, %208 : vector<2x128xf32>
    %211 = arith.divf %209, %210 : vector<2x128xf32>
    %212 = arith.mulf %203, %157 : vector<2x128xf32>
    %213 = arith.mulf %197, %205 : vector<2x128xf32>
    %214 = arith.addf %212, %213 : vector<2x128xf32>
    %215 = math.tanh %214 : vector<2x128xf32>
    %216 = arith.mulf %211, %215 : vector<2x128xf32>
    %217 = tpu.concatenate %216, %187 in 1 : vector<2x128xf32>, vector<2x128xf32> -> vector<2x256xf32>
    %cst_44 = arith.constant dense<0.000000e+00> : vector<2x512xf32>
    %218 = tpu.matmul %217, %9, %cst_44 {dimension_numbers = #tpu.dot_dimension_numbers<[1], [0], [0], [1], [0, 0, 1, 1], [], []>} : vector<2x256xf32>, vector<256x512xf32>, vector<2x512xf32> -> vector<2x512xf32>
    %219 = arith.addf %218, %12 : vector<2x512xf32>
    %220 = vector.extract_strided_slice %219 {offsets = [0, 0], sizes = [2, 128], strides = [1, 1]} : vector<2x512xf32> to vector<2x128xf32>
    %221 = arith.negf %220 : vector<2x128xf32>
    %222 = math.exp %221 : vector<2x128xf32>
    %cst_45 = arith.constant 1.000000e+00 : f32
    %223 = vector.broadcast %cst_45 : f32 to vector<2x128xf32>
    %224 = arith.addf %223, %222 : vector<2x128xf32>
    %225 = arith.divf %223, %224 : vector<2x128xf32>
    %226 = vector.extract_strided_slice %219 {offsets = [0, 128], sizes = [2, 128], strides = [1, 1]} : vector<2x512xf32> to vector<2x128xf32>
    %227 = arith.negf %226 : vector<2x128xf32>
    %228 = math.exp %227 : vector<2x128xf32>
    %cst_46 = arith.constant 1.000000e+00 : f32
    %229 = vector.broadcast %cst_46 : f32 to vector<2x128xf32>
    %230 = arith.addf %229, %228 : vector<2x128xf32>
    %231 = arith.divf %229, %230 : vector<2x128xf32>
    %232 = vector.extract_strided_slice %219 {offsets = [0, 256], sizes = [2, 128], strides = [1, 1]} : vector<2x512xf32> to vector<2x128xf32>
    %233 = math.tanh %232 : vector<2x128xf32>
    %234 = vector.extract_strided_slice %219 {offsets = [0, 384], sizes = [2, 128], strides = [1, 1]} : vector<2x512xf32> to vector<2x128xf32>
    %235 = arith.negf %234 : vector<2x128xf32>
    %236 = math.exp %235 : vector<2x128xf32>
    %cst_47 = arith.constant 1.000000e+00 : f32
    %237 = vector.broadcast %cst_47 : f32 to vector<2x128xf32>
    %238 = arith.addf %237, %236 : vector<2x128xf32>
    %239 = arith.divf %237, %238 : vector<2x128xf32>
    %240 = arith.mulf %231, %185 : vector<2x128xf32>
    %241 = arith.mulf %225, %233 : vector<2x128xf32>
    %242 = arith.addf %240, %241 : vector<2x128xf32>
    %243 = math.tanh %242 : vector<2x128xf32>
    %244 = arith.mulf %239, %243 : vector<2x128xf32>
    %245 = vector.extract_strided_slice %7 {offsets = [4, 0, 0], sizes = [1, 2, 512], strides = [1, 1, 1]} : vector<8x2x512xf32> to vector<1x2x512xf32>
    %246 = vector.shape_cast %245 : vector<1x2x512xf32> to vector<2x512xf32>
    %cst_48 = arith.constant dense<0.000000e+00> : vector<2x512xf32>
    %247 = tpu.matmul %216, %8, %cst_48 {dimension_numbers = #tpu.dot_dimension_numbers<[1], [0], [0], [1], [0, 0, 1, 1], [], []>} : vector<2x128xf32>, vector<128x512xf32>, vector<2x512xf32> -> vector<2x512xf32>
    %248 = arith.addf %246, %247 : vector<2x512xf32>
    %249 = vector.extract_strided_slice %248 {offsets = [0, 0], sizes = [2, 128], strides = [1, 1]} : vector<2x512xf32> to vector<2x128xf32>
    %250 = arith.negf %249 : vector<2x128xf32>
    %251 = math.exp %250 : vector<2x128xf32>
    %cst_49 = arith.constant 1.000000e+00 : f32
    %252 = vector.broadcast %cst_49 : f32 to vector<2x128xf32>
    %253 = arith.addf %252, %251 : vector<2x128xf32>
    %254 = arith.divf %252, %253 : vector<2x128xf32>
    %255 = vector.extract_strided_slice %248 {offsets = [0, 128], sizes = [2, 128], strides = [1, 1]} : vector<2x512xf32> to vector<2x128xf32>
    %256 = arith.negf %255 : vector<2x128xf32>
    %257 = math.exp %256 : vector<2x128xf32>
    %cst_50 = arith.constant 1.000000e+00 : f32
    %258 = vector.broadcast %cst_50 : f32 to vector<2x128xf32>
    %259 = arith.addf %258, %257 : vector<2x128xf32>
    %260 = arith.divf %258, %259 : vector<2x128xf32>
    %261 = vector.extract_strided_slice %248 {offsets = [0, 256], sizes = [2, 128], strides = [1, 1]} : vector<2x512xf32> to vector<2x128xf32>
    %262 = math.tanh %261 : vector<2x128xf32>
    %263 = vector.extract_strided_slice %248 {offsets = [0, 384], sizes = [2, 128], strides = [1, 1]} : vector<2x512xf32> to vector<2x128xf32>
    %264 = arith.negf %263 : vector<2x128xf32>
    %265 = math.exp %264 : vector<2x128xf32>
    %cst_51 = arith.constant 1.000000e+00 : f32
    %266 = vector.broadcast %cst_51 : f32 to vector<2x128xf32>
    %267 = arith.addf %266, %265 : vector<2x128xf32>
    %268 = arith.divf %266, %267 : vector<2x128xf32>
    %269 = arith.mulf %260, %214 : vector<2x128xf32>
    %270 = arith.mulf %254, %262 : vector<2x128xf32>
    %271 = arith.addf %269, %270 : vector<2x128xf32>
    %272 = math.tanh %271 : vector<2x128xf32>
    %273 = arith.mulf %268, %272 : vector<2x128xf32>
    %274 = tpu.concatenate %273, %244 in 1 : vector<2x128xf32>, vector<2x128xf32> -> vector<2x256xf32>
    %cst_52 = arith.constant dense<0.000000e+00> : vector<2x512xf32>
    %275 = tpu.matmul %274, %9, %cst_52 {dimension_numbers = #tpu.dot_dimension_numbers<[1], [0], [0], [1], [0, 0, 1, 1], [], []>} : vector<2x256xf32>, vector<256x512xf32>, vector<2x512xf32> -> vector<2x512xf32>
    %276 = arith.addf %275, %12 : vector<2x512xf32>
    %277 = vector.extract_strided_slice %276 {offsets = [0, 0], sizes = [2, 128], strides = [1, 1]} : vector<2x512xf32> to vector<2x128xf32>
    %278 = arith.negf %277 : vector<2x128xf32>
    %279 = math.exp %278 : vector<2x128xf32>
    %cst_53 = arith.constant 1.000000e+00 : f32
    %280 = vector.broadcast %cst_53 : f32 to vector<2x128xf32>
    %281 = arith.addf %280, %279 : vector<2x128xf32>
    %282 = arith.divf %280, %281 : vector<2x128xf32>
    %283 = vector.extract_strided_slice %276 {offsets = [0, 128], sizes = [2, 128], strides = [1, 1]} : vector<2x512xf32> to vector<2x128xf32>
    %284 = arith.negf %283 : vector<2x128xf32>
    %285 = math.exp %284 : vector<2x128xf32>
    %cst_54 = arith.constant 1.000000e+00 : f32
    %286 = vector.broadcast %cst_54 : f32 to vector<2x128xf32>
    %287 = arith.addf %286, %285 : vector<2x128xf32>
    %288 = arith.divf %286, %287 : vector<2x128xf32>
    %289 = vector.extract_strided_slice %276 {offsets = [0, 256], sizes = [2, 128], strides = [1, 1]} : vector<2x512xf32> to vector<2x128xf32>
    %290 = math.tanh %289 : vector<2x128xf32>
    %291 = vector.extract_strided_slice %276 {offsets = [0, 384], sizes = [2, 128], strides = [1, 1]} : vector<2x512xf32> to vector<2x128xf32>
    %292 = arith.negf %291 : vector<2x128xf32>
    %293 = math.exp %292 : vector<2x128xf32>
    %cst_55 = arith.constant 1.000000e+00 : f32
    %294 = vector.broadcast %cst_55 : f32 to vector<2x128xf32>
    %295 = arith.addf %294, %293 : vector<2x128xf32>
    %296 = arith.divf %294, %295 : vector<2x128xf32>
    %297 = arith.mulf %288, %242 : vector<2x128xf32>
    %298 = arith.mulf %282, %290 : vector<2x128xf32>
    %299 = arith.addf %297, %298 : vector<2x128xf32>
    %300 = math.tanh %299 : vector<2x128xf32>
    %301 = arith.mulf %296, %300 : vector<2x128xf32>
    %302 = vector.extract_strided_slice %7 {offsets = [5, 0, 0], sizes = [1, 2, 512], strides = [1, 1, 1]} : vector<8x2x512xf32> to vector<1x2x512xf32>
    %303 = vector.shape_cast %302 : vector<1x2x512xf32> to vector<2x512xf32>
    %cst_56 = arith.constant dense<0.000000e+00> : vector<2x512xf32>
    %304 = tpu.matmul %273, %8, %cst_56 {dimension_numbers = #tpu.dot_dimension_numbers<[1], [0], [0], [1], [0, 0, 1, 1], [], []>} : vector<2x128xf32>, vector<128x512xf32>, vector<2x512xf32> -> vector<2x512xf32>
    %305 = arith.addf %303, %304 : vector<2x512xf32>
    %306 = vector.extract_strided_slice %305 {offsets = [0, 0], sizes = [2, 128], strides = [1, 1]} : vector<2x512xf32> to vector<2x128xf32>
    %307 = arith.negf %306 : vector<2x128xf32>
    %308 = math.exp %307 : vector<2x128xf32>
    %cst_57 = arith.constant 1.000000e+00 : f32
    %309 = vector.broadcast %cst_57 : f32 to vector<2x128xf32>
    %310 = arith.addf %309, %308 : vector<2x128xf32>
    %311 = arith.divf %309, %310 : vector<2x128xf32>
    %312 = vector.extract_strided_slice %305 {offsets = [0, 128], sizes = [2, 128], strides = [1, 1]} : vector<2x512xf32> to vector<2x128xf32>
    %313 = arith.negf %312 : vector<2x128xf32>
    %314 = math.exp %313 : vector<2x128xf32>
    %cst_58 = arith.constant 1.000000e+00 : f32
    %315 = vector.broadcast %cst_58 : f32 to vector<2x128xf32>
    %316 = arith.addf %315, %314 : vector<2x128xf32>
    %317 = arith.divf %315, %316 : vector<2x128xf32>
    %318 = vector.extract_strided_slice %305 {offsets = [0, 256], sizes = [2, 128], strides = [1, 1]} : vector<2x512xf32> to vector<2x128xf32>
    %319 = math.tanh %318 : vector<2x128xf32>
    %320 = vector.extract_strided_slice %305 {offsets = [0, 384], sizes = [2, 128], strides = [1, 1]} : vector<2x512xf32> to vector<2x128xf32>
    %321 = arith.negf %320 : vector<2x128xf32>
    %322 = math.exp %321 : vector<2x128xf32>
    %cst_59 = arith.constant 1.000000e+00 : f32
    %323 = vector.broadcast %cst_59 : f32 to vector<2x128xf32>
    %324 = arith.addf %323, %322 : vector<2x128xf32>
    %325 = arith.divf %323, %324 : vector<2x128xf32>
    %326 = arith.mulf %317, %271 : vector<2x128xf32>
    %327 = arith.mulf %311, %319 : vector<2x128xf32>
    %328 = arith.addf %326, %327 : vector<2x128xf32>
    %329 = math.tanh %328 : vector<2x128xf32>
    %330 = arith.mulf %325, %329 : vector<2x128xf32>
    %331 = tpu.concatenate %330, %301 in 1 : vector<2x128xf32>, vector<2x128xf32> -> vector<2x256xf32>
    %cst_60 = arith.constant dense<0.000000e+00> : vector<2x512xf32>
    %332 = tpu.matmul %331, %9, %cst_60 {dimension_numbers = #tpu.dot_dimension_numbers<[1], [0], [0], [1], [0, 0, 1, 1], [], []>} : vector<2x256xf32>, vector<256x512xf32>, vector<2x512xf32> -> vector<2x512xf32>
    %333 = arith.addf %332, %12 : vector<2x512xf32>
    %334 = vector.extract_strided_slice %333 {offsets = [0, 0], sizes = [2, 128], strides = [1, 1]} : vector<2x512xf32> to vector<2x128xf32>
    %335 = arith.negf %334 : vector<2x128xf32>
    %336 = math.exp %335 : vector<2x128xf32>
    %cst_61 = arith.constant 1.000000e+00 : f32
    %337 = vector.broadcast %cst_61 : f32 to vector<2x128xf32>
    %338 = arith.addf %337, %336 : vector<2x128xf32>
    %339 = arith.divf %337, %338 : vector<2x128xf32>
    %340 = vector.extract_strided_slice %333 {offsets = [0, 128], sizes = [2, 128], strides = [1, 1]} : vector<2x512xf32> to vector<2x128xf32>
    %341 = arith.negf %340 : vector<2x128xf32>
    %342 = math.exp %341 : vector<2x128xf32>
    %cst_62 = arith.constant 1.000000e+00 : f32
    %343 = vector.broadcast %cst_62 : f32 to vector<2x128xf32>
    %344 = arith.addf %343, %342 : vector<2x128xf32>
    %345 = arith.divf %343, %344 : vector<2x128xf32>
    %346 = vector.extract_strided_slice %333 {offsets = [0, 256], sizes = [2, 128], strides = [1, 1]} : vector<2x512xf32> to vector<2x128xf32>
    %347 = math.tanh %346 : vector<2x128xf32>
    %348 = vector.extract_strided_slice %333 {offsets = [0, 384], sizes = [2, 128], strides = [1, 1]} : vector<2x512xf32> to vector<2x128xf32>
    %349 = arith.negf %348 : vector<2x128xf32>
    %350 = math.exp %349 : vector<2x128xf32>
    %cst_63 = arith.constant 1.000000e+00 : f32
    %351 = vector.broadcast %cst_63 : f32 to vector<2x128xf32>
    %352 = arith.addf %351, %350 : vector<2x128xf32>
    %353 = arith.divf %351, %352 : vector<2x128xf32>
    %354 = arith.mulf %345, %299 : vector<2x128xf32>
    %355 = arith.mulf %339, %347 : vector<2x128xf32>
    %356 = arith.addf %354, %355 : vector<2x128xf32>
    %357 = math.tanh %356 : vector<2x128xf32>
    %358 = arith.mulf %353, %357 : vector<2x128xf32>
    %359 = vector.extract_strided_slice %7 {offsets = [6, 0, 0], sizes = [1, 2, 512], strides = [1, 1, 1]} : vector<8x2x512xf32> to vector<1x2x512xf32>
    %360 = vector.shape_cast %359 : vector<1x2x512xf32> to vector<2x512xf32>
    %cst_64 = arith.constant dense<0.000000e+00> : vector<2x512xf32>
    %361 = tpu.matmul %330, %8, %cst_64 {dimension_numbers = #tpu.dot_dimension_numbers<[1], [0], [0], [1], [0, 0, 1, 1], [], []>} : vector<2x128xf32>, vector<128x512xf32>, vector<2x512xf32> -> vector<2x512xf32>
    %362 = arith.addf %360, %361 : vector<2x512xf32>
    %363 = vector.extract_strided_slice %362 {offsets = [0, 0], sizes = [2, 128], strides = [1, 1]} : vector<2x512xf32> to vector<2x128xf32>
    %364 = arith.negf %363 : vector<2x128xf32>
    %365 = math.exp %364 : vector<2x128xf32>
    %cst_65 = arith.constant 1.000000e+00 : f32
    %366 = vector.broadcast %cst_65 : f32 to vector<2x128xf32>
    %367 = arith.addf %366, %365 : vector<2x128xf32>
    %368 = arith.divf %366, %367 : vector<2x128xf32>
    %369 = vector.extract_strided_slice %362 {offsets = [0, 128], sizes = [2, 128], strides = [1, 1]} : vector<2x512xf32> to vector<2x128xf32>
    %370 = arith.negf %369 : vector<2x128xf32>
    %371 = math.exp %370 : vector<2x128xf32>
    %cst_66 = arith.constant 1.000000e+00 : f32
    %372 = vector.broadcast %cst_66 : f32 to vector<2x128xf32>
    %373 = arith.addf %372, %371 : vector<2x128xf32>
    %374 = arith.divf %372, %373 : vector<2x128xf32>
    %375 = vector.extract_strided_slice %362 {offsets = [0, 256], sizes = [2, 128], strides = [1, 1]} : vector<2x512xf32> to vector<2x128xf32>
    %376 = math.tanh %375 : vector<2x128xf32>
    %377 = vector.extract_strided_slice %362 {offsets = [0, 384], sizes = [2, 128], strides = [1, 1]} : vector<2x512xf32> to vector<2x128xf32>
    %378 = arith.negf %377 : vector<2x128xf32>
    %379 = math.exp %378 : vector<2x128xf32>
    %cst_67 = arith.constant 1.000000e+00 : f32
    %380 = vector.broadcast %cst_67 : f32 to vector<2x128xf32>
    %381 = arith.addf %380, %379 : vector<2x128xf32>
    %382 = arith.divf %380, %381 : vector<2x128xf32>
    %383 = arith.mulf %374, %328 : vector<2x128xf32>
    %384 = arith.mulf %368, %376 : vector<2x128xf32>
    %385 = arith.addf %383, %384 : vector<2x128xf32>
    %386 = math.tanh %385 : vector<2x128xf32>
    %387 = arith.mulf %382, %386 : vector<2x128xf32>
    %388 = tpu.concatenate %387, %358 in 1 : vector<2x128xf32>, vector<2x128xf32> -> vector<2x256xf32>
    %cst_68 = arith.constant dense<0.000000e+00> : vector<2x512xf32>
    %389 = tpu.matmul %388, %9, %cst_68 {dimension_numbers = #tpu.dot_dimension_numbers<[1], [0], [0], [1], [0, 0, 1, 1], [], []>} : vector<2x256xf32>, vector<256x512xf32>, vector<2x512xf32> -> vector<2x512xf32>
    %390 = arith.addf %389, %12 : vector<2x512xf32>
    %391 = vector.extract_strided_slice %390 {offsets = [0, 0], sizes = [2, 128], strides = [1, 1]} : vector<2x512xf32> to vector<2x128xf32>
    %392 = arith.negf %391 : vector<2x128xf32>
    %393 = math.exp %392 : vector<2x128xf32>
    %cst_69 = arith.constant 1.000000e+00 : f32
    %394 = vector.broadcast %cst_69 : f32 to vector<2x128xf32>
    %395 = arith.addf %394, %393 : vector<2x128xf32>
    %396 = arith.divf %394, %395 : vector<2x128xf32>
    %397 = vector.extract_strided_slice %390 {offsets = [0, 128], sizes = [2, 128], strides = [1, 1]} : vector<2x512xf32> to vector<2x128xf32>
    %398 = arith.negf %397 : vector<2x128xf32>
    %399 = math.exp %398 : vector<2x128xf32>
    %cst_70 = arith.constant 1.000000e+00 : f32
    %400 = vector.broadcast %cst_70 : f32 to vector<2x128xf32>
    %401 = arith.addf %400, %399 : vector<2x128xf32>
    %402 = arith.divf %400, %401 : vector<2x128xf32>
    %403 = vector.extract_strided_slice %390 {offsets = [0, 256], sizes = [2, 128], strides = [1, 1]} : vector<2x512xf32> to vector<2x128xf32>
    %404 = math.tanh %403 : vector<2x128xf32>
    %405 = vector.extract_strided_slice %390 {offsets = [0, 384], sizes = [2, 128], strides = [1, 1]} : vector<2x512xf32> to vector<2x128xf32>
    %406 = arith.negf %405 : vector<2x128xf32>
    %407 = math.exp %406 : vector<2x128xf32>
    %cst_71 = arith.constant 1.000000e+00 : f32
    %408 = vector.broadcast %cst_71 : f32 to vector<2x128xf32>
    %409 = arith.addf %408, %407 : vector<2x128xf32>
    %410 = arith.divf %408, %409 : vector<2x128xf32>
    %411 = arith.mulf %402, %356 : vector<2x128xf32>
    %412 = arith.mulf %396, %404 : vector<2x128xf32>
    %413 = arith.addf %411, %412 : vector<2x128xf32>
    %414 = math.tanh %413 : vector<2x128xf32>
    %415 = arith.mulf %410, %414 : vector<2x128xf32>
    %416 = vector.extract_strided_slice %7 {offsets = [7, 0, 0], sizes = [1, 2, 512], strides = [1, 1, 1]} : vector<8x2x512xf32> to vector<1x2x512xf32>
    %417 = vector.shape_cast %416 : vector<1x2x512xf32> to vector<2x512xf32>
    %cst_72 = arith.constant dense<0.000000e+00> : vector<2x512xf32>
    %418 = tpu.matmul %387, %8, %cst_72 {dimension_numbers = #tpu.dot_dimension_numbers<[1], [0], [0], [1], [0, 0, 1, 1], [], []>} : vector<2x128xf32>, vector<128x512xf32>, vector<2x512xf32> -> vector<2x512xf32>
    %419 = arith.addf %417, %418 : vector<2x512xf32>
    %420 = vector.extract_strided_slice %419 {offsets = [0, 0], sizes = [2, 128], strides = [1, 1]} : vector<2x512xf32> to vector<2x128xf32>
    %421 = arith.negf %420 : vector<2x128xf32>
    %422 = math.exp %421 : vector<2x128xf32>
    %cst_73 = arith.constant 1.000000e+00 : f32
    %423 = vector.broadcast %cst_73 : f32 to vector<2x128xf32>
    %424 = arith.addf %423, %422 : vector<2x128xf32>
    %425 = arith.divf %423, %424 : vector<2x128xf32>
    %426 = vector.extract_strided_slice %419 {offsets = [0, 128], sizes = [2, 128], strides = [1, 1]} : vector<2x512xf32> to vector<2x128xf32>
    %427 = arith.negf %426 : vector<2x128xf32>
    %428 = math.exp %427 : vector<2x128xf32>
    %cst_74 = arith.constant 1.000000e+00 : f32
    %429 = vector.broadcast %cst_74 : f32 to vector<2x128xf32>
    %430 = arith.addf %429, %428 : vector<2x128xf32>
    %431 = arith.divf %429, %430 : vector<2x128xf32>
    %432 = vector.extract_strided_slice %419 {offsets = [0, 256], sizes = [2, 128], strides = [1, 1]} : vector<2x512xf32> to vector<2x128xf32>
    %433 = math.tanh %432 : vector<2x128xf32>
    %434 = vector.extract_strided_slice %419 {offsets = [0, 384], sizes = [2, 128], strides = [1, 1]} : vector<2x512xf32> to vector<2x128xf32>
    %435 = arith.negf %434 : vector<2x128xf32>
    %436 = math.exp %435 : vector<2x128xf32>
    %cst_75 = arith.constant 1.000000e+00 : f32
    %437 = vector.broadcast %cst_75 : f32 to vector<2x128xf32>
    %438 = arith.addf %437, %436 : vector<2x128xf32>
    %439 = arith.divf %437, %438 : vector<2x128xf32>
    %440 = arith.mulf %431, %385 : vector<2x128xf32>
    %441 = arith.mulf %425, %433 : vector<2x128xf32>
    %442 = arith.addf %440, %441 : vector<2x128xf32>
    %443 = math.tanh %442 : vector<2x128xf32>
    %444 = arith.mulf %439, %443 : vector<2x128xf32>
    %445 = tpu.concatenate %444, %415 in 1 : vector<2x128xf32>, vector<2x128xf32> -> vector<2x256xf32>
    %cst_76 = arith.constant dense<0.000000e+00> : vector<2x512xf32>
    %446 = tpu.matmul %445, %9, %cst_76 {dimension_numbers = #tpu.dot_dimension_numbers<[1], [0], [0], [1], [0, 0, 1, 1], [], []>} : vector<2x256xf32>, vector<256x512xf32>, vector<2x512xf32> -> vector<2x512xf32>
    %447 = arith.addf %446, %12 : vector<2x512xf32>
    %448 = vector.extract_strided_slice %447 {offsets = [0, 0], sizes = [2, 128], strides = [1, 1]} : vector<2x512xf32> to vector<2x128xf32>
    %449 = arith.negf %448 : vector<2x128xf32>
    %450 = math.exp %449 : vector<2x128xf32>
    %cst_77 = arith.constant 1.000000e+00 : f32
    %451 = vector.broadcast %cst_77 : f32 to vector<2x128xf32>
    %452 = arith.addf %451, %450 : vector<2x128xf32>
    %453 = arith.divf %451, %452 : vector<2x128xf32>
    %454 = vector.extract_strided_slice %447 {offsets = [0, 128], sizes = [2, 128], strides = [1, 1]} : vector<2x512xf32> to vector<2x128xf32>
    %455 = arith.negf %454 : vector<2x128xf32>
    %456 = math.exp %455 : vector<2x128xf32>
    %cst_78 = arith.constant 1.000000e+00 : f32
    %457 = vector.broadcast %cst_78 : f32 to vector<2x128xf32>
    %458 = arith.addf %457, %456 : vector<2x128xf32>
    %459 = arith.divf %457, %458 : vector<2x128xf32>
    %460 = vector.extract_strided_slice %447 {offsets = [0, 256], sizes = [2, 128], strides = [1, 1]} : vector<2x512xf32> to vector<2x128xf32>
    %461 = math.tanh %460 : vector<2x128xf32>
    %462 = vector.extract_strided_slice %447 {offsets = [0, 384], sizes = [2, 128], strides = [1, 1]} : vector<2x512xf32> to vector<2x128xf32>
    %463 = arith.negf %462 : vector<2x128xf32>
    %464 = math.exp %463 : vector<2x128xf32>
    %cst_79 = arith.constant 1.000000e+00 : f32
    %465 = vector.broadcast %cst_79 : f32 to vector<2x128xf32>
    %466 = arith.addf %465, %464 : vector<2x128xf32>
    %467 = arith.divf %465, %466 : vector<2x128xf32>
    %468 = arith.mulf %459, %413 : vector<2x128xf32>
    %469 = arith.mulf %453, %461 : vector<2x128xf32>
    %470 = arith.addf %468, %469 : vector<2x128xf32>
    %471 = math.tanh %470 : vector<2x128xf32>
    %472 = arith.mulf %467, %471 : vector<2x128xf32>
    %c0_80 = arith.constant 0 : index
    %c0_81 = arith.constant 0 : index
    %473 = vector.load %arg7[%c0_80, %c0_81] : memref<1x128xf32, #tpu.memory_space<vmem>>, vector<1x128xf32>
    %474 = vector.broadcast %473 : vector<1x128xf32> to vector<2x128xf32>
    %475 = arith.mulf %472, %474 : vector<2x128xf32>
    %cst_82 = arith.constant dense<0.000000e+00> : vector<2xf32>
    %476 = vector.multi_reduction <add>, %475, %cst_82 [1] : vector<2x128xf32> to vector<2xf32>
    %477 = vector.shape_cast %476 : vector<2xf32> to vector<2x1xf32>
    %c0_83 = arith.constant 0 : index
    %c0_84 = arith.constant 0 : index
    %478 = vector.load %arg8[%c0_83, %c0_84] : memref<1x1xf32, #tpu.memory_space<vmem>>, vector<1x1xf32>
    %479 = vector.broadcast %478 : vector<1x1xf32> to vector<2x1xf32>
    %480 = arith.addf %477, %479 : vector<2x1xf32>
    %cst_85 = arith.constant 0.000000e+00 : f32
    %481 = vector.broadcast %cst_85 : f32 to vector<2x1xf32>
    %482 = arith.maximumf %480, %481 : vector<2x1xf32>
    %c0_86 = arith.constant 0 : index
    %c0_87 = arith.constant 0 : index
    %483 = vector.load %arg9[%c0_86, %c0_87] : memref<2x1xf32, #tpu.memory_space<vmem>>, vector<2x1xf32>
    tpu.vector_store %arg9[%c0_86, %c0_87], %482 {strides = array<i32>} : memref<2x1xf32, #tpu.memory_space<vmem>>, vector<2x1xf32>,
    return
  }
  func.func @transform_0(%arg0: i32) -> (i32, i32, i32) {
    %c0_i32 = arith.constant 0 : i32
    %c0_i32_0 = arith.constant 0 : i32
    %c0_i32_1 = arith.constant 0 : i32
    return %c0_i32, %arg0, %c0_i32_0 : i32, i32, i32
  }
  func.func @transform_1(%arg0: i32) -> (i32, i32) {
    %c0_i32 = arith.constant 0 : i32
    %c0_i32_0 = arith.constant 0 : i32
    %c0_i32_1 = arith.constant 0 : i32
    return %c0_i32, %c0_i32_0 : i32, i32
  }
  func.func @transform_2(%arg0: i32) -> (i32, i32) {
    %c0_i32 = arith.constant 0 : i32
    %c0_i32_0 = arith.constant 0 : i32
    %c0_i32_1 = arith.constant 0 : i32
    return %c0_i32, %c0_i32_0 : i32, i32
  }
  func.func @transform_3(%arg0: i32) -> (i32, i32) {
    %c0_i32 = arith.constant 0 : i32
    %c0_i32_0 = arith.constant 0 : i32
    %c0_i32_1 = arith.constant 0 : i32
    return %c0_i32, %c0_i32_0 : i32, i32
  }
  func.func @transform_4(%arg0: i32) -> (i32, i32) {
    %c0_i32 = arith.constant 0 : i32
    %c0_i32_0 = arith.constant 0 : i32
    %c0_i32_1 = arith.constant 0 : i32
    return %c0_i32, %c0_i32_0 : i32, i32
  }
  func.func @transform_5(%arg0: i32) -> (i32, i32) {
    %c0_i32 = arith.constant 0 : i32
    %c0_i32_0 = arith.constant 0 : i32
    %c0_i32_1 = arith.constant 0 : i32
    return %c0_i32, %c0_i32_0 : i32, i32
  }
  func.func @transform_6(%arg0: i32) -> (i32, i32) {
    %c0_i32 = arith.constant 0 : i32
    %c0_i32_0 = arith.constant 0 : i32
    %c0_i32_1 = arith.constant 0 : i32
    return %c0_i32, %c0_i32_0 : i32, i32
  }
  func.func @transform_7(%arg0: i32) -> (i32, i32) {
    %c0_i32 = arith.constant 0 : i32
    %c0_i32_0 = arith.constant 0 : i32
    %c0_i32_1 = arith.constant 0 : i32
    return %c0_i32, %c0_i32_0 : i32, i32
  }
  func.func @transform_8(%arg0: i32) -> (i32, i32) {
    %c0_i32 = arith.constant 0 : i32
    %c0_i32_0 = arith.constant 0 : i32
    return %arg0, %c0_i32 : i32, i32
  }
}

</mosaic_0001>

<llo_original>
// kernel: tpu_custom_call.1
$region0: #{tpu_custom_call.1}
  #allocation0 [shape = 'u32[]', space=smem, size = 0x4, offset = 0x4, fixed_abs, tag = 'smem constant byte address 0x4 - core index']
  #allocation1 [shape = 'u32[72,128]{1,0:T(1,128)}', space=vmem, size = 0x9000, scoped, tag = 'internal scratch']
  #allocation2 [shape = 'f32[1,1]{1,0:T(1,128)S(1)}', space=vmem, size = 0x200, scoped, tag = 'scoped memory for tpu_custom_call.1']
  %s0 = inlined_call_operand.vmem [shape: f32[8,2,6], index: 0, kind: input, shape index: {}]
  %s1 = inlined_call_operand.hbm [shape: f32[6,512], index: 1, kind: input, shape index: {}]
  %s2 = inlined_call_operand.hbm [shape: f32[128,512], index: 2, kind: input, shape index: {}]
  %s3 = inlined_call_operand.vmem [shape: f32[1,512], index: 3, kind: input, shape index: {}]
  %s4 = inlined_call_operand.hbm [shape: f32[256,512], index: 4, kind: input, shape index: {}]
  %s5 = inlined_call_operand.vmem [shape: f32[1,512], index: 5, kind: input, shape index: {}]
  %s6 = inlined_call_operand.vmem [shape: f32[1,128], index: 6, kind: input, shape index: {}]
  %s7 = inlined_call_operand.<no memory space> [shape: f32[1,1], index: 7, kind: input, shape index: {}]
  %s8 = inlined_call_operand.vmem [shape: f32[2,1], index: 8, kind: output, shape index: {}]
  %s9 = sld [smem:[#allocation0]]
  $region54: #{tpu_custom_call.1} parent=0
    _
  %s11 = ssub.s32 1, %s9
  %s12 = scalar_select 0, %s11, %s9
  %v13 = vstv %s7
  %14 = vst [vmem:[#allocation2] sm:$0x1] %v13
  $region1: #{tpu_custom_call.1} parent=0
    #allocation3 [shape = 'u8[16384]{0}', space=vmem, size = 0x4000, scoped, tag = 'input window, operand 1, single buffered']
    #allocation4 [shape = 's32[1]{0}', space=sflag, size = 0x4, scoped, tag = 'scoped memory for tpu_custom_call.1']
    #allocation5 [shape = 'u8[262144]{0}', space=vmem, size = 0x40000, scoped, tag = 'input window, operand 2, single buffered']
    #allocation6 [shape = 's32[1]{0}', space=sflag, size = 0x4, scoped, tag = 'scoped memory for tpu_custom_call.1']
    #allocation7 [shape = 'u8[524288]{0}', space=vmem, size = 0x80000, scoped, tag = 'input window, operand 4, single buffered']
    %15 = vsyncpa [#allocation4], 0
    %16 = vsyncpa [#allocation6], 0
    // Predicated region
    $region2: #{tpu_custom_call.1} parent=1 // pred_check
      _
    $region3: #{tpu_custom_call.1} parent=1 // pred_check_branch
      %18 = sbr.rel (0) target = $region5
    $region4: #{tpu_custom_call.1} parent=1 // pred_region
      _
    $region5: #{tpu_custom_call.1} parent=1 // pred_fallthru
      _
    // Predicated region
    $region6: #{tpu_custom_call.1} parent=1 // pred_check
      _
    $region7: #{tpu_custom_call.1} parent=1 // pred_check_branch
      %20 = sbr.rel (0) target = $region9
    $region8: #{tpu_custom_call.1} parent=1 // pred_region
      %22 = vsyncadd [#allocation4], 0
      %s24 = sshll.u32 %s1, 4
      %s25 = int_to_ptr.hbm [resolvable:$true] %s24
      %s26 = sshll.u32 [#allocation3], 4
      %s27 = int_to_ptr.vmem [resolvable:$true] %s26
      %29 = dma.hbm_to_vmem [thread:$0]  %s25, 512, %s27, [#allocation4]
    $region9: #{tpu_custom_call.1} parent=1 // pred_fallthru
      _
    // Predicated region
    $region10: #{tpu_custom_call.1} parent=1 // pred_check
      _
    $region11: #{tpu_custom_call.1} parent=1 // pred_check_branch
      %31 = sbr.rel (0) target = $region13
    $region12: #{tpu_custom_call.1} parent=1 // pred_region
      %33 = vsyncadd [#allocation6], 0
      %s34 = sshll.u32 %s2, 4
      %s35 = int_to_ptr.hbm [resolvable:$true] %s34
      %s36 = sshll.u32 [#allocation5], 4
      %s37 = int_to_ptr.vmem [resolvable:$true] %s36
      %42 = dma.hbm_to_vmem [thread:$0]  %s35, 8192, %s37, [#allocation6], 512, 512, 32
    $region13: #{tpu_custom_call.1} parent=1 // pred_fallthru
      _
    // Predicated region
    $region14: #{tpu_custom_call.1} parent=1 // pred_check
      _
    $region15: #{tpu_custom_call.1} parent=1 // pred_check_branch
      %44 = sbr.rel (0) target = $region17
    $region16: #{tpu_custom_call.1} parent=1 // pred_region
      _
    $region17: #{tpu_custom_call.1} parent=1 // pred_fallthru
      _
    // Predicated region
    $region18: #{tpu_custom_call.1} parent=1 // pred_check
      _
    $region19: #{tpu_custom_call.1} parent=1 // pred_check_branch
      %46 = sbr.rel (0) target = $region21
    $region20: #{tpu_custom_call.1} parent=1 // pred_region
      %48 = vsyncadd [#allocation6], 0
      %s49 = sshll.u32 %s4, 4
      %s50 = int_to_ptr.hbm [resolvable:$true] %s49
      %s51 = sshll.u32 [#allocation7], 4
      %s52 = int_to_ptr.vmem [resolvable:$true] %s51
      %57 = dma.hbm_to_vmem [thread:$0]  %s50, 16384, %s52, [#allocation6], 512, 512, 32
    $region21: #{tpu_custom_call.1} parent=1 // pred_fallthru
      _
    // Predicated region
    $region22: #{tpu_custom_call.1} parent=1 // pred_check
      _
    $region23: #{tpu_custom_call.1} parent=1 // pred_check_branch
      %59 = sbr.rel (0) target = $region25
    $region24: #{tpu_custom_call.1} parent=1 // pred_region
      _
    $region25: #{tpu_custom_call.1} parent=1 // pred_fallthru
      _
    // Predicated region
    $region26: #{tpu_custom_call.1} parent=1 // pred_check
      _
    $region27: #{tpu_custom_call.1} parent=1 // pred_check_branch
      %61 = sbr.rel (0) target = $region29
    $region28: #{tpu_custom_call.1} parent=1 // pred_region
      _
    $region29: #{tpu_custom_call.1} parent=1 // pred_fallthru
      _
    // Predicated region
    $region30: #{tpu_custom_call.1} parent=1 // pred_check
      _
    $region31: #{tpu_custom_call.1} parent=1 // pred_check_branch
      %63 = sbr.rel (0) target = $region33
    $region32: #{tpu_custom_call.1} parent=1 // pred_region
      _
    $region33: #{tpu_custom_call.1} parent=1 // pred_fallthru
      _
    // Predicated region
    $region34: #{tpu_custom_call.1} parent=1 // pred_check
      _
    $region35: #{tpu_custom_call.1} parent=1 // pred_check_branch
      %65 = sbr.rel (0) target = $region37
    $region36: #{tpu_custom_call.1} parent=1 // pred_region
      %67 = dma.done [#allocation4], 512
    $region37: #{tpu_custom_call.1} parent=1 // pred_fallthru
      _
    // Predicated region
    $region38: #{tpu_custom_call.1} parent=1 // pred_check
      _
    $region39: #{tpu_custom_call.1} parent=1 // pred_check_branch
      %69 = sbr.rel (0) target = $region41
    $region40: #{tpu_custom_call.1} parent=1 // pred_region
      %71 = dma.done [#allocation6], 8192
    $region41: #{tpu_custom_call.1} parent=1 // pred_fallthru
      _
    // Predicated region
    $region42: #{tpu_custom_call.1} parent=1 // pred_check
      _
    $region43: #{tpu_custom_call.1} parent=1 // pred_check_branch
      %73 = sbr.rel (0) target = $region45
    $region44: #{tpu_custom_call.1} parent=1 // pred_region
      %75 = dma.done [#allocation6], 16384
    $region45: #{tpu_custom_call.1} parent=1 // pred_fallthru
      _
    %v76 = vld [vmem:[%s0] sm:$0x3]
    %v77 = vld [vmem:[%s0 + $0x2] sm:$0x3]
    %v78 = vld [vmem:[%s0 + $0x4] sm:$0x3]
    %v79 = vld [vmem:[%s0 + $0x6] sm:$0x3]
    %v80 = vld [vmem:[%s0 + $0x8] sm:$0x3]
    %v81 = vld [vmem:[%s0 + $0xa] sm:$0x3]
    %v82 = vld [vmem:[%s0 + $0xc] sm:$0x3]
    %v83 = vld [vmem:[%s0 + $0xe] sm:$0x3]
    %v84 = vld [vmem:[#allocation3] sm:$0x3f]
    %v85 = vld [vmem:[#allocation3 + $0x8] sm:$0x3f]
    %v86 = vld [vmem:[#allocation3 + $0x10] sm:$0x3f]
    %v87 = vld [vmem:[#allocation3 + $0x18] sm:$0x3f]
    %v88 = vld [vmem:[%s3] sm:$0xf]
    %v90 = vperm.slane %v88, 0
    %v91 = vperm.slane %v88, 1
    %v92 = vperm.slane %v88, 2
    %v93 = vperm.slane %v88, 3
    %106 = vst [vmem:[#allocation1] ss:$4 sm:$0xff] %v76
    %s107 = scalar_lea.vmem [#allocation1], 1
    %108 = vst [vmem:[%s107] ss:$4 sm:$0xff] %v77
    %s109 = scalar_lea.vmem [#allocation1], 2
    %110 = vst [vmem:[%s109] ss:$4 sm:$0xff] %v78
    %s111 = scalar_lea.vmem [#allocation1], 3
    %112 = vst [vmem:[%s111] ss:$4 sm:$0xff] %v79
    %s113 = scalar_lea.vmem [#allocation1], 32
    %114 = vst [vmem:[%s113] ss:$4 sm:$0xff] %v80
    %s115 = scalar_lea.vmem [#allocation1], 33
    %116 = vst [vmem:[%s115] ss:$4 sm:$0xff] %v81
    %s117 = scalar_lea.vmem [#allocation1], 34
    %118 = vst [vmem:[%s117] ss:$4 sm:$0xff] %v82
    %s119 = scalar_lea.vmem [#allocation1], 35
    %120 = vst [vmem:[%s119] ss:$4 sm:$0xff] %v83
    %v121 = vld.sshfl [vmem:[#allocation1] sm:$0xff pattern:$0x73625140]
    %v122 = vld.sshfl [vmem:[#allocation1 + $0x20] sm:$0xff pattern:$0x73625140]
    %vm123 = vcmask 48128
    %v124 = vsel %vm123, %v121, 0
    %v126 = vsel %vm123, %v122, 0
    %vm128 = vcmask 1045504
    %v130 = vsel %vm128, %v84, 0
    %v133 = vsel %vm128, %v85, 0
    %v136 = vsel %vm128, %v86, 0
    %v139 = vsel %vm128, %v87, 0
    %141 = vmatpush.msra.mxu0 0.0
    %142 = vmatpush.msra.mxu0 0.0
    %143 = vmatpush.msra.mxu0 0.0
    %144 = vmatpush.msra.mxu0 0.0
    %145 = vmatpush.msra.mxu0 0.0
    %146 = vmatpush.msra.mxu0 0.0
    %147 = vmatpush.msra.mxu0 0.0
    %148 = vmatpush.msra.mxu0 0.0
    %149 = vmatpush.msra.mxu0 0.0
    %150 = vmatpush.msra.mxu0 0.0
    %151 = vmatpush.msra.mxu0 0.0
    %152 = vmatpush.msra.mxu0 0.0
    %153 = vmatpush.msra.mxu0 0.0
    %154 = vmatpush.msra.mxu0 0.0
    %155 = vmatpush.msra.mxu0 0.0
    %156 = vmatpush.msra.mxu0 %v130
    %157 = vmatmul.f32.gmra.mxu0 %v124
    %v158 = vpop.f32.mrf.mxu0
    %v159 = vadd.f32 %v90, %v158
    %160 = vmatmul.f32.gmra.mxu0 %v126
    %v161 = vpop.f32.mrf.mxu0
    %v162 = vadd.f32 %v90, %v161
    %163 = vdwg.mxu0
    %164 = vmatpush.msra.mxu0 0.0
    %165 = vmatpush.msra.mxu0 0.0
    %166 = vmatpush.msra.mxu0 0.0
    %167 = vmatpush.msra.mxu0 0.0
    %168 = vmatpush.msra.mxu0 0.0
    %169 = vmatpush.msra.mxu0 0.0
    %170 = vmatpush.msra.mxu0 0.0
    %171 = vmatpush.msra.mxu0 0.0
    %172 = vmatpush.msra.mxu0 0.0
    %173 = vmatpush.msra.mxu0 0.0
    %174 = vmatpush.msra.mxu0 0.0
    %175 = vmatpush.msra.mxu0 0.0
    %176 = vmatpush.msra.mxu0 0.0
    %177 = vmatpush.msra.mxu0 0.0
    %178 = vmatpush.msra.mxu0 0.0
    %179 = vmatpush.msra.mxu0 %v133
    %180 = vmatmul.f32.gmra.mxu0 %v124
    %v181 = vpop.f32.mrf.mxu0
    %v182 = vadd.f32 %v91, %v181
    %183 = vmatmul.f32.gmra.mxu0 %v126
    %v184 = vpop.f32.mrf.mxu0
    %v185 = vadd.f32 %v91, %v184
    %186 = vdwg.mxu0
    %187 = vmatpush.msra.mxu0 0.0
    %188 = vmatpush.msra.mxu0 0.0
    %189 = vmatpush.msra.mxu0 0.0
    %190 = vmatpush.msra.mxu0 0.0
    %191 = vmatpush.msra.mxu0 0.0
    %192 = vmatpush.msra.mxu0 0.0
    %193 = vmatpush.msra.mxu0 0.0
    %194 = vmatpush.msra.mxu0 0.0
    %195 = vmatpush.msra.mxu0 0.0
    %196 = vmatpush.msra.mxu0 0.0
    %197 = vmatpush.msra.mxu0 0.0
    %198 = vmatpush.msra.mxu0 0.0
    %199 = vmatpush.msra.mxu0 0.0
    %200 = vmatpush.msra.mxu0 0.0
    %201 = vmatpush.msra.mxu0 0.0
    %202 = vmatpush.msra.mxu0 %v136
    %203 = vmatmul.f32.gmra.mxu0 %v124
    %v204 = vpop.f32.mrf.mxu0
    %v205 = vadd.f32 %v92, %v204
    %206 = vmatmul.f32.gmra.mxu0 %v126
    %v207 = vpop.f32.mrf.mxu0
    %v208 = vadd.f32 %v92, %v207
    %209 = vdwg.mxu0
    %210 = vmatpush.msra.mxu0 0.0
    %211 = vmatpush.msra.mxu0 0.0
    %212 = vmatpush.msra.mxu0 0.0
    %213 = vmatpush.msra.mxu0 0.0
    %214 = vmatpush.msra.mxu0 0.0
    %215 = vmatpush.msra.mxu0 0.0
    %216 = vmatpush.msra.mxu0 0.0
    %217 = vmatpush.msra.mxu0 0.0
    %218 = vmatpush.msra.mxu0 0.0
    %219 = vmatpush.msra.mxu0 0.0
    %220 = vmatpush.msra.mxu0 0.0
    %221 = vmatpush.msra.mxu0 0.0
    %222 = vmatpush.msra.mxu0 0.0
    %223 = vmatpush.msra.mxu0 0.0
    %224 = vmatpush.msra.mxu0 0.0
    %225 = vmatpush.msra.mxu0 %v139
    %226 = vmatmul.f32.gmra.mxu0 %v124
    %v227 = vpop.f32.mrf.mxu0
    %v228 = vadd.f32 %v93, %v227
    %229 = vmatmul.f32.gmra.mxu0 %v126
    %v230 = vpop.f32.mrf.mxu0
    %v231 = vadd.f32 %v93, %v230
    %232 = vdwg.mxu0
    %v241 = vrot.slane %v182, 6
    %v242 = vrot.slane %v205, 4
    %v243 = vrot.slane %v228, 2
    %v244 = vrot.slane %v185, 6
    %v245 = vrot.slane %v208, 4
    %v246 = vrot.slane %v231, 2
    %vm247 = vcmask 1041408
    %v248 = vsel %vm247, %v159, %v241
    %vm249 = vcmask 1045508
    %v250 = vsel %vm249, %v242, %v243
    %vm251 = vcmask 1043456
    %v252 = vsel %vm251, %v248, %v250
    %vm253 = vcmask 1043458
    %v254 = vsel %vm253, %v159, %v241
    %v255 = vsel %vm128, %v243, %v242
    %vm256 = vcmask 1045506
    %v257 = vsel %vm256, %v254, %v255
    %v258 = vrot.slane %v257, 2
    %v259 = vsel %vm249, %v159, %v241
    %v260 = vsel %vm247, %v242, %v243
    %v261 = vsel %vm251, %v260, %v259
    %v262 = vrot.slane %v261, 4
    %v263 = vsel %vm128, %v241, %v159
    %v264 = vsel %vm253, %v242, %v243
    %v265 = vsel %vm256, %v264, %v263
    %v266 = vrot.slane %v265, 6
    %v267 = vsel %vm247, %v162, %v244
    %v268 = vsel %vm249, %v245, %v246
    %v269 = vsel %vm251, %v267, %v268
    %v270 = vsel %vm253, %v162, %v244
    %v271 = vsel %vm128, %v246, %v245
    %v272 = vsel %vm256, %v270, %v271
    %v273 = vrot.slane %v272, 2
    %v274 = vsel %vm249, %v162, %v244
    %v275 = vsel %vm247, %v245, %v246
    %v276 = vsel %vm251, %v275, %v274
    %v277 = vrot.slane %v276, 4
    %v278 = vsel %vm128, %v244, %v162
    %v279 = vsel %vm253, %v245, %v246
    %v280 = vsel %vm256, %v279, %v278
    %v281 = vrot.slane %v280, 6
    %v290 = vld [vmem:[#allocation5] sm:$0xff]
    %v291 = vld [vmem:[#allocation5 + $0x8] sm:$0xff]
    %v292 = vld [vmem:[#allocation5 + $0x10] sm:$0xff]
    %v293 = vld [vmem:[#allocation5 + $0x18] sm:$0xff]
    %v294 = vld [vmem:[#allocation5 + $0x20] sm:$0xff]
    %v295 = vld [vmem:[#allocation5 + $0x28] sm:$0xff]
    %v296 = vld [vmem:[#allocation5 + $0x30] sm:$0xff]
    %v297 = vld [vmem:[#allocation5 + $0x38] sm:$0xff]
    %v298 = vld [vmem:[#allocation5 + $0x40] sm:$0xff]
    %v299 = vld [vmem:[#allocation5 + $0x48] sm:$0xff]
    %v300 = vld [vmem:[#allocation5 + $0x50] sm:$0xff]
    %v301 = vld [vmem:[#allocation5 + $0x58] sm:$0xff]
    %v302 = vld [vmem:[#allocation5 + $0x60] sm:$0xff]
    %v303 = vld [vmem:[#allocation5 + $0x68] sm:$0xff]
    %v304 = vld [vmem:[#allocation5 + $0x70] sm:$0xff]
    %v305 = vld [vmem:[#allocation5 + $0x78] sm:$0xff]
    %v306 = vld [vmem:[#allocation5 + $0x80] sm:$0xff]
    %v307 = vld [vmem:[#allocation5 + $0x88] sm:$0xff]
    %v308 = vld [vmem:[#allocation5 + $0x90] sm:$0xff]
    %v309 = vld [vmem:[#allocation5 + $0x98] sm:$0xff]
    %v310 = vld [vmem:[#allocation5 + $0xa0] sm:$0xff]
    %v311 = vld [vmem:[#allocation5 + $0xa8] sm:$0xff]
    %v312 = vld [vmem:[#allocation5 + $0xb0] sm:$0xff]
    %v313 = vld [vmem:[#allocation5 + $0xb8] sm:$0xff]
    %v314 = vld [vmem:[#allocation5 + $0xc0] sm:$0xff]
    %v315 = vld [vmem:[#allocation5 + $0xc8] sm:$0xff]
    %v316 = vld [vmem:[#allocation5 + $0xd0] sm:$0xff]
    %v317 = vld [vmem:[#allocation5 + $0xd8] sm:$0xff]
    %v318 = vld [vmem:[#allocation5 + $0xe0] sm:$0xff]
    %v319 = vld [vmem:[#allocation5 + $0xe8] sm:$0xff]
    %v320 = vld [vmem:[#allocation5 + $0xf0] sm:$0xff]
    %v321 = vld [vmem:[#allocation5 + $0xf8] sm:$0xff]
    %v322 = vld [vmem:[#allocation5 + $0x100] sm:$0xff]
    %v323 = vld [vmem:[#allocation5 + $0x108] sm:$0xff]
    %v324 = vld [vmem:[#allocation5 + $0x110] sm:$0xff]
    %v325 = vld [vmem:[#allocation5 + $0x118] sm:$0xff]
    %v326 = vld [vmem:[#allocation5 + $0x120] sm:$0xff]
    %v327 = vld [vmem:[#allocation5 + $0x128] sm:$0xff]
    %v328 = vld [vmem:[#allocation5 + $0x130] sm:$0xff]
    %v329 = vld [vmem:[#allocation5 + $0x138] sm:$0xff]
    %v330 = vld [vmem:[#allocation5 + $0x140] sm:$0xff]
    %v331 = vld [vmem:[#allocation5 + $0x148] sm:$0xff]
    %v332 = vld [vmem:[#allocation5 + $0x150] sm:$0xff]
    %v333 = vld [vmem:[#allocation5 + $0x158] sm:$0xff]
    %v334 = vld [vmem:[#allocation5 + $0x160] sm:$0xff]
    %v335 = vld [vmem:[#allocation5 + $0x168] sm:$0xff]
    %v336 = vld [vmem:[#allocation5 + $0x170] sm:$0xff]
    %v337 = vld [vmem:[#allocation5 + $0x178] sm:$0xff]
    %v338 = vld [vmem:[#allocation5 + $0x180] sm:$0xff]
    %v339 = vld [vmem:[#allocation5 + $0x188] sm:$0xff]
    %v340 = vld [vmem:[#allocation5 + $0x190] sm:$0xff]
    %v341 = vld [vmem:[#allocation5 + $0x198] sm:$0xff]
    %v342 = vld [vmem:[#allocation5 + $0x1a0] sm:$0xff]
    %v343 = vld [vmem:[#allocation5 + $0x1a8] sm:$0xff]
    %v344 = vld [vmem:[#allocation5 + $0x1b0] sm:$0xff]
    %v345 = vld [vmem:[#allocation5 + $0x1b8] sm:$0xff]
    %v346 = vld [vmem:[#allocation5 + $0x1c0] sm:$0xff]
    %v347 = vld [vmem:[#allocation5 + $0x1c8] sm:$0xff]
    %v348 = vld [vmem:[#allocation5 + $0x1d0] sm:$0xff]
    %v349 = vld [vmem:[#allocation5 + $0x1d8] sm:$0xff]
    %v350 = vld [vmem:[#allocation5 + $0x1e0] sm:$0xff]
    %v351 = vld [vmem:[#allocation5 + $0x1e8] sm:$0xff]
    %v352 = vld [vmem:[#allocation5 + $0x1f0] sm:$0xff]
    %v353 = vld [vmem:[#allocation5 + $0x1f8] sm:$0xff]
    %v354 = vld [vmem:[#allocation7] sm:$0xff]
    %v355 = vld [vmem:[#allocation7 + $0x8] sm:$0xff]
    %v356 = vld [vmem:[#allocation7 + $0x10] sm:$0xff]
    %v357 = vld [vmem:[#allocation7 + $0x18] sm:$0xff]
    %v358 = vld [vmem:[#allocation7 + $0x20] sm:$0xff]
    %v359 = vld [vmem:[#allocation7 + $0x28] sm:$0xff]
    %v360 = vld [vmem:[#allocation7 + $0x30] sm:$0xff]
    %v361 = vld [vmem:[#allocation7 + $0x38] sm:$0xff]
    %v362 = vld [vmem:[#allocation7 + $0x40] sm:$0xff]
    %v363 = vld [vmem:[#allocation7 + $0x48] sm:$0xff]
    %v364 = vld [vmem:[#allocation7 + $0x50] sm:$0xff]
    %v365 = vld [vmem:[#allocation7 + $0x58] sm:$0xff]
    %v366 = vld [vmem:[#allocation7 + $0x60] sm:$0xff]
    %v367 = vld [vmem:[#allocation7 + $0x68] sm:$0xff]
    %v368 = vld [vmem:[#allocation7 + $0x70] sm:$0xff]
    %v369 = vld [vmem:[#allocation7 + $0x78] sm:$0xff]
    %v370 = vld [vmem:[#allocation7 + $0x80] sm:$0xff]
    %v371 = vld [vmem:[#allocation7 + $0x88] sm:$0xff]
    %v372 = vld [vmem:[#allocation7 + $0x90] sm:$0xff]
    %v373 = vld [vmem:[#allocation7 + $0x98] sm:$0xff]
    %v374 = vld [vmem:[#allocation7 + $0xa0] sm:$0xff]
    %v375 = vld [vmem:[#allocation7 + $0xa8] sm:$0xff]
    %v376 = vld [vmem:[#allocation7 + $0xb0] sm:$0xff]
    %v377 = vld [vmem:[#allocation7 + $0xb8] sm:$0xff]
    %v378 = vld [vmem:[#allocation7 + $0xc0] sm:$0xff]
    %v379 = vld [vmem:[#allocation7 + $0xc8] sm:$0xff]
    %v380 = vld [vmem:[#allocation7 + $0xd0] sm:$0xff]
    %v381 = vld [vmem:[#allocation7 + $0xd8] sm:$0xff]
    %v382 = vld [vmem:[#allocation7 + $0xe0] sm:$0xff]
    %v383 = vld [vmem:[#allocation7 + $0xe8] sm:$0xff]
    %v384 = vld [vmem:[#allocation7 + $0xf0] sm:$0xff]
    %v385 = vld [vmem:[#allocation7 + $0xf8] sm:$0xff]
    %v386 = vld [vmem:[#allocation7 + $0x100] sm:$0xff]
    %v387 = vld [vmem:[#allocation7 + $0x108] sm:$0xff]
    %v388 = vld [vmem:[#allocation7 + $0x110] sm:$0xff]
    %v389 = vld [vmem:[#allocation7 + $0x118] sm:$0xff]
    %v390 = vld [vmem:[#allocation7 + $0x120] sm:$0xff]
    %v391 = vld [vmem:[#allocation7 + $0x128] sm:$0xff]
    %v392 = vld [vmem:[#allocation7 + $0x130] sm:$0xff]
    %v393 = vld [vmem:[#allocation7 + $0x138] sm:$0xff]
    %v394 = vld [vmem:[#allocation7 + $0x140] sm:$0xff]
    %v395 = vld [vmem:[#allocation7 + $0x148] sm:$0xff]
    %v396 = vld [vmem:[#allocation7 + $0x150] sm:$0xff]
    %v397 = vld [vmem:[#allocation7 + $0x158] sm:$0xff]
    %v398 = vld [vmem:[#allocation7 + $0x160] sm:$0xff]
    %v399 = vld [vmem:[#allocation7 + $0x168] sm:$0xff]
    %v400 = vld [vmem:[#allocation7 + $0x170] sm:$0xff]
    %v401 = vld [vmem:[#allocation7 + $0x178] sm:$0xff]
    %v402 = vld [vmem:[#allocation7 + $0x180] sm:$0xff]
    %v403 = vld [vmem:[#allocation7 + $0x188] sm:$0xff]
    %v404 = vld [vmem:[#allocation7 + $0x190] sm:$0xff]
    %v405 = vld [vmem:[#allocation7 + $0x198] sm:$0xff]
    %v406 = vld [vmem:[#allocation7 + $0x1a0] sm:$0xff]
    %v407 = vld [vmem:[#allocation7 + $0x1a8] sm:$0xff]
    %v408 = vld [vmem:[#allocation7 + $0x1b0] sm:$0xff]
    %v409 = vld [vmem:[#allocation7 + $0x1b8] sm:$0xff]
    %v410 = vld [vmem:[#allocation7 + $0x1c0] sm:$0xff]
    %v411 = vld [vmem:[#allocation7 + $0x1c8] sm:$0xff]
    %v412 = vld [vmem:[#allocation7 + $0x1d0] sm:$0xff]
    %v413 = vld [vmem:[#allocation7 + $0x1d8] sm:$0xff]
    %v414 = vld [vmem:[#allocation7 + $0x1e0] sm:$0xff]
    %v415 = vld [vmem:[#allocation7 + $0x1e8] sm:$0xff]
    %v416 = vld [vmem:[#allocation7 + $0x1f0] sm:$0xff]
    %v417 = vld [vmem:[#allocation7 + $0x1f8] sm:$0xff]
    %v418 = vld [vmem:[#allocation7 + $0x200] sm:$0xff]
    %v419 = vld [vmem:[#allocation7 + $0x208] sm:$0xff]
    %v420 = vld [vmem:[#allocation7 + $0x210] sm:$0xff]
    %v421 = vld [vmem:[#allocation7 + $0x218] sm:$0xff]
    %v422 = vld [vmem:[#allocation7 + $0x220] sm:$0xff]
    %v423 = vld [vmem:[#allocation7 + $0x228] sm:$0xff]
    %v424 = vld [vmem:[#allocation7 + $0x230] sm:$0xff]
    %v425 = vld [vmem:[#allocation7 + $0x238] sm:$0xff]
    %v426 = vld [vmem:[#allocation7 + $0x240] sm:$0xff]
    %v427 = vld [vmem:[#allocation7 + $0x248] sm:$0xff]
    %v428 = vld [vmem:[#allocation7 + $0x250] sm:$0xff]
    %v429 = vld [vmem:[#allocation7 + $0x258] sm:$0xff]
    %v430 = vld [vmem:[#allocation7 + $0x260] sm:$0xff]
    %v431 = vld [vmem:[#allocation7 + $0x268] sm:$0xff]
    %v432 = vld [vmem:[#allocation7 + $0x270] sm:$0xff]
    %v433 = vld [vmem:[#allocation7 + $0x278] sm:$0xff]
    %v434 = vld [vmem:[#allocation7 + $0x280] sm:$0xff]
    %v435 = vld [vmem:[#allocation7 + $0x288] sm:$0xff]
    %v436 = vld [vmem:[#allocation7 + $0x290] sm:$0xff]
    %v437 = vld [vmem:[#allocation7 + $0x298] sm:$0xff]
    %v438 = vld [vmem:[#allocation7 + $0x2a0] sm:$0xff]
    %v439 = vld [vmem:[#allocation7 + $0x2a8] sm:$0xff]
    %v440 = vld [vmem:[#allocation7 + $0x2b0] sm:$0xff]
    %v441 = vld [vmem:[#allocation7 + $0x2b8] sm:$0xff]
    %v442 = vld [vmem:[#allocation7 + $0x2c0] sm:$0xff]
    %v443 = vld [vmem:[#allocation7 + $0x2c8] sm:$0xff]
    %v444 = vld [vmem:[#allocation7 + $0x2d0] sm:$0xff]
    %v445 = vld [vmem:[#allocation7 + $0x2d8] sm:$0xff]
    %v446 = vld [vmem:[#allocation7 + $0x2e0] sm:$0xff]
    %v447 = vld [vmem:[#allocation7 + $0x2e8] sm:$0xff]
    %v448 = vld [vmem:[#allocation7 + $0x2f0] sm:$0xff]
    %v449 = vld [vmem:[#allocation7 + $0x2f8] sm:$0xff]
    %v450 = vld [vmem:[#allocation7 + $0x300] sm:$0xff]
    %v451 = vld [vmem:[#allocation7 + $0x308] sm:$0xff]
    %v452 = vld [vmem:[#allocation7 + $0x310] sm:$0xff]
    %v453 = vld [vmem:[#allocation7 + $0x318] sm:$0xff]
    %v454 = vld [vmem:[#allocation7 + $0x320] sm:$0xff]
    %v455 = vld [vmem:[#allocation7 + $0x328] sm:$0xff]
    %v456 = vld [vmem:[#allocation7 + $0x330] sm:$0xff]
    %v457 = vld [vmem:[#allocation7 + $0x338] sm:$0xff]
    %v458 = vld [vmem:[#allocation7 + $0x340] sm:$0xff]
    %v459 = vld [vmem:[#allocation7 + $0x348] sm:$0xff]
    %v460 = vld [vmem:[#allocation7 + $0x350] sm:$0xff]
    %v461 = vld [vmem:[#allocation7 + $0x358] sm:$0xff]
    %v462 = vld [vmem:[#allocation7 + $0x360] sm:$0xff]
    %v463 = vld [vmem:[#allocation7 + $0x368] sm:$0xff]
    %v464 = vld [vmem:[#allocation7 + $0x370] sm:$0xff]
    %v465 = vld [vmem:[#allocation7 + $0x378] sm:$0xff]
    %v466 = vld [vmem:[#allocation7 + $0x380] sm:$0xff]
    %v467 = vld [vmem:[#allocation7 + $0x388] sm:$0xff]
    %v468 = vld [vmem:[#allocation7 + $0x390] sm:$0xff]
    %v469 = vld [vmem:[#allocation7 + $0x398] sm:$0xff]
    %v470 = vld [vmem:[#allocation7 + $0x3a0] sm:$0xff]
    %v471 = vld [vmem:[#allocation7 + $0x3a8] sm:$0xff]
    %v472 = vld [vmem:[#allocation7 + $0x3b0] sm:$0xff]
    %v473 = vld [vmem:[#allocation7 + $0x3b8] sm:$0xff]
    %v474 = vld [vmem:[#allocation7 + $0x3c0] sm:$0xff]
    %v475 = vld [vmem:[#allocation7 + $0x3c8] sm:$0xff]
    %v476 = vld [vmem:[#allocation7 + $0x3d0] sm:$0xff]
    %v477 = vld [vmem:[#allocation7 + $0x3d8] sm:$0xff]
    %v478 = vld [vmem:[#allocation7 + $0x3e0] sm:$0xff]
    %v479 = vld [vmem:[#allocation7 + $0x3e8] sm:$0xff]
    %v480 = vld [vmem:[#allocation7 + $0x3f0] sm:$0xff]
    %v481 = vld [vmem:[#allocation7 + $0x3f8] sm:$0xff]
    %v482 = vld [vmem:[%s5] sm:$0xf]
    %v484 = vperm.slane %v482, 0
    %v485 = vperm.slane %v482, 1
    %v486 = vperm.slane %v482, 2
    %v487 = vperm.slane %v482, 3
    %492 = vmatpush.msra.mxu0 %v350
    %493 = vmatpush.msra.mxu0 %v346
    %494 = vmatpush.msra.mxu0 %v342
    %495 = vmatpush.msra.mxu0 %v338
    %496 = vmatpush.msra.mxu0 %v334
    %497 = vmatpush.msra.mxu0 %v330
    %498 = vmatpush.msra.mxu0 %v326
    %499 = vmatpush.msra.mxu0 %v322
    %500 = vmatpush.msra.mxu0 %v318
    %501 = vmatpush.msra.mxu0 %v314
    %502 = vmatpush.msra.mxu0 %v310
    %503 = vmatpush.msra.mxu0 %v306
    %504 = vmatpush.msra.mxu0 %v302
    %505 = vmatpush.msra.mxu0 %v298
    %506 = vmatpush.msra.mxu0 %v294
    %507 = vmatpush.msra.mxu0 %v290
    %508 = vmatmul.f32.gmra.mxu0 0.0
    %v509 = vpop.f32.mrf.mxu0
    %v510 = vadd.f32 0.0, %v509
    %511 = vdwg.mxu0
    %512 = vmatpush.msra.mxu0 %v351
    %513 = vmatpush.msra.mxu0 %v347
    %514 = vmatpush.msra.mxu0 %v343
    %515 = vmatpush.msra.mxu0 %v339
    %516 = vmatpush.msra.mxu0 %v335
    %517 = vmatpush.msra.mxu0 %v331
    %518 = vmatpush.msra.mxu0 %v327
    %519 = vmatpush.msra.mxu0 %v323
    %520 = vmatpush.msra.mxu0 %v319
    %521 = vmatpush.msra.mxu0 %v315
    %522 = vmatpush.msra.mxu0 %v311
    %523 = vmatpush.msra.mxu0 %v307
    %524 = vmatpush.msra.mxu0 %v303
    %525 = vmatpush.msra.mxu0 %v299
    %526 = vmatpush.msra.mxu0 %v295
    %527 = vmatpush.msra.mxu0 %v291
    %528 = vmatmul.f32.gmra.mxu0 0.0
    %v529 = vpop.f32.mrf.mxu0
    %v530 = vadd.f32 0.0, %v529
    %531 = vdwg.mxu0
    %532 = vmatpush.msra.mxu0 %v352
    %533 = vmatpush.msra.mxu0 %v348
    %534 = vmatpush.msra.mxu0 %v344
    %535 = vmatpush.msra.mxu0 %v340
    %536 = vmatpush.msra.mxu0 %v336
    %537 = vmatpush.msra.mxu0 %v332
    %538 = vmatpush.msra.mxu0 %v328
    %539 = vmatpush.msra.mxu0 %v324
    %540 = vmatpush.msra.mxu0 %v320
    %541 = vmatpush.msra.mxu0 %v316
    %542 = vmatpush.msra.mxu0 %v312
    %543 = vmatpush.msra.mxu0 %v308
    %544 = vmatpush.msra.mxu0 %v304
    %545 = vmatpush.msra.mxu0 %v300
    %546 = vmatpush.msra.mxu0 %v296
    %547 = vmatpush.msra.mxu0 %v292
    %548 = vmatmul.f32.gmra.mxu0 0.0
    %v549 = vpop.f32.mrf.mxu0
    %v550 = vadd.f32 0.0, %v549
    %551 = vdwg.mxu0
    %552 = vmatpush.msra.mxu0 %v353
    %553 = vmatpush.msra.mxu0 %v349
    %554 = vmatpush.msra.mxu0 %v345
    %555 = vmatpush.msra.mxu0 %v341
    %556 = vmatpush.msra.mxu0 %v337
    %557 = vmatpush.msra.mxu0 %v333
    %558 = vmatpush.msra.mxu0 %v329
    %559 = vmatpush.msra.mxu0 %v325
    %560 = vmatpush.msra.mxu0 %v321
    %561 = vmatpush.msra.mxu0 %v317
    %562 = vmatpush.msra.mxu0 %v313
    %563 = vmatpush.msra.mxu0 %v309
    %564 = vmatpush.msra.mxu0 %v305
    %565 = vmatpush.msra.mxu0 %v301
    %566 = vmatpush.msra.mxu0 %v297
    %567 = vmatpush.msra.mxu0 %v293
    %568 = vmatmul.f32.gmra.mxu0 0.0
    %v569 = vpop.f32.mrf.mxu0
    %v570 = vadd.f32 0.0, %v569
    %571 = vdwg.mxu0
    %v576 = vrot.slane %v530, 6
    %v577 = vrot.slane %v550, 4
    %v578 = vrot.slane %v570, 2
    %v579 = vsel %vm247, %v510, %v576
    %v580 = vsel %vm249, %v577, %v578
    %v581 = vsel %vm251, %v579, %v580
    %v583 = vadd.f32 %v252, %v581
    %v584 = vxor.u32 %v583, 2147483648
    %v585 = vmul.f32 %v584, 1.442695
    %v586 = vpow.pop %v585
    %v587 = vadd.f32 %v586, 1.0
    %v588 = vrcp.pop %v587
    %v589 = vmul.f32 %v587, %v588
    %v590 = vsub.f32 1.0, %v589
    %v591 = vmul.f32 %v588, %v590
    %v592 = vadd.f32 %v588, %v591
    %vm593 = vweird.f32 %v587
    %vm594 = vweird.f32 %v588
    %vm595 = vmor %vm593, %vm594
    %v596 = vsel %vm595, %v588, %v592
    %v597 = vand.u32 2147483647, %v587
    %vm598 = vcmp.eq.f32.partialorder %v597, 8.507059e+37
    %v599 = vand.u32 %v587, 2147483648
    %v600 = vor.u32 1.1754944e-38, %v599
    %v601 = vsel %vm598, %v600, %v596
    %v602 = vmul.f32 1.0, %v601
    %v604 = vrot.slane %v583, 2
    %v606 = vxor.u32 %v604, 2147483648
    %v607 = vmul.f32 %v606, 1.442695
    %v608 = vpow.pop %v607
    %v609 = vadd.f32 %v608, 1.0
    %v610 = vrcp.pop %v609
    %v611 = vmul.f32 %v609, %v610
    %v612 = vsub.f32 1.0, %v611
    %v613 = vmul.f32 %v610, %v612
    %v614 = vadd.f32 %v610, %v613
    %vm615 = vweird.f32 %v609
    %vm616 = vweird.f32 %v610
    %vm617 = vmor %vm615, %vm616
    %v618 = vsel %vm617, %v610, %v614
    %v619 = vand.u32 2147483647, %v609
    %vm620 = vcmp.eq.f32.partialorder %v619, 8.507059e+37
    %v621 = vand.u32 %v609, 2147483648
    %v622 = vor.u32 1.1754944e-38, %v621
    %v623 = vsel %vm620, %v622, %v618
    %v624 = vmul.f32 1.0, %v623
    %v625 = vrot.slane %v583, 4
    %v627 = vtanh.pop %v625
    %v628 = vrot.slane %v583, 6
    %v630 = vxor.u32 %v628, 2147483648
    %v631 = vmul.f32 %v630, 1.442695
    %v632 = vpow.pop %v631
    %v633 = vadd.f32 %v632, 1.0
    %v634 = vrcp.pop %v633
    %v635 = vmul.f32 %v633, %v634
    %v636 = vsub.f32 1.0, %v635
    %v637 = vmul.f32 %v634, %v636
    %v638 = vadd.f32 %v634, %v637
    %vm639 = vweird.f32 %v633
    %vm640 = vweird.f32 %v634
    %vm641 = vmor %vm639, %vm640
    %v642 = vsel %vm641, %v634, %v638
    %v643 = vand.u32 2147483647, %v633
    %vm644 = vcmp.eq.f32.partialorder %v643, 8.507059e+37
    %v645 = vand.u32 %v633, 2147483648
    %v646 = vor.u32 1.1754944e-38, %v645
    %v647 = vsel %vm644, %v646, %v642
    %v648 = vmul.f32 1.0, %v647
    %v649 = vmul.f32 %v624, 0.0
    %v650 = vmul.f32 %v602, %v627
    %v651 = vadd.f32 %v649, %v650
    %v652 = vtanh.pop %v651
    %v653 = vmul.f32 %v648, %v652
    %654 = vmatpush.msra.mxu0 %v414
    %655 = vmatpush.msra.mxu0 %v410
    %656 = vmatpush.msra.mxu0 %v406
    %657 = vmatpush.msra.mxu0 %v402
    %658 = vmatpush.msra.mxu0 %v398
    %659 = vmatpush.msra.mxu0 %v394
    %660 = vmatpush.msra.mxu0 %v390
    %661 = vmatpush.msra.mxu0 %v386
    %662 = vmatpush.msra.mxu0 %v382
    %663 = vmatpush.msra.mxu0 %v378
    %664 = vmatpush.msra.mxu0 %v374
    %665 = vmatpush.msra.mxu0 %v370
    %666 = vmatpush.msra.mxu0 %v366
    %667 = vmatpush.msra.mxu0 %v362
    %668 = vmatpush.msra.mxu0 %v358
    %669 = vmatpush.msra.mxu0 %v354
    %670 = vmatmul.f32.gmra.mxu0 %v653
    %v671 = vpop.f32.mrf.mxu0
    %v672 = vadd.f32 %v484, %v671
    %673 = vdwg.mxu0
    %674 = vmatpush.msra.mxu0 %v478
    %675 = vmatpush.msra.mxu0 %v474
    %676 = vmatpush.msra.mxu0 %v470
    %677 = vmatpush.msra.mxu0 %v466
    %678 = vmatpush.msra.mxu0 %v462
    %679 = vmatpush.msra.mxu0 %v458
    %680 = vmatpush.msra.mxu0 %v454
    %681 = vmatpush.msra.mxu0 %v450
    %682 = vmatpush.msra.mxu0 %v446
    %683 = vmatpush.msra.mxu0 %v442
    %684 = vmatpush.msra.mxu0 %v438
    %685 = vmatpush.msra.mxu0 %v434
    %686 = vmatpush.msra.mxu0 %v430
    %687 = vmatpush.msra.mxu0 %v426
    %688 = vmatpush.msra.mxu0 %v422
    %689 = vmatpush.msra.mxu0 %v418
    %690 = vmatmul.f32.gmra.mxu0 0.0
    %v691 = vpop.f32.mrf.mxu0
    %v692 = vadd.f32 %v672, %v691
    %693 = vdwg.mxu0
    %694 = vmatpush.msra.mxu0 %v415
    %695 = vmatpush.msra.mxu0 %v411
    %696 = vmatpush.msra.mxu0 %v407
    %697 = vmatpush.msra.mxu0 %v403
    %698 = vmatpush.msra.mxu0 %v399
    %699 = vmatpush.msra.mxu0 %v395
    %700 = vmatpush.msra.mxu0 %v391
    %701 = vmatpush.msra.mxu0 %v387
    %702 = vmatpush.msra.mxu0 %v383
    %703 = vmatpush.msra.mxu0 %v379
    %704 = vmatpush.msra.mxu0 %v375
    %705 = vmatpush.msra.mxu0 %v371
    %706 = vmatpush.msra.mxu0 %v367
    %707 = vmatpush.msra.mxu0 %v363
    %708 = vmatpush.msra.mxu0 %v359
    %709 = vmatpush.msra.mxu0 %v355
    %710 = vmatmul.f32.gmra.mxu0 %v653
    %v711 = vpop.f32.mrf.mxu0
    %v712 = vadd.f32 %v485, %v711
    %713 = vdwg.mxu0
    %714 = vmatpush.msra.mxu0 %v479
    %715 = vmatpush.msra.mxu0 %v475
    %716 = vmatpush.msra.mxu0 %v471
    %717 = vmatpush.msra.mxu0 %v467
    %718 = vmatpush.msra.mxu0 %v463
    %719 = vmatpush.msra.mxu0 %v459
    %720 = vmatpush.msra.mxu0 %v455
    %721 = vmatpush.msra.mxu0 %v451
    %722 = vmatpush.msra.mxu0 %v447
    %723 = vmatpush.msra.mxu0 %v443
    %724 = vmatpush.msra.mxu0 %v439
    %725 = vmatpush.msra.mxu0 %v435
    %726 = vmatpush.msra.mxu0 %v431
    %727 = vmatpush.msra.mxu0 %v427
    %728 = vmatpush.msra.mxu0 %v423
    %729 = vmatpush.msra.mxu0 %v419
    %730 = vmatmul.f32.gmra.mxu0 0.0
    %v731 = vpop.f32.mrf.mxu0
    %v732 = vadd.f32 %v712, %v731
    %733 = vdwg.mxu0
    %734 = vmatpush.msra.mxu0 %v416
    %735 = vmatpush.msra.mxu0 %v412
    %736 = vmatpush.msra.mxu0 %v408
    %737 = vmatpush.msra.mxu0 %v404
    %738 = vmatpush.msra.mxu0 %v400
    %739 = vmatpush.msra.mxu0 %v396
    %740 = vmatpush.msra.mxu0 %v392
    %741 = vmatpush.msra.mxu0 %v388
    %742 = vmatpush.msra.mxu0 %v384
    %743 = vmatpush.msra.mxu0 %v380
    %744 = vmatpush.msra.mxu0 %v376
    %745 = vmatpush.msra.mxu0 %v372
    %746 = vmatpush.msra.mxu0 %v368
    %747 = vmatpush.msra.mxu0 %v364
    %748 = vmatpush.msra.mxu0 %v360
    %749 = vmatpush.msra.mxu0 %v356
    %750 = vmatmul.f32.gmra.mxu0 %v653
    %v751 = vpop.f32.mrf.mxu0
    %v752 = vadd.f32 %v486, %v751
    %753 = vdwg.mxu0
    %754 = vmatpush.msra.mxu0 %v480
    %755 = vmatpush.msra.mxu0 %v476
    %756 = vmatpush.msra.mxu0 %v472
    %757 = vmatpush.msra.mxu0 %v468
    %758 = vmatpush.msra.mxu0 %v464
    %759 = vmatpush.msra.mxu0 %v460
    %760 = vmatpush.msra.mxu0 %v456
    %761 = vmatpush.msra.mxu0 %v452
    %762 = vmatpush.msra.mxu0 %v448
    %763 = vmatpush.msra.mxu0 %v444
    %764 = vmatpush.msra.mxu0 %v440
    %765 = vmatpush.msra.mxu0 %v436
    %766 = vmatpush.msra.mxu0 %v432
    %767 = vmatpush.msra.mxu0 %v428
    %768 = vmatpush.msra.mxu0 %v424
    %769 = vmatpush.msra.mxu0 %v420
    %770 = vmatmul.f32.gmra.mxu0 0.0
    %v771 = vpop.f32.mrf.mxu0
    %v772 = vadd.f32 %v752, %v771
    %773 = vdwg.mxu0
    %774 = vmatpush.msra.mxu0 %v417
    %775 = vmatpush.msra.mxu0 %v413
    %776 = vmatpush.msra.mxu0 %v409
    %777 = vmatpush.msra.mxu0 %v405
    %778 = vmatpush.msra.mxu0 %v401
    %779 = vmatpush.msra.mxu0 %v397
    %780 = vmatpush.msra.mxu0 %v393
    %781 = vmatpush.msra.mxu0 %v389
    %782 = vmatpush.msra.mxu0 %v385
    %783 = vmatpush.msra.mxu0 %v381
    %784 = vmatpush.msra.mxu0 %v377
    %785 = vmatpush.msra.mxu0 %v373
    %786 = vmatpush.msra.mxu0 %v369
    %787 = vmatpush.msra.mxu0 %v365
    %788 = vmatpush.msra.mxu0 %v361
    %789 = vmatpush.msra.mxu0 %v357
    %790 = vmatmul.f32.gmra.mxu0 %v653
    %v791 = vpop.f32.mrf.mxu0
    %v792 = vadd.f32 %v487, %v791
    %793 = vdwg.mxu0
    %794 = vmatpush.msra.mxu0 %v481
    %795 = vmatpush.msra.mxu0 %v477
    %796 = vmatpush.msra.mxu0 %v473
    %797 = vmatpush.msra.mxu0 %v469
    %798 = vmatpush.msra.mxu0 %v465
    %799 = vmatpush.msra.mxu0 %v461
    %800 = vmatpush.msra.mxu0 %v457
    %801 = vmatpush.msra.mxu0 %v453
    %802 = vmatpush.msra.mxu0 %v449
    %803 = vmatpush.msra.mxu0 %v445
    %804 = vmatpush.msra.mxu0 %v441
    %805 = vmatpush.msra.mxu0 %v437
    %806 = vmatpush.msra.mxu0 %v433
    %807 = vmatpush.msra.mxu0 %v429
    %808 = vmatpush.msra.mxu0 %v425
    %809 = vmatpush.msra.mxu0 %v421
    %810 = vmatmul.f32.gmra.mxu0 0.0
    %v811 = vpop.f32.mrf.mxu0
    %v812 = vadd.f32 %v792, %v811
    %813 = vdwg.mxu0
    %v814 = vxor.u32 %v692, 2147483648
    %v815 = vmul.f32 %v814, 1.442695
    %v816 = vpow.pop %v815
    %v817 = vadd.f32 %v816, 1.0
    %v818 = vrcp.pop %v817
    %v819 = vmul.f32 %v817, %v818
    %v820 = vsub.f32 1.0, %v819
    %v821 = vmul.f32 %v818, %v820
    %v822 = vadd.f32 %v818, %v821
    %vm823 = vweird.f32 %v817
    %vm824 = vweird.f32 %v818
    %vm825 = vmor %vm823, %vm824
    %v826 = vsel %vm825, %v818, %v822
    %v827 = vand.u32 2147483647, %v817
    %vm828 = vcmp.eq.f32.partialorder %v827, 8.507059e+37
    %v829 = vand.u32 %v817, 2147483648
    %v830 = vor.u32 1.1754944e-38, %v829
    %v831 = vsel %vm828, %v830, %v826
    %v832 = vmul.f32 1.0, %v831
    %v833 = vxor.u32 %v732, 2147483648
    %v834 = vmul.f32 %v833, 1.442695
    %v835 = vpow.pop %v834
    %v836 = vadd.f32 %v835, 1.0
    %v837 = vrcp.pop %v836
    %v838 = vmul.f32 %v836, %v837
    %v839 = vsub.f32 1.0, %v838
    %v840 = vmul.f32 %v837, %v839
    %v841 = vadd.f32 %v837, %v840
    %vm842 = vweird.f32 %v836
    %vm843 = vweird.f32 %v837
    %vm844 = vmor %vm842, %vm843
    %v845 = vsel %vm844, %v837, %v841
    %v846 = vand.u32 2147483647, %v836
    %vm847 = vcmp.eq.f32.partialorder %v846, 8.507059e+37
    %v848 = vand.u32 %v836, 2147483648
    %v849 = vor.u32 1.1754944e-38, %v848
    %v850 = vsel %vm847, %v849, %v845
    %v851 = vmul.f32 1.0, %v850
    %v852 = vtanh.pop %v772
    %v853 = vxor.u32 %v812, 2147483648
    %v854 = vmul.f32 %v853, 1.442695
    %v855 = vpow.pop %v854
    %v856 = vadd.f32 %v855, 1.0
    %v857 = vrcp.pop %v856
    %v858 = vmul.f32 %v856, %v857
    %v859 = vsub.f32 1.0, %v858
    %v860 = vmul.f32 %v857, %v859
    %v861 = vadd.f32 %v857, %v860
    %vm862 = vweird.f32 %v856
    %vm863 = vweird.f32 %v857
    %vm864 = vmor %vm862, %vm863
    %v865 = vsel %vm864, %v857, %v861
    %v866 = vand.u32 2147483647, %v856
    %vm867 = vcmp.eq.f32.partialorder %v866, 8.507059e+37
    %v868 = vand.u32 %v856, 2147483648
    %v869 = vor.u32 1.1754944e-38, %v868
    %v870 = vsel %vm867, %v869, %v865
    %v871 = vmul.f32 1.0, %v870
    %v872 = vmul.f32 %v851, 0.0
    %v873 = vmul.f32 %v832, %v852
    %v874 = vadd.f32 %v872, %v873
    %v875 = vtanh.pop %v874
    %v876 = vmul.f32 %v871, %v875
    %877 = vmatpush.msra.mxu0 %v350
    %878 = vmatpush.msra.mxu0 %v346
    %879 = vmatpush.msra.mxu0 %v342
    %880 = vmatpush.msra.mxu0 %v338
    %881 = vmatpush.msra.mxu0 %v334
    %882 = vmatpush.msra.mxu0 %v330
    %883 = vmatpush.msra.mxu0 %v326
    %884 = vmatpush.msra.mxu0 %v322
    %885 = vmatpush.msra.mxu0 %v318
    %886 = vmatpush.msra.mxu0 %v314
    %887 = vmatpush.msra.mxu0 %v310
    %888 = vmatpush.msra.mxu0 %v306
    %889 = vmatpush.msra.mxu0 %v302
    %890 = vmatpush.msra.mxu0 %v298
    %891 = vmatpush.msra.mxu0 %v294
    %892 = vmatpush.msra.mxu0 %v290
    %893 = vmatmul.f32.gmra.mxu0 %v653
    %v894 = vpop.f32.mrf.mxu0
    %v895 = vadd.f32 0.0, %v894
    %896 = vdwg.mxu0
    %897 = vmatpush.msra.mxu0 %v351
    %898 = vmatpush.msra.mxu0 %v347
    %899 = vmatpush.msra.mxu0 %v343
    %900 = vmatpush.msra.mxu0 %v339
    %901 = vmatpush.msra.mxu0 %v335
    %902 = vmatpush.msra.mxu0 %v331
    %903 = vmatpush.msra.mxu0 %v327
    %904 = vmatpush.msra.mxu0 %v323
    %905 = vmatpush.msra.mxu0 %v319
    %906 = vmatpush.msra.mxu0 %v315
    %907 = vmatpush.msra.mxu0 %v311
    %908 = vmatpush.msra.mxu0 %v307
    %909 = vmatpush.msra.mxu0 %v303
    %910 = vmatpush.msra.mxu0 %v299
    %911 = vmatpush.msra.mxu0 %v295
    %912 = vmatpush.msra.mxu0 %v291
    %913 = vmatmul.f32.gmra.mxu0 %v653
    %v914 = vpop.f32.mrf.mxu0
    %v915 = vadd.f32 0.0, %v914
    %916 = vdwg.mxu0
    %917 = vmatpush.msra.mxu0 %v352
    %918 = vmatpush.msra.mxu0 %v348
    %919 = vmatpush.msra.mxu0 %v344
    %920 = vmatpush.msra.mxu0 %v340
    %921 = vmatpush.msra.mxu0 %v336
    %922 = vmatpush.msra.mxu0 %v332
    %923 = vmatpush.msra.mxu0 %v328
    %924 = vmatpush.msra.mxu0 %v324
    %925 = vmatpush.msra.mxu0 %v320
    %926 = vmatpush.msra.mxu0 %v316
    %927 = vmatpush.msra.mxu0 %v312
    %928 = vmatpush.msra.mxu0 %v308
    %929 = vmatpush.msra.mxu0 %v304
    %930 = vmatpush.msra.mxu0 %v300
    %931 = vmatpush.msra.mxu0 %v296
    %932 = vmatpush.msra.mxu0 %v292
    %933 = vmatmul.f32.gmra.mxu0 %v653
    %v934 = vpop.f32.mrf.mxu0
    %v935 = vadd.f32 0.0, %v934
    %936 = vdwg.mxu0
    %937 = vmatpush.msra.mxu0 %v353
    %938 = vmatpush.msra.mxu0 %v349
    %939 = vmatpush.msra.mxu0 %v345
    %940 = vmatpush.msra.mxu0 %v341
    %941 = vmatpush.msra.mxu0 %v337
    %942 = vmatpush.msra.mxu0 %v333
    %943 = vmatpush.msra.mxu0 %v329
    %944 = vmatpush.msra.mxu0 %v325
    %945 = vmatpush.msra.mxu0 %v321
    %946 = vmatpush.msra.mxu0 %v317
    %947 = vmatpush.msra.mxu0 %v313
    %948 = vmatpush.msra.mxu0 %v309
    %949 = vmatpush.msra.mxu0 %v305
    %950 = vmatpush.msra.mxu0 %v301
    %951 = vmatpush.msra.mxu0 %v297
    %952 = vmatpush.msra.mxu0 %v293
    %953 = vmatmul.f32.gmra.mxu0 %v653
    %v954 = vpop.f32.mrf.mxu0
    %v955 = vadd.f32 0.0, %v954
    %956 = vdwg.mxu0
    %v961 = vrot.slane %v915, 6
    %v962 = vrot.slane %v935, 4
    %v963 = vrot.slane %v955, 2
    %v964 = vsel %vm247, %v895, %v961
    %v965 = vsel %vm249, %v962, %v963
    %v966 = vsel %vm251, %v964, %v965
    %v968 = vadd.f32 %v258, %v966
    %v969 = vxor.u32 %v968, 2147483648
    %v970 = vmul.f32 %v969, 1.442695
    %v971 = vpow.pop %v970
    %v972 = vadd.f32 %v971, 1.0
    %v973 = vrcp.pop %v972
    %v974 = vmul.f32 %v972, %v973
    %v975 = vsub.f32 1.0, %v974
    %v976 = vmul.f32 %v973, %v975
    %v977 = vadd.f32 %v973, %v976
    %vm978 = vweird.f32 %v972
    %vm979 = vweird.f32 %v973
    %vm980 = vmor %vm978, %vm979
    %v981 = vsel %vm980, %v973, %v977
    %v982 = vand.u32 2147483647, %v972
    %vm983 = vcmp.eq.f32.partialorder %v982, 8.507059e+37
    %v984 = vand.u32 %v972, 2147483648
    %v985 = vor.u32 1.1754944e-38, %v984
    %v986 = vsel %vm983, %v985, %v981
    %v987 = vmul.f32 1.0, %v986
    %v989 = vrot.slane %v968, 2
    %v991 = vxor.u32 %v989, 2147483648
    %v992 = vmul.f32 %v991, 1.442695
    %v993 = vpow.pop %v992
    %v994 = vadd.f32 %v993, 1.0
    %v995 = vrcp.pop %v994
    %v996 = vmul.f32 %v994, %v995
    %v997 = vsub.f32 1.0, %v996
    %v998 = vmul.f32 %v995, %v997
    %v999 = vadd.f32 %v995, %v998
    %vm1000 = vweird.f32 %v994
    %vm1001 = vweird.f32 %v995
    %vm1002 = vmor %vm1000, %vm1001
    %v1003 = vsel %vm1002, %v995, %v999
    %v1004 = vand.u32 2147483647, %v994
    %vm1005 = vcmp.eq.f32.partialorder %v1004, 8.507059e+37
    %v1006 = vand.u32 %v994, 2147483648
    %v1007 = vor.u32 1.1754944e-38, %v1006
    %v1008 = vsel %vm1005, %v1007, %v1003
    %v1009 = vmul.f32 1.0, %v1008
    %v1010 = vrot.slane %v968, 4
    %v1012 = vtanh.pop %v1010
    %v1013 = vrot.slane %v968, 6
    %v1015 = vxor.u32 %v1013, 2147483648
    %v1016 = vmul.f32 %v1015, 1.442695
    %v1017 = vpow.pop %v1016
    %v1018 = vadd.f32 %v1017, 1.0
    %v1019 = vrcp.pop %v1018
    %v1020 = vmul.f32 %v1018, %v1019
    %v1021 = vsub.f32 1.0, %v1020
    %v1022 = vmul.f32 %v1019, %v1021
    %v1023 = vadd.f32 %v1019, %v1022
    %vm1024 = vweird.f32 %v1018
    %vm1025 = vweird.f32 %v1019
    %vm1026 = vmor %vm1024, %vm1025
    %v1027 = vsel %vm1026, %v1019, %v1023
    %v1028 = vand.u32 2147483647, %v1018
    %vm1029 = vcmp.eq.f32.partialorder %v1028, 8.507059e+37
    %v1030 = vand.u32 %v1018, 2147483648
    %v1031 = vor.u32 1.1754944e-38, %v1030
    %v1032 = vsel %vm1029, %v1031, %v1027
    %v1033 = vmul.f32 1.0, %v1032
    %v1034 = vmul.f32 %v1009, %v651
    %v1035 = vmul.f32 %v987, %v1012
    %v1036 = vadd.f32 %v1034, %v1035
    %v1037 = vtanh.pop %v1036
    %v1038 = vmul.f32 %v1033, %v1037
    %1039 = vmatpush.msra.mxu0 %v414
    %1040 = vmatpush.msra.mxu0 %v410
    %1041 = vmatpush.msra.mxu0 %v406
    %1042 = vmatpush.msra.mxu0 %v402
    %1043 = vmatpush.msra.mxu0 %v398
    %1044 = vmatpush.msra.mxu0 %v394
    %1045 = vmatpush.msra.mxu0 %v390
    %1046 = vmatpush.msra.mxu0 %v386
    %1047 = vmatpush.msra.mxu0 %v382
    %1048 = vmatpush.msra.mxu0 %v378
    %1049 = vmatpush.msra.mxu0 %v374
    %1050 = vmatpush.msra.mxu0 %v370
    %1051 = vmatpush.msra.mxu0 %v366
    %1052 = vmatpush.msra.mxu0 %v362
    %1053 = vmatpush.msra.mxu0 %v358
    %1054 = vmatpush.msra.mxu0 %v354
    %1055 = vmatmul.f32.gmra.mxu0 %v1038
    %v1056 = vpop.f32.mrf.mxu0
    %v1057 = vadd.f32 %v484, %v1056
    %1058 = vdwg.mxu0
    %1059 = vmatpush.msra.mxu0 %v478
    %1060 = vmatpush.msra.mxu0 %v474
    %1061 = vmatpush.msra.mxu0 %v470
    %1062 = vmatpush.msra.mxu0 %v466
    %1063 = vmatpush.msra.mxu0 %v462
    %1064 = vmatpush.msra.mxu0 %v458
    %1065 = vmatpush.msra.mxu0 %v454
    %1066 = vmatpush.msra.mxu0 %v450
    %1067 = vmatpush.msra.mxu0 %v446
    %1068 = vmatpush.msra.mxu0 %v442
    %1069 = vmatpush.msra.mxu0 %v438
    %1070 = vmatpush.msra.mxu0 %v434
    %1071 = vmatpush.msra.mxu0 %v430
    %1072 = vmatpush.msra.mxu0 %v426
    %1073 = vmatpush.msra.mxu0 %v422
    %1074 = vmatpush.msra.mxu0 %v418
    %1075 = vmatmul.f32.gmra.mxu0 %v876
    %v1076 = vpop.f32.mrf.mxu0
    %v1077 = vadd.f32 %v1057, %v1076
    %1078 = vdwg.mxu0
    %1079 = vmatpush.msra.mxu0 %v415
    %1080 = vmatpush.msra.mxu0 %v411
    %1081 = vmatpush.msra.mxu0 %v407
    %1082 = vmatpush.msra.mxu0 %v403
    %1083 = vmatpush.msra.mxu0 %v399
    %1084 = vmatpush.msra.mxu0 %v395
    %1085 = vmatpush.msra.mxu0 %v391
    %1086 = vmatpush.msra.mxu0 %v387
    %1087 = vmatpush.msra.mxu0 %v383
    %1088 = vmatpush.msra.mxu0 %v379
    %1089 = vmatpush.msra.mxu0 %v375
    %1090 = vmatpush.msra.mxu0 %v371
    %1091 = vmatpush.msra.mxu0 %v367
    %1092 = vmatpush.msra.mxu0 %v363
    %1093 = vmatpush.msra.mxu0 %v359
    %1094 = vmatpush.msra.mxu0 %v355
    %1095 = vmatmul.f32.gmra.mxu0 %v1038
    %v1096 = vpop.f32.mrf.mxu0
    %v1097 = vadd.f32 %v485, %v1096
    %1098 = vdwg.mxu0
    %1099 = vmatpush.msra.mxu0 %v479
    %1100 = vmatpush.msra.mxu0 %v475
    %1101 = vmatpush.msra.mxu0 %v471
    %1102 = vmatpush.msra.mxu0 %v467
    %1103 = vmatpush.msra.mxu0 %v463
    %1104 = vmatpush.msra.mxu0 %v459
    %1105 = vmatpush.msra.mxu0 %v455
    %1106 = vmatpush.msra.mxu0 %v451
    %1107 = vmatpush.msra.mxu0 %v447
    %1108 = vmatpush.msra.mxu0 %v443
    %1109 = vmatpush.msra.mxu0 %v439
    %1110 = vmatpush.msra.mxu0 %v435
    %1111 = vmatpush.msra.mxu0 %v431
    %1112 = vmatpush.msra.mxu0 %v427
    %1113 = vmatpush.msra.mxu0 %v423
    %1114 = vmatpush.msra.mxu0 %v419
    %1115 = vmatmul.f32.gmra.mxu0 %v876
    %v1116 = vpop.f32.mrf.mxu0
    %v1117 = vadd.f32 %v1097, %v1116
    %1118 = vdwg.mxu0
    %1119 = vmatpush.msra.mxu0 %v416
    %1120 = vmatpush.msra.mxu0 %v412
    %1121 = vmatpush.msra.mxu0 %v408
    %1122 = vmatpush.msra.mxu0 %v404
    %1123 = vmatpush.msra.mxu0 %v400
    %1124 = vmatpush.msra.mxu0 %v396
    %1125 = vmatpush.msra.mxu0 %v392
    %1126 = vmatpush.msra.mxu0 %v388
    %1127 = vmatpush.msra.mxu0 %v384
    %1128 = vmatpush.msra.mxu0 %v380
    %1129 = vmatpush.msra.mxu0 %v376
    %1130 = vmatpush.msra.mxu0 %v372
    %1131 = vmatpush.msra.mxu0 %v368
    %1132 = vmatpush.msra.mxu0 %v364
    %1133 = vmatpush.msra.mxu0 %v360
    %1134 = vmatpush.msra.mxu0 %v356
    %1135 = vmatmul.f32.gmra.mxu0 %v1038
    %v1136 = vpop.f32.mrf.mxu0
    %v1137 = vadd.f32 %v486, %v1136
    %1138 = vdwg.mxu0
    %1139 = vmatpush.msra.mxu0 %v480
    %1140 = vmatpush.msra.mxu0 %v476
    %1141 = vmatpush.msra.mxu0 %v472
    %1142 = vmatpush.msra.mxu0 %v468
    %1143 = vmatpush.msra.mxu0 %v464
    %1144 = vmatpush.msra.mxu0 %v460
    %1145 = vmatpush.msra.mxu0 %v456
    %1146 = vmatpush.msra.mxu0 %v452
    %1147 = vmatpush.msra.mxu0 %v448
    %1148 = vmatpush.msra.mxu0 %v444
    %1149 = vmatpush.msra.mxu0 %v440
    %1150 = vmatpush.msra.mxu0 %v436
    %1151 = vmatpush.msra.mxu0 %v432
    %1152 = vmatpush.msra.mxu0 %v428
    %1153 = vmatpush.msra.mxu0 %v424
    %1154 = vmatpush.msra.mxu0 %v420
    %1155 = vmatmul.f32.gmra.mxu0 %v876
    %v1156 = vpop.f32.mrf.mxu0
    %v1157 = vadd.f32 %v1137, %v1156
    %1158 = vdwg.mxu0
    %1159 = vmatpush.msra.mxu0 %v417
    %1160 = vmatpush.msra.mxu0 %v413
    %1161 = vmatpush.msra.mxu0 %v409
    %1162 = vmatpush.msra.mxu0 %v405
    %1163 = vmatpush.msra.mxu0 %v401
    %1164 = vmatpush.msra.mxu0 %v397
    %1165 = vmatpush.msra.mxu0 %v393
    %1166 = vmatpush.msra.mxu0 %v389
    %1167 = vmatpush.msra.mxu0 %v385
    %1168 = vmatpush.msra.mxu0 %v381
    %1169 = vmatpush.msra.mxu0 %v377
    %1170 = vmatpush.msra.mxu0 %v373
    %1171 = vmatpush.msra.mxu0 %v369
    %1172 = vmatpush.msra.mxu0 %v365
    %1173 = vmatpush.msra.mxu0 %v361
    %1174 = vmatpush.msra.mxu0 %v357
    %1175 = vmatmul.f32.gmra.mxu0 %v1038
    %v1176 = vpop.f32.mrf.mxu0
    %v1177 = vadd.f32 %v487, %v1176
    %1178 = vdwg.mxu0
    %1179 = vmatpush.msra.mxu0 %v481
    %1180 = vmatpush.msra.mxu0 %v477
    %1181 = vmatpush.msra.mxu0 %v473
    %1182 = vmatpush.msra.mxu0 %v469
    %1183 = vmatpush.msra.mxu0 %v465
    %1184 = vmatpush.msra.mxu0 %v461
    %1185 = vmatpush.msra.mxu0 %v457
    %1186 = vmatpush.msra.mxu0 %v453
    %1187 = vmatpush.msra.mxu0 %v449
    %1188 = vmatpush.msra.mxu0 %v445
    %1189 = vmatpush.msra.mxu0 %v441
    %1190 = vmatpush.msra.mxu0 %v437
    %1191 = vmatpush.msra.mxu0 %v433
    %1192 = vmatpush.msra.mxu0 %v429
    %1193 = vmatpush.msra.mxu0 %v425
    %1194 = vmatpush.msra.mxu0 %v421
    %1195 = vmatmul.f32.gmra.mxu0 %v876
    %v1196 = vpop.f32.mrf.mxu0
    %v1197 = vadd.f32 %v1177, %v1196
    %1198 = vdwg.mxu0
    %v1199 = vxor.u32 %v1077, 2147483648
    %v1200 = vmul.f32 %v1199, 1.442695
    %v1201 = vpow.pop %v1200
    %v1202 = vadd.f32 %v1201, 1.0
    %v1203 = vrcp.pop %v1202
    %v1204 = vmul.f32 %v1202, %v1203
    %v1205 = vsub.f32 1.0, %v1204
    %v1206 = vmul.f32 %v1203, %v1205
    %v1207 = vadd.f32 %v1203, %v1206
    %vm1208 = vweird.f32 %v1202
    %vm1209 = vweird.f32 %v1203
    %vm1210 = vmor %vm1208, %vm1209
    %v1211 = vsel %vm1210, %v1203, %v1207
    %v1212 = vand.u32 2147483647, %v1202
    %vm1213 = vcmp.eq.f32.partialorder %v1212, 8.507059e+37
    %v1214 = vand.u32 %v1202, 2147483648
    %v1215 = vor.u32 1.1754944e-38, %v1214
    %v1216 = vsel %vm1213, %v1215, %v1211
    %v1217 = vmul.f32 1.0, %v1216
    %v1218 = vxor.u32 %v1117, 2147483648
    %v1219 = vmul.f32 %v1218, 1.442695
    %v1220 = vpow.pop %v1219
    %v1221 = vadd.f32 %v1220, 1.0
    %v1222 = vrcp.pop %v1221
    %v1223 = vmul.f32 %v1221, %v1222
    %v1224 = vsub.f32 1.0, %v1223
    %v1225 = vmul.f32 %v1222, %v1224
    %v1226 = vadd.f32 %v1222, %v1225
    %vm1227 = vweird.f32 %v1221
    %vm1228 = vweird.f32 %v1222
    %vm1229 = vmor %vm1227, %vm1228
    %v1230 = vsel %vm1229, %v1222, %v1226
    %v1231 = vand.u32 2147483647, %v1221
    %vm1232 = vcmp.eq.f32.partialorder %v1231, 8.507059e+37
    %v1233 = vand.u32 %v1221, 2147483648
    %v1234 = vor.u32 1.1754944e-38, %v1233
    %v1235 = vsel %vm1232, %v1234, %v1230
    %v1236 = vmul.f32 1.0, %v1235
    %v1237 = vtanh.pop %v1157
    %v1238 = vxor.u32 %v1197, 2147483648
    %v1239 = vmul.f32 %v1238, 1.442695
    %v1240 = vpow.pop %v1239
    %v1241 = vadd.f32 %v1240, 1.0
    %v1242 = vrcp.pop %v1241
    %v1243 = vmul.f32 %v1241, %v1242
    %v1244 = vsub.f32 1.0, %v1243
    %v1245 = vmul.f32 %v1242, %v1244
    %v1246 = vadd.f32 %v1242, %v1245
    %vm1247 = vweird.f32 %v1241
    %vm1248 = vweird.f32 %v1242
    %vm1249 = vmor %vm1247, %vm1248
    %v1250 = vsel %vm1249, %v1242, %v1246
    %v1251 = vand.u32 2147483647, %v1241
    %vm1252 = vcmp.eq.f32.partialorder %v1251, 8.507059e+37
    %v1253 = vand.u32 %v1241, 2147483648
    %v1254 = vor.u32 1.1754944e-38, %v1253
    %v1255 = vsel %vm1252, %v1254, %v1250
    %v1256 = vmul.f32 1.0, %v1255
    %v1257 = vmul.f32 %v1236, %v874
    %v1258 = vmul.f32 %v1217, %v1237
    %v1259 = vadd.f32 %v1257, %v1258
    %v1260 = vtanh.pop %v1259
    %v1261 = vmul.f32 %v1256, %v1260
    %1262 = vmatpush.msra.mxu0 %v350
    %1263 = vmatpush.msra.mxu0 %v346
    %1264 = vmatpush.msra.mxu0 %v342
    %1265 = vmatpush.msra.mxu0 %v338
    %1266 = vmatpush.msra.mxu0 %v334
    %1267 = vmatpush.msra.mxu0 %v330
    %1268 = vmatpush.msra.mxu0 %v326
    %1269 = vmatpush.msra.mxu0 %v322
    %1270 = vmatpush.msra.mxu0 %v318
    %1271 = vmatpush.msra.mxu0 %v314
    %1272 = vmatpush.msra.mxu0 %v310
    %1273 = vmatpush.msra.mxu0 %v306
    %1274 = vmatpush.msra.mxu0 %v302
    %1275 = vmatpush.msra.mxu0 %v298
    %1276 = vmatpush.msra.mxu0 %v294
    %1277 = vmatpush.msra.mxu0 %v290
    %1278 = vmatmul.f32.gmra.mxu0 %v1038
    %v1279 = vpop.f32.mrf.mxu0
    %v1280 = vadd.f32 0.0, %v1279
    %1281 = vdwg.mxu0
    %1282 = vmatpush.msra.mxu0 %v351
    %1283 = vmatpush.msra.mxu0 %v347
    %1284 = vmatpush.msra.mxu0 %v343
    %1285 = vmatpush.msra.mxu0 %v339
    %1286 = vmatpush.msra.mxu0 %v335
    %1287 = vmatpush.msra.mxu0 %v331
    %1288 = vmatpush.msra.mxu0 %v327
    %1289 = vmatpush.msra.mxu0 %v323
    %1290 = vmatpush.msra.mxu0 %v319
    %1291 = vmatpush.msra.mxu0 %v315
    %1292 = vmatpush.msra.mxu0 %v311
    %1293 = vmatpush.msra.mxu0 %v307
    %1294 = vmatpush.msra.mxu0 %v303
    %1295 = vmatpush.msra.mxu0 %v299
    %1296 = vmatpush.msra.mxu0 %v295
    %1297 = vmatpush.msra.mxu0 %v291
    %1298 = vmatmul.f32.gmra.mxu0 %v1038
    %v1299 = vpop.f32.mrf.mxu0
    %v1300 = vadd.f32 0.0, %v1299
    %1301 = vdwg.mxu0
    %1302 = vmatpush.msra.mxu0 %v352
    %1303 = vmatpush.msra.mxu0 %v348
    %1304 = vmatpush.msra.mxu0 %v344
    %1305 = vmatpush.msra.mxu0 %v340
    %1306 = vmatpush.msra.mxu0 %v336
    %1307 = vmatpush.msra.mxu0 %v332
    %1308 = vmatpush.msra.mxu0 %v328
    %1309 = vmatpush.msra.mxu0 %v324
    %1310 = vmatpush.msra.mxu0 %v320
    %1311 = vmatpush.msra.mxu0 %v316
    %1312 = vmatpush.msra.mxu0 %v312
    %1313 = vmatpush.msra.mxu0 %v308
    %1314 = vmatpush.msra.mxu0 %v304
    %1315 = vmatpush.msra.mxu0 %v300
    %1316 = vmatpush.msra.mxu0 %v296
    %1317 = vmatpush.msra.mxu0 %v292
    %1318 = vmatmul.f32.gmra.mxu0 %v1038
    %v1319 = vpop.f32.mrf.mxu0
    %v1320 = vadd.f32 0.0, %v1319
    %1321 = vdwg.mxu0
    %1322 = vmatpush.msra.mxu0 %v353
    %1323 = vmatpush.msra.mxu0 %v349
    %1324 = vmatpush.msra.mxu0 %v345
    %1325 = vmatpush.msra.mxu0 %v341
    %1326 = vmatpush.msra.mxu0 %v337
    %1327 = vmatpush.msra.mxu0 %v333
    %1328 = vmatpush.msra.mxu0 %v329
    %1329 = vmatpush.msra.mxu0 %v325
    %1330 = vmatpush.msra.mxu0 %v321
    %1331 = vmatpush.msra.mxu0 %v317
    %1332 = vmatpush.msra.mxu0 %v313
    %1333 = vmatpush.msra.mxu0 %v309
    %1334 = vmatpush.msra.mxu0 %v305
    %1335 = vmatpush.msra.mxu0 %v301
    %1336 = vmatpush.msra.mxu0 %v297
    %1337 = vmatpush.msra.mxu0 %v293
    %1338 = vmatmul.f32.gmra.mxu0 %v1038
    %v1339 = vpop.f32.mrf.mxu0
    %v1340 = vadd.f32 0.0, %v1339
    %1341 = vdwg.mxu0
    %v1346 = vrot.slane %v1300, 6
    %v1347 = vrot.slane %v1320, 4
    %v1348 = vrot.slane %v1340, 2
    %v1349 = vsel %vm247, %v1280, %v1346
    %v1350 = vsel %vm249, %v1347, %v1348
    %v1351 = vsel %vm251, %v1349, %v1350
    %v1353 = vadd.f32 %v262, %v1351
    %v1354 = vxor.u32 %v1353, 2147483648
    %v1355 = vmul.f32 %v1354, 1.442695
    %v1356 = vpow.pop %v1355
    %v1357 = vadd.f32 %v1356, 1.0
    %v1358 = vrcp.pop %v1357
    %v1359 = vmul.f32 %v1357, %v1358
    %v1360 = vsub.f32 1.0, %v1359
    %v1361 = vmul.f32 %v1358, %v1360
    %v1362 = vadd.f32 %v1358, %v1361
    %vm1363 = vweird.f32 %v1357
    %vm1364 = vweird.f32 %v1358
    %vm1365 = vmor %vm1363, %vm1364
    %v1366 = vsel %vm1365, %v1358, %v1362
    %v1367 = vand.u32 2147483647, %v1357
    %vm1368 = vcmp.eq.f32.partialorder %v1367, 8.507059e+37
    %v1369 = vand.u32 %v1357, 2147483648
    %v1370 = vor.u32 1.1754944e-38, %v1369
    %v1371 = vsel %vm1368, %v1370, %v1366
    %v1372 = vmul.f32 1.0, %v1371
    %v1374 = vrot.slane %v1353, 2
    %v1376 = vxor.u32 %v1374, 2147483648
    %v1377 = vmul.f32 %v1376, 1.442695
    %v1378 = vpow.pop %v1377
    %v1379 = vadd.f32 %v1378, 1.0
    %v1380 = vrcp.pop %v1379
    %v1381 = vmul.f32 %v1379, %v1380
    %v1382 = vsub.f32 1.0, %v1381
    %v1383 = vmul.f32 %v1380, %v1382
    %v1384 = vadd.f32 %v1380, %v1383
    %vm1385 = vweird.f32 %v1379
    %vm1386 = vweird.f32 %v1380
    %vm1387 = vmor %vm1385, %vm1386
    %v1388 = vsel %vm1387, %v1380, %v1384
    %v1389 = vand.u32 2147483647, %v1379
    %vm1390 = vcmp.eq.f32.partialorder %v1389, 8.507059e+37
    %v1391 = vand.u32 %v1379, 2147483648
    %v1392 = vor.u32 1.1754944e-38, %v1391
    %v1393 = vsel %vm1390, %v1392, %v1388
    %v1394 = vmul.f32 1.0, %v1393
    %v1395 = vrot.slane %v1353, 4
    %v1397 = vtanh.pop %v1395
    %v1398 = vrot.slane %v1353, 6
    %v1400 = vxor.u32 %v1398, 2147483648
    %v1401 = vmul.f32 %v1400, 1.442695
    %v1402 = vpow.pop %v1401
    %v1403 = vadd.f32 %v1402, 1.0
    %v1404 = vrcp.pop %v1403
    %v1405 = vmul.f32 %v1403, %v1404
    %v1406 = vsub.f32 1.0, %v1405
    %v1407 = vmul.f32 %v1404, %v1406
    %v1408 = vadd.f32 %v1404, %v1407
    %vm1409 = vweird.f32 %v1403
    %vm1410 = vweird.f32 %v1404
    %vm1411 = vmor %vm1409, %vm1410
    %v1412 = vsel %vm1411, %v1404, %v1408
    %v1413 = vand.u32 2147483647, %v1403
    %vm1414 = vcmp.eq.f32.partialorder %v1413, 8.507059e+37
    %v1415 = vand.u32 %v1403, 2147483648
    %v1416 = vor.u32 1.1754944e-38, %v1415
    %v1417 = vsel %vm1414, %v1416, %v1412
    %v1418 = vmul.f32 1.0, %v1417
    %v1419 = vmul.f32 %v1394, %v1036
    %v1420 = vmul.f32 %v1372, %v1397
    %v1421 = vadd.f32 %v1419, %v1420
    %v1422 = vtanh.pop %v1421
    %v1423 = vmul.f32 %v1418, %v1422
    %1424 = vmatpush.msra.mxu0 %v414
    %1425 = vmatpush.msra.mxu0 %v410
    %1426 = vmatpush.msra.mxu0 %v406
    %1427 = vmatpush.msra.mxu0 %v402
    %1428 = vmatpush.msra.mxu0 %v398
    %1429 = vmatpush.msra.mxu0 %v394
    %1430 = vmatpush.msra.mxu0 %v390
    %1431 = vmatpush.msra.mxu0 %v386
    %1432 = vmatpush.msra.mxu0 %v382
    %1433 = vmatpush.msra.mxu0 %v378
    %1434 = vmatpush.msra.mxu0 %v374
    %1435 = vmatpush.msra.mxu0 %v370
    %1436 = vmatpush.msra.mxu0 %v366
    %1437 = vmatpush.msra.mxu0 %v362
    %1438 = vmatpush.msra.mxu0 %v358
    %1439 = vmatpush.msra.mxu0 %v354
    %1440 = vmatmul.f32.gmra.mxu0 %v1423
    %v1441 = vpop.f32.mrf.mxu0
    %v1442 = vadd.f32 %v484, %v1441
    %1443 = vdwg.mxu0
    %1444 = vmatpush.msra.mxu0 %v478
    %1445 = vmatpush.msra.mxu0 %v474
    %1446 = vmatpush.msra.mxu0 %v470
    %1447 = vmatpush.msra.mxu0 %v466
    %1448 = vmatpush.msra.mxu0 %v462
    %1449 = vmatpush.msra.mxu0 %v458
    %1450 = vmatpush.msra.mxu0 %v454
    %1451 = vmatpush.msra.mxu0 %v450
    %1452 = vmatpush.msra.mxu0 %v446
    %1453 = vmatpush.msra.mxu0 %v442
    %1454 = vmatpush.msra.mxu0 %v438
    %1455 = vmatpush.msra.mxu0 %v434
    %1456 = vmatpush.msra.mxu0 %v430
    %1457 = vmatpush.msra.mxu0 %v426
    %1458 = vmatpush.msra.mxu0 %v422
    %1459 = vmatpush.msra.mxu0 %v418
    %1460 = vmatmul.f32.gmra.mxu0 %v1261
    %v1461 = vpop.f32.mrf.mxu0
    %v1462 = vadd.f32 %v1442, %v1461
    %1463 = vdwg.mxu0
    %1464 = vmatpush.msra.mxu0 %v415
    %1465 = vmatpush.msra.mxu0 %v411
    %1466 = vmatpush.msra.mxu0 %v407
    %1467 = vmatpush.msra.mxu0 %v403
    %1468 = vmatpush.msra.mxu0 %v399
    %1469 = vmatpush.msra.mxu0 %v395
    %1470 = vmatpush.msra.mxu0 %v391
    %1471 = vmatpush.msra.mxu0 %v387
    %1472 = vmatpush.msra.mxu0 %v383
    %1473 = vmatpush.msra.mxu0 %v379
    %1474 = vmatpush.msra.mxu0 %v375
    %1475 = vmatpush.msra.mxu0 %v371
    %1476 = vmatpush.msra.mxu0 %v367
    %1477 = vmatpush.msra.mxu0 %v363
    %1478 = vmatpush.msra.mxu0 %v359
    %1479 = vmatpush.msra.mxu0 %v355
    %1480 = vmatmul.f32.gmra.mxu0 %v1423
    %v1481 = vpop.f32.mrf.mxu0
    %v1482 = vadd.f32 %v485, %v1481
    %1483 = vdwg.mxu0
    %1484 = vmatpush.msra.mxu0 %v479
    %1485 = vmatpush.msra.mxu0 %v475
    %1486 = vmatpush.msra.mxu0 %v471
    %1487 = vmatpush.msra.mxu0 %v467
    %1488 = vmatpush.msra.mxu0 %v463
    %1489 = vmatpush.msra.mxu0 %v459
    %1490 = vmatpush.msra.mxu0 %v455
    %1491 = vmatpush.msra.mxu0 %v451
    %1492 = vmatpush.msra.mxu0 %v447
    %1493 = vmatpush.msra.mxu0 %v443
    %1494 = vmatpush.msra.mxu0 %v439
    %1495 = vmatpush.msra.mxu0 %v435
    %1496 = vmatpush.msra.mxu0 %v431
    %1497 = vmatpush.msra.mxu0 %v427
    %1498 = vmatpush.msra.mxu0 %v423
    %1499 = vmatpush.msra.mxu0 %v419
    %1500 = vmatmul.f32.gmra.mxu0 %v1261
    %v1501 = vpop.f32.mrf.mxu0
    %v1502 = vadd.f32 %v1482, %v1501
    %1503 = vdwg.mxu0
    %1504 = vmatpush.msra.mxu0 %v416
    %1505 = vmatpush.msra.mxu0 %v412
    %1506 = vmatpush.msra.mxu0 %v408
    %1507 = vmatpush.msra.mxu0 %v404
    %1508 = vmatpush.msra.mxu0 %v400
    %1509 = vmatpush.msra.mxu0 %v396
    %1510 = vmatpush.msra.mxu0 %v392
    %1511 = vmatpush.msra.mxu0 %v388
    %1512 = vmatpush.msra.mxu0 %v384
    %1513 = vmatpush.msra.mxu0 %v380
    %1514 = vmatpush.msra.mxu0 %v376
    %1515 = vmatpush.msra.mxu0 %v372
    %1516 = vmatpush.msra.mxu0 %v368
    %1517 = vmatpush.msra.mxu0 %v364
    %1518 = vmatpush.msra.mxu0 %v360
    %1519 = vmatpush.msra.mxu0 %v356
    %1520 = vmatmul.f32.gmra.mxu0 %v1423
    %v1521 = vpop.f32.mrf.mxu0
    %v1522 = vadd.f32 %v486, %v1521
    %1523 = vdwg.mxu0
    %1524 = vmatpush.msra.mxu0 %v480
    %1525 = vmatpush.msra.mxu0 %v476
    %1526 = vmatpush.msra.mxu0 %v472
    %1527 = vmatpush.msra.mxu0 %v468
    %1528 = vmatpush.msra.mxu0 %v464
    %1529 = vmatpush.msra.mxu0 %v460
    %1530 = vmatpush.msra.mxu0 %v456
    %1531 = vmatpush.msra.mxu0 %v452
    %1532 = vmatpush.msra.mxu0 %v448
    %1533 = vmatpush.msra.mxu0 %v444
    %1534 = vmatpush.msra.mxu0 %v440
    %1535 = vmatpush.msra.mxu0 %v436
    %1536 = vmatpush.msra.mxu0 %v432
    %1537 = vmatpush.msra.mxu0 %v428
    %1538 = vmatpush.msra.mxu0 %v424
    %1539 = vmatpush.msra.mxu0 %v420
    %1540 = vmatmul.f32.gmra.mxu0 %v1261
    %v1541 = vpop.f32.mrf.mxu0
    %v1542 = vadd.f32 %v1522, %v1541
    %1543 = vdwg.mxu0
    %1544 = vmatpush.msra.mxu0 %v417
    %1545 = vmatpush.msra.mxu0 %v413
    %1546 = vmatpush.msra.mxu0 %v409
    %1547 = vmatpush.msra.mxu0 %v405
    %1548 = vmatpush.msra.mxu0 %v401
    %1549 = vmatpush.msra.mxu0 %v397
    %1550 = vmatpush.msra.mxu0 %v393
    %1551 = vmatpush.msra.mxu0 %v389
    %1552 = vmatpush.msra.mxu0 %v385
    %1553 = vmatpush.msra.mxu0 %v381
    %1554 = vmatpush.msra.mxu0 %v377
    %1555 = vmatpush.msra.mxu0 %v373
    %1556 = vmatpush.msra.mxu0 %v369
    %1557 = vmatpush.msra.mxu0 %v365
    %1558 = vmatpush.msra.mxu0 %v361
    %1559 = vmatpush.msra.mxu0 %v357
    %1560 = vmatmul.f32.gmra.mxu0 %v1423
    %v1561 = vpop.f32.mrf.mxu0
    %v1562 = vadd.f32 %v487, %v1561
    %1563 = vdwg.mxu0
    %1564 = vmatpush.msra.mxu0 %v481
    %1565 = vmatpush.msra.mxu0 %v477
    %1566 = vmatpush.msra.mxu0 %v473
    %1567 = vmatpush.msra.mxu0 %v469
    %1568 = vmatpush.msra.mxu0 %v465
    %1569 = vmatpush.msra.mxu0 %v461
    %1570 = vmatpush.msra.mxu0 %v457
    %1571 = vmatpush.msra.mxu0 %v453
    %1572 = vmatpush.msra.mxu0 %v449
    %1573 = vmatpush.msra.mxu0 %v445
    %1574 = vmatpush.msra.mxu0 %v441
    %1575 = vmatpush.msra.mxu0 %v437
    %1576 = vmatpush.msra.mxu0 %v433
    %1577 = vmatpush.msra.mxu0 %v429
    %1578 = vmatpush.msra.mxu0 %v425
    %1579 = vmatpush.msra.mxu0 %v421
    %1580 = vmatmul.f32.gmra.mxu0 %v1261
    %v1581 = vpop.f32.mrf.mxu0
    %v1582 = vadd.f32 %v1562, %v1581
    %1583 = vdwg.mxu0
    %v1584 = vxor.u32 %v1462, 2147483648
    %v1585 = vmul.f32 %v1584, 1.442695
    %v1586 = vpow.pop %v1585
    %v1587 = vadd.f32 %v1586, 1.0
    %v1588 = vrcp.pop %v1587
    %v1589 = vmul.f32 %v1587, %v1588
    %v1590 = vsub.f32 1.0, %v1589
    %v1591 = vmul.f32 %v1588, %v1590
    %v1592 = vadd.f32 %v1588, %v1591
    %vm1593 = vweird.f32 %v1587
    %vm1594 = vweird.f32 %v1588
    %vm1595 = vmor %vm1593, %vm1594
    %v1596 = vsel %vm1595, %v1588, %v1592
    %v1597 = vand.u32 2147483647, %v1587
    %vm1598 = vcmp.eq.f32.partialorder %v1597, 8.507059e+37
    %v1599 = vand.u32 %v1587, 2147483648
    %v1600 = vor.u32 1.1754944e-38, %v1599
    %v1601 = vsel %vm1598, %v1600, %v1596
    %v1602 = vmul.f32 1.0, %v1601
    %v1603 = vxor.u32 %v1502, 2147483648
    %v1604 = vmul.f32 %v1603, 1.442695
    %v1605 = vpow.pop %v1604
    %v1606 = vadd.f32 %v1605, 1.0
    %v1607 = vrcp.pop %v1606
    %v1608 = vmul.f32 %v1606, %v1607
    %v1609 = vsub.f32 1.0, %v1608
    %v1610 = vmul.f32 %v1607, %v1609
    %v1611 = vadd.f32 %v1607, %v1610
    %vm1612 = vweird.f32 %v1606
    %vm1613 = vweird.f32 %v1607
    %vm1614 = vmor %vm1612, %vm1613
    %v1615 = vsel %vm1614, %v1607, %v1611
    %v1616 = vand.u32 2147483647, %v1606
    %vm1617 = vcmp.eq.f32.partialorder %v1616, 8.507059e+37
    %v1618 = vand.u32 %v1606, 2147483648
    %v1619 = vor.u32 1.1754944e-38, %v1618
    %v1620 = vsel %vm1617, %v1619, %v1615
    %v1621 = vmul.f32 1.0, %v1620
    %v1622 = vtanh.pop %v1542
    %v1623 = vxor.u32 %v1582, 2147483648
    %v1624 = vmul.f32 %v1623, 1.442695
    %v1625 = vpow.pop %v1624
    %v1626 = vadd.f32 %v1625, 1.0
    %v1627 = vrcp.pop %v1626
    %v1628 = vmul.f32 %v1626, %v1627
    %v1629 = vsub.f32 1.0, %v1628
    %v1630 = vmul.f32 %v1627, %v1629
    %v1631 = vadd.f32 %v1627, %v1630
    %vm1632 = vweird.f32 %v1626
    %vm1633 = vweird.f32 %v1627
    %vm1634 = vmor %vm1632, %vm1633
    %v1635 = vsel %vm1634, %v1627, %v1631
    %v1636 = vand.u32 2147483647, %v1626
    %vm1637 = vcmp.eq.f32.partialorder %v1636, 8.507059e+37
    %v1638 = vand.u32 %v1626, 2147483648
    %v1639 = vor.u32 1.1754944e-38, %v1638
    %v1640 = vsel %vm1637, %v1639, %v1635
    %v1641 = vmul.f32 1.0, %v1640
    %v1642 = vmul.f32 %v1621, %v1259
    %v1643 = vmul.f32 %v1602, %v1622
    %v1644 = vadd.f32 %v1642, %v1643
    %v1645 = vtanh.pop %v1644
    %v1646 = vmul.f32 %v1641, %v1645
    %1647 = vmatpush.msra.mxu0 %v350
    %1648 = vmatpush.msra.mxu0 %v346
    %1649 = vmatpush.msra.mxu0 %v342
    %1650 = vmatpush.msra.mxu0 %v338
    %1651 = vmatpush.msra.mxu0 %v334
    %1652 = vmatpush.msra.mxu0 %v330
    %1653 = vmatpush.msra.mxu0 %v326
    %1654 = vmatpush.msra.mxu0 %v322
    %1655 = vmatpush.msra.mxu0 %v318
    %1656 = vmatpush.msra.mxu0 %v314
    %1657 = vmatpush.msra.mxu0 %v310
    %1658 = vmatpush.msra.mxu0 %v306
    %1659 = vmatpush.msra.mxu0 %v302
    %1660 = vmatpush.msra.mxu0 %v298
    %1661 = vmatpush.msra.mxu0 %v294
    %1662 = vmatpush.msra.mxu0 %v290
    %1663 = vmatmul.f32.gmra.mxu0 %v1423
    %v1664 = vpop.f32.mrf.mxu0
    %v1665 = vadd.f32 0.0, %v1664
    %1666 = vdwg.mxu0
    %1667 = vmatpush.msra.mxu0 %v351
    %1668 = vmatpush.msra.mxu0 %v347
    %1669 = vmatpush.msra.mxu0 %v343
    %1670 = vmatpush.msra.mxu0 %v339
    %1671 = vmatpush.msra.mxu0 %v335
    %1672 = vmatpush.msra.mxu0 %v331
    %1673 = vmatpush.msra.mxu0 %v327
    %1674 = vmatpush.msra.mxu0 %v323
    %1675 = vmatpush.msra.mxu0 %v319
    %1676 = vmatpush.msra.mxu0 %v315
    %1677 = vmatpush.msra.mxu0 %v311
    %1678 = vmatpush.msra.mxu0 %v307
    %1679 = vmatpush.msra.mxu0 %v303
    %1680 = vmatpush.msra.mxu0 %v299
    %1681 = vmatpush.msra.mxu0 %v295
    %1682 = vmatpush.msra.mxu0 %v291
    %1683 = vmatmul.f32.gmra.mxu0 %v1423
    %v1684 = vpop.f32.mrf.mxu0
    %v1685 = vadd.f32 0.0, %v1684
    %1686 = vdwg.mxu0
    %1687 = vmatpush.msra.mxu0 %v352
    %1688 = vmatpush.msra.mxu0 %v348
    %1689 = vmatpush.msra.mxu0 %v344
    %1690 = vmatpush.msra.mxu0 %v340
    %1691 = vmatpush.msra.mxu0 %v336
    %1692 = vmatpush.msra.mxu0 %v332
    %1693 = vmatpush.msra.mxu0 %v328
    %1694 = vmatpush.msra.mxu0 %v324
    %1695 = vmatpush.msra.mxu0 %v320
    %1696 = vmatpush.msra.mxu0 %v316
    %1697 = vmatpush.msra.mxu0 %v312
    %1698 = vmatpush.msra.mxu0 %v308
    %1699 = vmatpush.msra.mxu0 %v304
    %1700 = vmatpush.msra.mxu0 %v300
    %1701 = vmatpush.msra.mxu0 %v296
    %1702 = vmatpush.msra.mxu0 %v292
    %1703 = vmatmul.f32.gmra.mxu0 %v1423
    %v1704 = vpop.f32.mrf.mxu0
    %v1705 = vadd.f32 0.0, %v1704
    %1706 = vdwg.mxu0
    %1707 = vmatpush.msra.mxu0 %v353
    %1708 = vmatpush.msra.mxu0 %v349
    %1709 = vmatpush.msra.mxu0 %v345
    %1710 = vmatpush.msra.mxu0 %v341
    %1711 = vmatpush.msra.mxu0 %v337
    %1712 = vmatpush.msra.mxu0 %v333
    %1713 = vmatpush.msra.mxu0 %v329
    %1714 = vmatpush.msra.mxu0 %v325
    %1715 = vmatpush.msra.mxu0 %v321
    %1716 = vmatpush.msra.mxu0 %v317
    %1717 = vmatpush.msra.mxu0 %v313
    %1718 = vmatpush.msra.mxu0 %v309
    %1719 = vmatpush.msra.mxu0 %v305
    %1720 = vmatpush.msra.mxu0 %v301
    %1721 = vmatpush.msra.mxu0 %v297
    %1722 = vmatpush.msra.mxu0 %v293
    %1723 = vmatmul.f32.gmra.mxu0 %v1423
    %v1724 = vpop.f32.mrf.mxu0
    %v1725 = vadd.f32 0.0, %v1724
    %1726 = vdwg.mxu0
    %v1731 = vrot.slane %v1685, 6
    %v1732 = vrot.slane %v1705, 4
    %v1733 = vrot.slane %v1725, 2
    %v1734 = vsel %vm247, %v1665, %v1731
    %v1735 = vsel %vm249, %v1732, %v1733
    %v1736 = vsel %vm251, %v1734, %v1735
    %v1738 = vadd.f32 %v266, %v1736
    %v1739 = vxor.u32 %v1738, 2147483648
    %v1740 = vmul.f32 %v1739, 1.442695
    %v1741 = vpow.pop %v1740
    %v1742 = vadd.f32 %v1741, 1.0
    %v1743 = vrcp.pop %v1742
    %v1744 = vmul.f32 %v1742, %v1743
    %v1745 = vsub.f32 1.0, %v1744
    %v1746 = vmul.f32 %v1743, %v1745
    %v1747 = vadd.f32 %v1743, %v1746
    %vm1748 = vweird.f32 %v1742
    %vm1749 = vweird.f32 %v1743
    %vm1750 = vmor %vm1748, %vm1749
    %v1751 = vsel %vm1750, %v1743, %v1747
    %v1752 = vand.u32 2147483647, %v1742
    %vm1753 = vcmp.eq.f32.partialorder %v1752, 8.507059e+37
    %v1754 = vand.u32 %v1742, 2147483648
    %v1755 = vor.u32 1.1754944e-38, %v1754
    %v1756 = vsel %vm1753, %v1755, %v1751
    %v1757 = vmul.f32 1.0, %v1756
    %v1759 = vrot.slane %v1738, 2
    %v1761 = vxor.u32 %v1759, 2147483648
    %v1762 = vmul.f32 %v1761, 1.442695
    %v1763 = vpow.pop %v1762
    %v1764 = vadd.f32 %v1763, 1.0
    %v1765 = vrcp.pop %v1764
    %v1766 = vmul.f32 %v1764, %v1765
    %v1767 = vsub.f32 1.0, %v1766
    %v1768 = vmul.f32 %v1765, %v1767
    %v1769 = vadd.f32 %v1765, %v1768
    %vm1770 = vweird.f32 %v1764
    %vm1771 = vweird.f32 %v1765
    %vm1772 = vmor %vm1770, %vm1771
    %v1773 = vsel %vm1772, %v1765, %v1769
    %v1774 = vand.u32 2147483647, %v1764
    %vm1775 = vcmp.eq.f32.partialorder %v1774, 8.507059e+37
    %v1776 = vand.u32 %v1764, 2147483648
    %v1777 = vor.u32 1.1754944e-38, %v1776
    %v1778 = vsel %vm1775, %v1777, %v1773
    %v1779 = vmul.f32 1.0, %v1778
    %v1780 = vrot.slane %v1738, 4
    %v1782 = vtanh.pop %v1780
    %v1783 = vrot.slane %v1738, 6
    %v1785 = vxor.u32 %v1783, 2147483648
    %v1786 = vmul.f32 %v1785, 1.442695
    %v1787 = vpow.pop %v1786
    %v1788 = vadd.f32 %v1787, 1.0
    %v1789 = vrcp.pop %v1788
    %v1790 = vmul.f32 %v1788, %v1789
    %v1791 = vsub.f32 1.0, %v1790
    %v1792 = vmul.f32 %v1789, %v1791
    %v1793 = vadd.f32 %v1789, %v1792
    %vm1794 = vweird.f32 %v1788
    %vm1795 = vweird.f32 %v1789
    %vm1796 = vmor %vm1794, %vm1795
    %v1797 = vsel %vm1796, %v1789, %v1793
    %v1798 = vand.u32 2147483647, %v1788
    %vm1799 = vcmp.eq.f32.partialorder %v1798, 8.507059e+37
    %v1800 = vand.u32 %v1788, 2147483648
    %v1801 = vor.u32 1.1754944e-38, %v1800
    %v1802 = vsel %vm1799, %v1801, %v1797
    %v1803 = vmul.f32 1.0, %v1802
    %v1804 = vmul.f32 %v1779, %v1421
    %v1805 = vmul.f32 %v1757, %v1782
    %v1806 = vadd.f32 %v1804, %v1805
    %v1807 = vtanh.pop %v1806
    %v1808 = vmul.f32 %v1803, %v1807
    %1809 = vmatpush.msra.mxu0 %v414
    %1810 = vmatpush.msra.mxu0 %v410
    %1811 = vmatpush.msra.mxu0 %v406
    %1812 = vmatpush.msra.mxu0 %v402
    %1813 = vmatpush.msra.mxu0 %v398
    %1814 = vmatpush.msra.mxu0 %v394
    %1815 = vmatpush.msra.mxu0 %v390
    %1816 = vmatpush.msra.mxu0 %v386
    %1817 = vmatpush.msra.mxu0 %v382
    %1818 = vmatpush.msra.mxu0 %v378
    %1819 = vmatpush.msra.mxu0 %v374
    %1820 = vmatpush.msra.mxu0 %v370
    %1821 = vmatpush.msra.mxu0 %v366
    %1822 = vmatpush.msra.mxu0 %v362
    %1823 = vmatpush.msra.mxu0 %v358
    %1824 = vmatpush.msra.mxu0 %v354
    %1825 = vmatmul.f32.gmra.mxu0 %v1808
    %v1826 = vpop.f32.mrf.mxu0
    %v1827 = vadd.f32 %v484, %v1826
    %1828 = vdwg.mxu0
    %1829 = vmatpush.msra.mxu0 %v478
    %1830 = vmatpush.msra.mxu0 %v474
    %1831 = vmatpush.msra.mxu0 %v470
    %1832 = vmatpush.msra.mxu0 %v466
    %1833 = vmatpush.msra.mxu0 %v462
    %1834 = vmatpush.msra.mxu0 %v458
    %1835 = vmatpush.msra.mxu0 %v454
    %1836 = vmatpush.msra.mxu0 %v450
    %1837 = vmatpush.msra.mxu0 %v446
    %1838 = vmatpush.msra.mxu0 %v442
    %1839 = vmatpush.msra.mxu0 %v438
    %1840 = vmatpush.msra.mxu0 %v434
    %1841 = vmatpush.msra.mxu0 %v430
    %1842 = vmatpush.msra.mxu0 %v426
    %1843 = vmatpush.msra.mxu0 %v422
    %1844 = vmatpush.msra.mxu0 %v418
    %1845 = vmatmul.f32.gmra.mxu0 %v1646
    %v1846 = vpop.f32.mrf.mxu0
    %v1847 = vadd.f32 %v1827, %v1846
    %1848 = vdwg.mxu0
    %1849 = vmatpush.msra.mxu0 %v415
    %1850 = vmatpush.msra.mxu0 %v411
    %1851 = vmatpush.msra.mxu0 %v407
    %1852 = vmatpush.msra.mxu0 %v403
    %1853 = vmatpush.msra.mxu0 %v399
    %1854 = vmatpush.msra.mxu0 %v395
    %1855 = vmatpush.msra.mxu0 %v391
    %1856 = vmatpush.msra.mxu0 %v387
    %1857 = vmatpush.msra.mxu0 %v383
    %1858 = vmatpush.msra.mxu0 %v379
    %1859 = vmatpush.msra.mxu0 %v375
    %1860 = vmatpush.msra.mxu0 %v371
    %1861 = vmatpush.msra.mxu0 %v367
    %1862 = vmatpush.msra.mxu0 %v363
    %1863 = vmatpush.msra.mxu0 %v359
    %1864 = vmatpush.msra.mxu0 %v355
    %1865 = vmatmul.f32.gmra.mxu0 %v1808
    %v1866 = vpop.f32.mrf.mxu0
    %v1867 = vadd.f32 %v485, %v1866
    %1868 = vdwg.mxu0
    %1869 = vmatpush.msra.mxu0 %v479
    %1870 = vmatpush.msra.mxu0 %v475
    %1871 = vmatpush.msra.mxu0 %v471
    %1872 = vmatpush.msra.mxu0 %v467
    %1873 = vmatpush.msra.mxu0 %v463
    %1874 = vmatpush.msra.mxu0 %v459
    %1875 = vmatpush.msra.mxu0 %v455
    %1876 = vmatpush.msra.mxu0 %v451
    %1877 = vmatpush.msra.mxu0 %v447
    %1878 = vmatpush.msra.mxu0 %v443
    %1879 = vmatpush.msra.mxu0 %v439
    %1880 = vmatpush.msra.mxu0 %v435
    %1881 = vmatpush.msra.mxu0 %v431
    %1882 = vmatpush.msra.mxu0 %v427
    %1883 = vmatpush.msra.mxu0 %v423
    %1884 = vmatpush.msra.mxu0 %v419
    %1885 = vmatmul.f32.gmra.mxu0 %v1646
    %v1886 = vpop.f32.mrf.mxu0
    %v1887 = vadd.f32 %v1867, %v1886
    %1888 = vdwg.mxu0
    %1889 = vmatpush.msra.mxu0 %v416
    %1890 = vmatpush.msra.mxu0 %v412
    %1891 = vmatpush.msra.mxu0 %v408
    %1892 = vmatpush.msra.mxu0 %v404
    %1893 = vmatpush.msra.mxu0 %v400
    %1894 = vmatpush.msra.mxu0 %v396
    %1895 = vmatpush.msra.mxu0 %v392
    %1896 = vmatpush.msra.mxu0 %v388
    %1897 = vmatpush.msra.mxu0 %v384
    %1898 = vmatpush.msra.mxu0 %v380
    %1899 = vmatpush.msra.mxu0 %v376
    %1900 = vmatpush.msra.mxu0 %v372
    %1901 = vmatpush.msra.mxu0 %v368
    %1902 = vmatpush.msra.mxu0 %v364
    %1903 = vmatpush.msra.mxu0 %v360
    %1904 = vmatpush.msra.mxu0 %v356
    %1905 = vmatmul.f32.gmra.mxu0 %v1808
    %v1906 = vpop.f32.mrf.mxu0
    %v1907 = vadd.f32 %v486, %v1906
    %1908 = vdwg.mxu0
    %1909 = vmatpush.msra.mxu0 %v480
    %1910 = vmatpush.msra.mxu0 %v476
    %1911 = vmatpush.msra.mxu0 %v472
    %1912 = vmatpush.msra.mxu0 %v468
    %1913 = vmatpush.msra.mxu0 %v464
    %1914 = vmatpush.msra.mxu0 %v460
    %1915 = vmatpush.msra.mxu0 %v456
    %1916 = vmatpush.msra.mxu0 %v452
    %1917 = vmatpush.msra.mxu0 %v448
    %1918 = vmatpush.msra.mxu0 %v444
    %1919 = vmatpush.msra.mxu0 %v440
    %1920 = vmatpush.msra.mxu0 %v436
    %1921 = vmatpush.msra.mxu0 %v432
    %1922 = vmatpush.msra.mxu0 %v428
    %1923 = vmatpush.msra.mxu0 %v424
    %1924 = vmatpush.msra.mxu0 %v420
    %1925 = vmatmul.f32.gmra.mxu0 %v1646
    %v1926 = vpop.f32.mrf.mxu0
    %v1927 = vadd.f32 %v1907, %v1926
    %1928 = vdwg.mxu0
    %1929 = vmatpush.msra.mxu0 %v417
    %1930 = vmatpush.msra.mxu0 %v413
    %1931 = vmatpush.msra.mxu0 %v409
    %1932 = vmatpush.msra.mxu0 %v405
    %1933 = vmatpush.msra.mxu0 %v401
    %1934 = vmatpush.msra.mxu0 %v397
    %1935 = vmatpush.msra.mxu0 %v393
    %1936 = vmatpush.msra.mxu0 %v389
    %1937 = vmatpush.msra.mxu0 %v385
    %1938 = vmatpush.msra.mxu0 %v381
    %1939 = vmatpush.msra.mxu0 %v377
    %1940 = vmatpush.msra.mxu0 %v373
    %1941 = vmatpush.msra.mxu0 %v369
    %1942 = vmatpush.msra.mxu0 %v365
    %1943 = vmatpush.msra.mxu0 %v361
    %1944 = vmatpush.msra.mxu0 %v357
    %1945 = vmatmul.f32.gmra.mxu0 %v1808
    %v1946 = vpop.f32.mrf.mxu0
    %v1947 = vadd.f32 %v487, %v1946
    %1948 = vdwg.mxu0
    %1949 = vmatpush.msra.mxu0 %v481
    %1950 = vmatpush.msra.mxu0 %v477
    %1951 = vmatpush.msra.mxu0 %v473
    %1952 = vmatpush.msra.mxu0 %v469
    %1953 = vmatpush.msra.mxu0 %v465
    %1954 = vmatpush.msra.mxu0 %v461
    %1955 = vmatpush.msra.mxu0 %v457
    %1956 = vmatpush.msra.mxu0 %v453
    %1957 = vmatpush.msra.mxu0 %v449
    %1958 = vmatpush.msra.mxu0 %v445
    %1959 = vmatpush.msra.mxu0 %v441
    %1960 = vmatpush.msra.mxu0 %v437
    %1961 = vmatpush.msra.mxu0 %v433
    %1962 = vmatpush.msra.mxu0 %v429
    %1963 = vmatpush.msra.mxu0 %v425
    %1964 = vmatpush.msra.mxu0 %v421
    %1965 = vmatmul.f32.gmra.mxu0 %v1646
    %v1966 = vpop.f32.mrf.mxu0
    %v1967 = vadd.f32 %v1947, %v1966
    %1968 = vdwg.mxu0
    %v1969 = vxor.u32 %v1847, 2147483648
    %v1970 = vmul.f32 %v1969, 1.442695
    %v1971 = vpow.pop %v1970
    %v1972 = vadd.f32 %v1971, 1.0
    %v1973 = vrcp.pop %v1972
    %v1974 = vmul.f32 %v1972, %v1973
    %v1975 = vsub.f32 1.0, %v1974
    %v1976 = vmul.f32 %v1973, %v1975
    %v1977 = vadd.f32 %v1973, %v1976
    %vm1978 = vweird.f32 %v1972
    %vm1979 = vweird.f32 %v1973
    %vm1980 = vmor %vm1978, %vm1979
    %v1981 = vsel %vm1980, %v1973, %v1977
    %v1982 = vand.u32 2147483647, %v1972
    %vm1983 = vcmp.eq.f32.partialorder %v1982, 8.507059e+37
    %v1984 = vand.u32 %v1972, 2147483648
    %v1985 = vor.u32 1.1754944e-38, %v1984
    %v1986 = vsel %vm1983, %v1985, %v1981
    %v1987 = vmul.f32 1.0, %v1986
    %v1988 = vxor.u32 %v1887, 2147483648
    %v1989 = vmul.f32 %v1988, 1.442695
    %v1990 = vpow.pop %v1989
    %v1991 = vadd.f32 %v1990, 1.0
    %v1992 = vrcp.pop %v1991
    %v1993 = vmul.f32 %v1991, %v1992
    %v1994 = vsub.f32 1.0, %v1993
    %v1995 = vmul.f32 %v1992, %v1994
    %v1996 = vadd.f32 %v1992, %v1995
    %vm1997 = vweird.f32 %v1991
    %vm1998 = vweird.f32 %v1992
    %vm1999 = vmor %vm1997, %vm1998
    %v2000 = vsel %vm1999, %v1992, %v1996
    %v2001 = vand.u32 2147483647, %v1991
    %vm2002 = vcmp.eq.f32.partialorder %v2001, 8.507059e+37
    %v2003 = vand.u32 %v1991, 2147483648
    %v2004 = vor.u32 1.1754944e-38, %v2003
    %v2005 = vsel %vm2002, %v2004, %v2000
    %v2006 = vmul.f32 1.0, %v2005
    %v2007 = vtanh.pop %v1927
    %v2008 = vxor.u32 %v1967, 2147483648
    %v2009 = vmul.f32 %v2008, 1.442695
    %v2010 = vpow.pop %v2009
    %v2011 = vadd.f32 %v2010, 1.0
    %v2012 = vrcp.pop %v2011
    %v2013 = vmul.f32 %v2011, %v2012
    %v2014 = vsub.f32 1.0, %v2013
    %v2015 = vmul.f32 %v2012, %v2014
    %v2016 = vadd.f32 %v2012, %v2015
    %vm2017 = vweird.f32 %v2011
    %vm2018 = vweird.f32 %v2012
    %vm2019 = vmor %vm2017, %vm2018
    %v2020 = vsel %vm2019, %v2012, %v2016
    %v2021 = vand.u32 2147483647, %v2011
    %vm2022 = vcmp.eq.f32.partialorder %v2021, 8.507059e+37
    %v2023 = vand.u32 %v2011, 2147483648
    %v2024 = vor.u32 1.1754944e-38, %v2023
    %v2025 = vsel %vm2022, %v2024, %v2020
    %v2026 = vmul.f32 1.0, %v2025
    %v2027 = vmul.f32 %v2006, %v1644
    %v2028 = vmul.f32 %v1987, %v2007
    %v2029 = vadd.f32 %v2027, %v2028
    %v2030 = vtanh.pop %v2029
    %v2031 = vmul.f32 %v2026, %v2030
    %2032 = vmatpush.msra.mxu0 %v350
    %2033 = vmatpush.msra.mxu0 %v346
    %2034 = vmatpush.msra.mxu0 %v342
    %2035 = vmatpush.msra.mxu0 %v338
    %2036 = vmatpush.msra.mxu0 %v334
    %2037 = vmatpush.msra.mxu0 %v330
    %2038 = vmatpush.msra.mxu0 %v326
    %2039 = vmatpush.msra.mxu0 %v322
    %2040 = vmatpush.msra.mxu0 %v318
    %2041 = vmatpush.msra.mxu0 %v314
    %2042 = vmatpush.msra.mxu0 %v310
    %2043 = vmatpush.msra.mxu0 %v306
    %2044 = vmatpush.msra.mxu0 %v302
    %2045 = vmatpush.msra.mxu0 %v298
    %2046 = vmatpush.msra.mxu0 %v294
    %2047 = vmatpush.msra.mxu0 %v290
    %2048 = vmatmul.f32.gmra.mxu0 %v1808
    %v2049 = vpop.f32.mrf.mxu0
    %v2050 = vadd.f32 0.0, %v2049
    %2051 = vdwg.mxu0
    %2052 = vmatpush.msra.mxu0 %v351
    %2053 = vmatpush.msra.mxu0 %v347
    %2054 = vmatpush.msra.mxu0 %v343
    %2055 = vmatpush.msra.mxu0 %v339
    %2056 = vmatpush.msra.mxu0 %v335
    %2057 = vmatpush.msra.mxu0 %v331
    %2058 = vmatpush.msra.mxu0 %v327
    %2059 = vmatpush.msra.mxu0 %v323
    %2060 = vmatpush.msra.mxu0 %v319
    %2061 = vmatpush.msra.mxu0 %v315
    %2062 = vmatpush.msra.mxu0 %v311
    %2063 = vmatpush.msra.mxu0 %v307
    %2064 = vmatpush.msra.mxu0 %v303
    %2065 = vmatpush.msra.mxu0 %v299
    %2066 = vmatpush.msra.mxu0 %v295
    %2067 = vmatpush.msra.mxu0 %v291
    %2068 = vmatmul.f32.gmra.mxu0 %v1808
    %v2069 = vpop.f32.mrf.mxu0
    %v2070 = vadd.f32 0.0, %v2069
    %2071 = vdwg.mxu0
    %2072 = vmatpush.msra.mxu0 %v352
    %2073 = vmatpush.msra.mxu0 %v348
    %2074 = vmatpush.msra.mxu0 %v344
    %2075 = vmatpush.msra.mxu0 %v340
    %2076 = vmatpush.msra.mxu0 %v336
    %2077 = vmatpush.msra.mxu0 %v332
    %2078 = vmatpush.msra.mxu0 %v328
    %2079 = vmatpush.msra.mxu0 %v324
    %2080 = vmatpush.msra.mxu0 %v320
    %2081 = vmatpush.msra.mxu0 %v316
    %2082 = vmatpush.msra.mxu0 %v312
    %2083 = vmatpush.msra.mxu0 %v308
    %2084 = vmatpush.msra.mxu0 %v304
    %2085 = vmatpush.msra.mxu0 %v300
    %2086 = vmatpush.msra.mxu0 %v296
    %2087 = vmatpush.msra.mxu0 %v292
    %2088 = vmatmul.f32.gmra.mxu0 %v1808
    %v2089 = vpop.f32.mrf.mxu0
    %v2090 = vadd.f32 0.0, %v2089
    %2091 = vdwg.mxu0
    %2092 = vmatpush.msra.mxu0 %v353
    %2093 = vmatpush.msra.mxu0 %v349
    %2094 = vmatpush.msra.mxu0 %v345
    %2095 = vmatpush.msra.mxu0 %v341
    %2096 = vmatpush.msra.mxu0 %v337
    %2097 = vmatpush.msra.mxu0 %v333
    %2098 = vmatpush.msra.mxu0 %v329
    %2099 = vmatpush.msra.mxu0 %v325
    %2100 = vmatpush.msra.mxu0 %v321
    %2101 = vmatpush.msra.mxu0 %v317
    %2102 = vmatpush.msra.mxu0 %v313
    %2103 = vmatpush.msra.mxu0 %v309
    %2104 = vmatpush.msra.mxu0 %v305
    %2105 = vmatpush.msra.mxu0 %v301
    %2106 = vmatpush.msra.mxu0 %v297
    %2107 = vmatpush.msra.mxu0 %v293
    %2108 = vmatmul.f32.gmra.mxu0 %v1808
    %v2109 = vpop.f32.mrf.mxu0
    %v2110 = vadd.f32 0.0, %v2109
    %2111 = vdwg.mxu0
    %v2116 = vrot.slane %v2070, 6
    %v2117 = vrot.slane %v2090, 4
    %v2118 = vrot.slane %v2110, 2
    %v2119 = vsel %vm247, %v2050, %v2116
    %v2120 = vsel %vm249, %v2117, %v2118
    %v2121 = vsel %vm251, %v2119, %v2120
    %v2123 = vadd.f32 %v269, %v2121
    %v2124 = vxor.u32 %v2123, 2147483648
    %v2125 = vmul.f32 %v2124, 1.442695
    %v2126 = vpow.pop %v2125
    %v2127 = vadd.f32 %v2126, 1.0
    %v2128 = vrcp.pop %v2127
    %v2129 = vmul.f32 %v2127, %v2128
    %v2130 = vsub.f32 1.0, %v2129
    %v2131 = vmul.f32 %v2128, %v2130
    %v2132 = vadd.f32 %v2128, %v2131
    %vm2133 = vweird.f32 %v2127
    %vm2134 = vweird.f32 %v2128
    %vm2135 = vmor %vm2133, %vm2134
    %v2136 = vsel %vm2135, %v2128, %v2132
    %v2137 = vand.u32 2147483647, %v2127
    %vm2138 = vcmp.eq.f32.partialorder %v2137, 8.507059e+37
    %v2139 = vand.u32 %v2127, 2147483648
    %v2140 = vor.u32 1.1754944e-38, %v2139
    %v2141 = vsel %vm2138, %v2140, %v2136
    %v2142 = vmul.f32 1.0, %v2141
    %v2144 = vrot.slane %v2123, 2
    %v2146 = vxor.u32 %v2144, 2147483648
    %v2147 = vmul.f32 %v2146, 1.442695
    %v2148 = vpow.pop %v2147
    %v2149 = vadd.f32 %v2148, 1.0
    %v2150 = vrcp.pop %v2149
    %v2151 = vmul.f32 %v2149, %v2150
    %v2152 = vsub.f32 1.0, %v2151
    %v2153 = vmul.f32 %v2150, %v2152
    %v2154 = vadd.f32 %v2150, %v2153
    %vm2155 = vweird.f32 %v2149
    %vm2156 = vweird.f32 %v2150
    %vm2157 = vmor %vm2155, %vm2156
    %v2158 = vsel %vm2157, %v2150, %v2154
    %v2159 = vand.u32 2147483647, %v2149
    %vm2160 = vcmp.eq.f32.partialorder %v2159, 8.507059e+37
    %v2161 = vand.u32 %v2149, 2147483648
    %v2162 = vor.u32 1.1754944e-38, %v2161
    %v2163 = vsel %vm2160, %v2162, %v2158
    %v2164 = vmul.f32 1.0, %v2163
    %v2165 = vrot.slane %v2123, 4
    %v2167 = vtanh.pop %v2165
    %v2168 = vrot.slane %v2123, 6
    %v2170 = vxor.u32 %v2168, 2147483648
    %v2171 = vmul.f32 %v2170, 1.442695
    %v2172 = vpow.pop %v2171
    %v2173 = vadd.f32 %v2172, 1.0
    %v2174 = vrcp.pop %v2173
    %v2175 = vmul.f32 %v2173, %v2174
    %v2176 = vsub.f32 1.0, %v2175
    %v2177 = vmul.f32 %v2174, %v2176
    %v2178 = vadd.f32 %v2174, %v2177
    %vm2179 = vweird.f32 %v2173
    %vm2180 = vweird.f32 %v2174
    %vm2181 = vmor %vm2179, %vm2180
    %v2182 = vsel %vm2181, %v2174, %v2178
    %v2183 = vand.u32 2147483647, %v2173
    %vm2184 = vcmp.eq.f32.partialorder %v2183, 8.507059e+37
    %v2185 = vand.u32 %v2173, 2147483648
    %v2186 = vor.u32 1.1754944e-38, %v2185
    %v2187 = vsel %vm2184, %v2186, %v2182
    %v2188 = vmul.f32 1.0, %v2187
    %v2189 = vmul.f32 %v2164, %v1806
    %v2190 = vmul.f32 %v2142, %v2167
    %v2191 = vadd.f32 %v2189, %v2190
    %v2192 = vtanh.pop %v2191
    %v2193 = vmul.f32 %v2188, %v2192
    %2194 = vmatpush.msra.mxu0 %v414
    %2195 = vmatpush.msra.mxu0 %v410
    %2196 = vmatpush.msra.mxu0 %v406
    %2197 = vmatpush.msra.mxu0 %v402
    %2198 = vmatpush.msra.mxu0 %v398
    %2199 = vmatpush.msra.mxu0 %v394
    %2200 = vmatpush.msra.mxu0 %v390
    %2201 = vmatpush.msra.mxu0 %v386
    %2202 = vmatpush.msra.mxu0 %v382
    %2203 = vmatpush.msra.mxu0 %v378
    %2204 = vmatpush.msra.mxu0 %v374
    %2205 = vmatpush.msra.mxu0 %v370
    %2206 = vmatpush.msra.mxu0 %v366
    %2207 = vmatpush.msra.mxu0 %v362
    %2208 = vmatpush.msra.mxu0 %v358
    %2209 = vmatpush.msra.mxu0 %v354
    %2210 = vmatmul.f32.gmra.mxu0 %v2193
    %v2211 = vpop.f32.mrf.mxu0
    %v2212 = vadd.f32 %v484, %v2211
    %2213 = vdwg.mxu0
    %2214 = vmatpush.msra.mxu0 %v478
    %2215 = vmatpush.msra.mxu0 %v474
    %2216 = vmatpush.msra.mxu0 %v470
    %2217 = vmatpush.msra.mxu0 %v466
    %2218 = vmatpush.msra.mxu0 %v462
    %2219 = vmatpush.msra.mxu0 %v458
    %2220 = vmatpush.msra.mxu0 %v454
    %2221 = vmatpush.msra.mxu0 %v450
    %2222 = vmatpush.msra.mxu0 %v446
    %2223 = vmatpush.msra.mxu0 %v442
    %2224 = vmatpush.msra.mxu0 %v438
    %2225 = vmatpush.msra.mxu0 %v434
    %2226 = vmatpush.msra.mxu0 %v430
    %2227 = vmatpush.msra.mxu0 %v426
    %2228 = vmatpush.msra.mxu0 %v422
    %2229 = vmatpush.msra.mxu0 %v418
    %2230 = vmatmul.f32.gmra.mxu0 %v2031
    %v2231 = vpop.f32.mrf.mxu0
    %v2232 = vadd.f32 %v2212, %v2231
    %2233 = vdwg.mxu0
    %2234 = vmatpush.msra.mxu0 %v415
    %2235 = vmatpush.msra.mxu0 %v411
    %2236 = vmatpush.msra.mxu0 %v407
    %2237 = vmatpush.msra.mxu0 %v403
    %2238 = vmatpush.msra.mxu0 %v399
    %2239 = vmatpush.msra.mxu0 %v395
    %2240 = vmatpush.msra.mxu0 %v391
    %2241 = vmatpush.msra.mxu0 %v387
    %2242 = vmatpush.msra.mxu0 %v383
    %2243 = vmatpush.msra.mxu0 %v379
    %2244 = vmatpush.msra.mxu0 %v375
    %2245 = vmatpush.msra.mxu0 %v371
    %2246 = vmatpush.msra.mxu0 %v367
    %2247 = vmatpush.msra.mxu0 %v363
    %2248 = vmatpush.msra.mxu0 %v359
    %2249 = vmatpush.msra.mxu0 %v355
    %2250 = vmatmul.f32.gmra.mxu0 %v2193
    %v2251 = vpop.f32.mrf.mxu0
    %v2252 = vadd.f32 %v485, %v2251
    %2253 = vdwg.mxu0
    %2254 = vmatpush.msra.mxu0 %v479
    %2255 = vmatpush.msra.mxu0 %v475
    %2256 = vmatpush.msra.mxu0 %v471
    %2257 = vmatpush.msra.mxu0 %v467
    %2258 = vmatpush.msra.mxu0 %v463
    %2259 = vmatpush.msra.mxu0 %v459
    %2260 = vmatpush.msra.mxu0 %v455
    %2261 = vmatpush.msra.mxu0 %v451
    %2262 = vmatpush.msra.mxu0 %v447
    %2263 = vmatpush.msra.mxu0 %v443
    %2264 = vmatpush.msra.mxu0 %v439
    %2265 = vmatpush.msra.mxu0 %v435
    %2266 = vmatpush.msra.mxu0 %v431
    %2267 = vmatpush.msra.mxu0 %v427
    %2268 = vmatpush.msra.mxu0 %v423
    %2269 = vmatpush.msra.mxu0 %v419
    %2270 = vmatmul.f32.gmra.mxu0 %v2031
    %v2271 = vpop.f32.mrf.mxu0
    %v2272 = vadd.f32 %v2252, %v2271
    %2273 = vdwg.mxu0
    %2274 = vmatpush.msra.mxu0 %v416
    %2275 = vmatpush.msra.mxu0 %v412
    %2276 = vmatpush.msra.mxu0 %v408
    %2277 = vmatpush.msra.mxu0 %v404
    %2278 = vmatpush.msra.mxu0 %v400
    %2279 = vmatpush.msra.mxu0 %v396
    %2280 = vmatpush.msra.mxu0 %v392
    %2281 = vmatpush.msra.mxu0 %v388
    %2282 = vmatpush.msra.mxu0 %v384
    %2283 = vmatpush.msra.mxu0 %v380
    %2284 = vmatpush.msra.mxu0 %v376
    %2285 = vmatpush.msra.mxu0 %v372
    %2286 = vmatpush.msra.mxu0 %v368
    %2287 = vmatpush.msra.mxu0 %v364
    %2288 = vmatpush.msra.mxu0 %v360
    %2289 = vmatpush.msra.mxu0 %v356
    %2290 = vmatmul.f32.gmra.mxu0 %v2193
    %v2291 = vpop.f32.mrf.mxu0
    %v2292 = vadd.f32 %v486, %v2291
    %2293 = vdwg.mxu0
    %2294 = vmatpush.msra.mxu0 %v480
    %2295 = vmatpush.msra.mxu0 %v476
    %2296 = vmatpush.msra.mxu0 %v472
    %2297 = vmatpush.msra.mxu0 %v468
    %2298 = vmatpush.msra.mxu0 %v464
    %2299 = vmatpush.msra.mxu0 %v460
    %2300 = vmatpush.msra.mxu0 %v456
    %2301 = vmatpush.msra.mxu0 %v452
    %2302 = vmatpush.msra.mxu0 %v448
    %2303 = vmatpush.msra.mxu0 %v444
    %2304 = vmatpush.msra.mxu0 %v440
    %2305 = vmatpush.msra.mxu0 %v436
    %2306 = vmatpush.msra.mxu0 %v432
    %2307 = vmatpush.msra.mxu0 %v428
    %2308 = vmatpush.msra.mxu0 %v424
    %2309 = vmatpush.msra.mxu0 %v420
    %2310 = vmatmul.f32.gmra.mxu0 %v2031
    %v2311 = vpop.f32.mrf.mxu0
    %v2312 = vadd.f32 %v2292, %v2311
    %2313 = vdwg.mxu0
    %2314 = vmatpush.msra.mxu0 %v417
    %2315 = vmatpush.msra.mxu0 %v413
    %2316 = vmatpush.msra.mxu0 %v409
    %2317 = vmatpush.msra.mxu0 %v405
    %2318 = vmatpush.msra.mxu0 %v401
    %2319 = vmatpush.msra.mxu0 %v397
    %2320 = vmatpush.msra.mxu0 %v393
    %2321 = vmatpush.msra.mxu0 %v389
    %2322 = vmatpush.msra.mxu0 %v385
    %2323 = vmatpush.msra.mxu0 %v381
    %2324 = vmatpush.msra.mxu0 %v377
    %2325 = vmatpush.msra.mxu0 %v373
    %2326 = vmatpush.msra.mxu0 %v369
    %2327 = vmatpush.msra.mxu0 %v365
    %2328 = vmatpush.msra.mxu0 %v361
    %2329 = vmatpush.msra.mxu0 %v357
    %2330 = vmatmul.f32.gmra.mxu0 %v2193
    %v2331 = vpop.f32.mrf.mxu0
    %v2332 = vadd.f32 %v487, %v2331
    %2333 = vdwg.mxu0
    %2334 = vmatpush.msra.mxu0 %v481
    %2335 = vmatpush.msra.mxu0 %v477
    %2336 = vmatpush.msra.mxu0 %v473
    %2337 = vmatpush.msra.mxu0 %v469
    %2338 = vmatpush.msra.mxu0 %v465
    %2339 = vmatpush.msra.mxu0 %v461
    %2340 = vmatpush.msra.mxu0 %v457
    %2341 = vmatpush.msra.mxu0 %v453
    %2342 = vmatpush.msra.mxu0 %v449
    %2343 = vmatpush.msra.mxu0 %v445
    %2344 = vmatpush.msra.mxu0 %v441
    %2345 = vmatpush.msra.mxu0 %v437
    %2346 = vmatpush.msra.mxu0 %v433
    %2347 = vmatpush.msra.mxu0 %v429
    %2348 = vmatpush.msra.mxu0 %v425
    %2349 = vmatpush.msra.mxu0 %v421
    %2350 = vmatmul.f32.gmra.mxu0 %v2031
    %v2351 = vpop.f32.mrf.mxu0
    %v2352 = vadd.f32 %v2332, %v2351
    %2353 = vdwg.mxu0
    %v2354 = vxor.u32 %v2232, 2147483648
    %v2355 = vmul.f32 %v2354, 1.442695
    %v2356 = vpow.pop %v2355
    %v2357 = vadd.f32 %v2356, 1.0
    %v2358 = vrcp.pop %v2357
    %v2359 = vmul.f32 %v2357, %v2358
    %v2360 = vsub.f32 1.0, %v2359
    %v2361 = vmul.f32 %v2358, %v2360
    %v2362 = vadd.f32 %v2358, %v2361
    %vm2363 = vweird.f32 %v2357
    %vm2364 = vweird.f32 %v2358
    %vm2365 = vmor %vm2363, %vm2364
    %v2366 = vsel %vm2365, %v2358, %v2362
    %v2367 = vand.u32 2147483647, %v2357
    %vm2368 = vcmp.eq.f32.partialorder %v2367, 8.507059e+37
    %v2369 = vand.u32 %v2357, 2147483648
    %v2370 = vor.u32 1.1754944e-38, %v2369
    %v2371 = vsel %vm2368, %v2370, %v2366
    %v2372 = vmul.f32 1.0, %v2371
    %v2373 = vxor.u32 %v2272, 2147483648
    %v2374 = vmul.f32 %v2373, 1.442695
    %v2375 = vpow.pop %v2374
    %v2376 = vadd.f32 %v2375, 1.0
    %v2377 = vrcp.pop %v2376
    %v2378 = vmul.f32 %v2376, %v2377
    %v2379 = vsub.f32 1.0, %v2378
    %v2380 = vmul.f32 %v2377, %v2379
    %v2381 = vadd.f32 %v2377, %v2380
    %vm2382 = vweird.f32 %v2376
    %vm2383 = vweird.f32 %v2377
    %vm2384 = vmor %vm2382, %vm2383
    %v2385 = vsel %vm2384, %v2377, %v2381
    %v2386 = vand.u32 2147483647, %v2376
    %vm2387 = vcmp.eq.f32.partialorder %v2386, 8.507059e+37
    %v2388 = vand.u32 %v2376, 2147483648
    %v2389 = vor.u32 1.1754944e-38, %v2388
    %v2390 = vsel %vm2387, %v2389, %v2385
    %v2391 = vmul.f32 1.0, %v2390
    %v2392 = vtanh.pop %v2312
    %v2393 = vxor.u32 %v2352, 2147483648
    %v2394 = vmul.f32 %v2393, 1.442695
    %v2395 = vpow.pop %v2394
    %v2396 = vadd.f32 %v2395, 1.0
    %v2397 = vrcp.pop %v2396
    %v2398 = vmul.f32 %v2396, %v2397
    %v2399 = vsub.f32 1.0, %v2398
    %v2400 = vmul.f32 %v2397, %v2399
    %v2401 = vadd.f32 %v2397, %v2400
    %vm2402 = vweird.f32 %v2396
    %vm2403 = vweird.f32 %v2397
    %vm2404 = vmor %vm2402, %vm2403
    %v2405 = vsel %vm2404, %v2397, %v2401
    %v2406 = vand.u32 2147483647, %v2396
    %vm2407 = vcmp.eq.f32.partialorder %v2406, 8.507059e+37
    %v2408 = vand.u32 %v2396, 2147483648
    %v2409 = vor.u32 1.1754944e-38, %v2408
    %v2410 = vsel %vm2407, %v2409, %v2405
    %v2411 = vmul.f32 1.0, %v2410
    %v2412 = vmul.f32 %v2391, %v2029
    %v2413 = vmul.f32 %v2372, %v2392
    %v2414 = vadd.f32 %v2412, %v2413
    %v2415 = vtanh.pop %v2414
    %v2416 = vmul.f32 %v2411, %v2415
    %2417 = vmatpush.msra.mxu0 %v350
    %2418 = vmatpush.msra.mxu0 %v346
    %2419 = vmatpush.msra.mxu0 %v342
    %2420 = vmatpush.msra.mxu0 %v338
    %2421 = vmatpush.msra.mxu0 %v334
    %2422 = vmatpush.msra.mxu0 %v330
    %2423 = vmatpush.msra.mxu0 %v326
    %2424 = vmatpush.msra.mxu0 %v322
    %2425 = vmatpush.msra.mxu0 %v318
    %2426 = vmatpush.msra.mxu0 %v314
    %2427 = vmatpush.msra.mxu0 %v310
    %2428 = vmatpush.msra.mxu0 %v306
    %2429 = vmatpush.msra.mxu0 %v302
    %2430 = vmatpush.msra.mxu0 %v298
    %2431 = vmatpush.msra.mxu0 %v294
    %2432 = vmatpush.msra.mxu0 %v290
    %2433 = vmatmul.f32.gmra.mxu0 %v2193
    %v2434 = vpop.f32.mrf.mxu0
    %v2435 = vadd.f32 0.0, %v2434
    %2436 = vdwg.mxu0
    %2437 = vmatpush.msra.mxu0 %v351
    %2438 = vmatpush.msra.mxu0 %v347
    %2439 = vmatpush.msra.mxu0 %v343
    %2440 = vmatpush.msra.mxu0 %v339
    %2441 = vmatpush.msra.mxu0 %v335
    %2442 = vmatpush.msra.mxu0 %v331
    %2443 = vmatpush.msra.mxu0 %v327
    %2444 = vmatpush.msra.mxu0 %v323
    %2445 = vmatpush.msra.mxu0 %v319
    %2446 = vmatpush.msra.mxu0 %v315
    %2447 = vmatpush.msra.mxu0 %v311
    %2448 = vmatpush.msra.mxu0 %v307
    %2449 = vmatpush.msra.mxu0 %v303
    %2450 = vmatpush.msra.mxu0 %v299
    %2451 = vmatpush.msra.mxu0 %v295
    %2452 = vmatpush.msra.mxu0 %v291
    %2453 = vmatmul.f32.gmra.mxu0 %v2193
    %v2454 = vpop.f32.mrf.mxu0
    %v2455 = vadd.f32 0.0, %v2454
    %2456 = vdwg.mxu0
    %2457 = vmatpush.msra.mxu0 %v352
    %2458 = vmatpush.msra.mxu0 %v348
    %2459 = vmatpush.msra.mxu0 %v344
    %2460 = vmatpush.msra.mxu0 %v340
    %2461 = vmatpush.msra.mxu0 %v336
    %2462 = vmatpush.msra.mxu0 %v332
    %2463 = vmatpush.msra.mxu0 %v328
    %2464 = vmatpush.msra.mxu0 %v324
    %2465 = vmatpush.msra.mxu0 %v320
    %2466 = vmatpush.msra.mxu0 %v316
    %2467 = vmatpush.msra.mxu0 %v312
    %2468 = vmatpush.msra.mxu0 %v308
    %2469 = vmatpush.msra.mxu0 %v304
    %2470 = vmatpush.msra.mxu0 %v300
    %2471 = vmatpush.msra.mxu0 %v296
    %2472 = vmatpush.msra.mxu0 %v292
    %2473 = vmatmul.f32.gmra.mxu0 %v2193
    %v2474 = vpop.f32.mrf.mxu0
    %v2475 = vadd.f32 0.0, %v2474
    %2476 = vdwg.mxu0
    %2477 = vmatpush.msra.mxu0 %v353
    %2478 = vmatpush.msra.mxu0 %v349
    %2479 = vmatpush.msra.mxu0 %v345
    %2480 = vmatpush.msra.mxu0 %v341
    %2481 = vmatpush.msra.mxu0 %v337
    %2482 = vmatpush.msra.mxu0 %v333
    %2483 = vmatpush.msra.mxu0 %v329
    %2484 = vmatpush.msra.mxu0 %v325
    %2485 = vmatpush.msra.mxu0 %v321
    %2486 = vmatpush.msra.mxu0 %v317
    %2487 = vmatpush.msra.mxu0 %v313
    %2488 = vmatpush.msra.mxu0 %v309
    %2489 = vmatpush.msra.mxu0 %v305
    %2490 = vmatpush.msra.mxu0 %v301
    %2491 = vmatpush.msra.mxu0 %v297
    %2492 = vmatpush.msra.mxu0 %v293
    %2493 = vmatmul.f32.gmra.mxu0 %v2193
    %v2494 = vpop.f32.mrf.mxu0
    %v2495 = vadd.f32 0.0, %v2494
    %2496 = vdwg.mxu0
    %v2501 = vrot.slane %v2455, 6
    %v2502 = vrot.slane %v2475, 4
    %v2503 = vrot.slane %v2495, 2
    %v2504 = vsel %vm247, %v2435, %v2501
    %v2505 = vsel %vm249, %v2502, %v2503
    %v2506 = vsel %vm251, %v2504, %v2505
    %v2508 = vadd.f32 %v273, %v2506
    %v2509 = vxor.u32 %v2508, 2147483648
    %v2510 = vmul.f32 %v2509, 1.442695
    %v2511 = vpow.pop %v2510
    %v2512 = vadd.f32 %v2511, 1.0
    %v2513 = vrcp.pop %v2512
    %v2514 = vmul.f32 %v2512, %v2513
    %v2515 = vsub.f32 1.0, %v2514
    %v2516 = vmul.f32 %v2513, %v2515
    %v2517 = vadd.f32 %v2513, %v2516
    %vm2518 = vweird.f32 %v2512
    %vm2519 = vweird.f32 %v2513
    %vm2520 = vmor %vm2518, %vm2519
    %v2521 = vsel %vm2520, %v2513, %v2517
    %v2522 = vand.u32 2147483647, %v2512
    %vm2523 = vcmp.eq.f32.partialorder %v2522, 8.507059e+37
    %v2524 = vand.u32 %v2512, 2147483648
    %v2525 = vor.u32 1.1754944e-38, %v2524
    %v2526 = vsel %vm2523, %v2525, %v2521
    %v2527 = vmul.f32 1.0, %v2526
    %v2529 = vrot.slane %v2508, 2
    %v2531 = vxor.u32 %v2529, 2147483648
    %v2532 = vmul.f32 %v2531, 1.442695
    %v2533 = vpow.pop %v2532
    %v2534 = vadd.f32 %v2533, 1.0
    %v2535 = vrcp.pop %v2534
    %v2536 = vmul.f32 %v2534, %v2535
    %v2537 = vsub.f32 1.0, %v2536
    %v2538 = vmul.f32 %v2535, %v2537
    %v2539 = vadd.f32 %v2535, %v2538
    %vm2540 = vweird.f32 %v2534
    %vm2541 = vweird.f32 %v2535
    %vm2542 = vmor %vm2540, %vm2541
    %v2543 = vsel %vm2542, %v2535, %v2539
    %v2544 = vand.u32 2147483647, %v2534
    %vm2545 = vcmp.eq.f32.partialorder %v2544, 8.507059e+37
    %v2546 = vand.u32 %v2534, 2147483648
    %v2547 = vor.u32 1.1754944e-38, %v2546
    %v2548 = vsel %vm2545, %v2547, %v2543
    %v2549 = vmul.f32 1.0, %v2548
    %v2550 = vrot.slane %v2508, 4
    %v2552 = vtanh.pop %v2550
    %v2553 = vrot.slane %v2508, 6
    %v2555 = vxor.u32 %v2553, 2147483648
    %v2556 = vmul.f32 %v2555, 1.442695
    %v2557 = vpow.pop %v2556
    %v2558 = vadd.f32 %v2557, 1.0
    %v2559 = vrcp.pop %v2558
    %v2560 = vmul.f32 %v2558, %v2559
    %v2561 = vsub.f32 1.0, %v2560
    %v2562 = vmul.f32 %v2559, %v2561
    %v2563 = vadd.f32 %v2559, %v2562
    %vm2564 = vweird.f32 %v2558
    %vm2565 = vweird.f32 %v2559
    %vm2566 = vmor %vm2564, %vm2565
    %v2567 = vsel %vm2566, %v2559, %v2563
    %v2568 = vand.u32 2147483647, %v2558
    %vm2569 = vcmp.eq.f32.partialorder %v2568, 8.507059e+37
    %v2570 = vand.u32 %v2558, 2147483648
    %v2571 = vor.u32 1.1754944e-38, %v2570
    %v2572 = vsel %vm2569, %v2571, %v2567
    %v2573 = vmul.f32 1.0, %v2572
    %v2574 = vmul.f32 %v2549, %v2191
    %v2575 = vmul.f32 %v2527, %v2552
    %v2576 = vadd.f32 %v2574, %v2575
    %v2577 = vtanh.pop %v2576
    %v2578 = vmul.f32 %v2573, %v2577
    %2579 = vmatpush.msra.mxu0 %v414
    %2580 = vmatpush.msra.mxu0 %v410
    %2581 = vmatpush.msra.mxu0 %v406
    %2582 = vmatpush.msra.mxu0 %v402
    %2583 = vmatpush.msra.mxu0 %v398
    %2584 = vmatpush.msra.mxu0 %v394
    %2585 = vmatpush.msra.mxu0 %v390
    %2586 = vmatpush.msra.mxu0 %v386
    %2587 = vmatpush.msra.mxu0 %v382
    %2588 = vmatpush.msra.mxu0 %v378
    %2589 = vmatpush.msra.mxu0 %v374
    %2590 = vmatpush.msra.mxu0 %v370
    %2591 = vmatpush.msra.mxu0 %v366
    %2592 = vmatpush.msra.mxu0 %v362
    %2593 = vmatpush.msra.mxu0 %v358
    %2594 = vmatpush.msra.mxu0 %v354
    %2595 = vmatmul.f32.gmra.mxu0 %v2578
    %v2596 = vpop.f32.mrf.mxu0
    %v2597 = vadd.f32 %v484, %v2596
    %2598 = vdwg.mxu0
    %2599 = vmatpush.msra.mxu0 %v478
    %2600 = vmatpush.msra.mxu0 %v474
    %2601 = vmatpush.msra.mxu0 %v470
    %2602 = vmatpush.msra.mxu0 %v466
    %2603 = vmatpush.msra.mxu0 %v462
    %2604 = vmatpush.msra.mxu0 %v458
    %2605 = vmatpush.msra.mxu0 %v454
    %2606 = vmatpush.msra.mxu0 %v450
    %2607 = vmatpush.msra.mxu0 %v446
    %2608 = vmatpush.msra.mxu0 %v442
    %2609 = vmatpush.msra.mxu0 %v438
    %2610 = vmatpush.msra.mxu0 %v434
    %2611 = vmatpush.msra.mxu0 %v430
    %2612 = vmatpush.msra.mxu0 %v426
    %2613 = vmatpush.msra.mxu0 %v422
    %2614 = vmatpush.msra.mxu0 %v418
    %2615 = vmatmul.f32.gmra.mxu0 %v2416
    %v2616 = vpop.f32.mrf.mxu0
    %v2617 = vadd.f32 %v2597, %v2616
    %2618 = vdwg.mxu0
    %2619 = vmatpush.msra.mxu0 %v415
    %2620 = vmatpush.msra.mxu0 %v411
    %2621 = vmatpush.msra.mxu0 %v407
    %2622 = vmatpush.msra.mxu0 %v403
    %2623 = vmatpush.msra.mxu0 %v399
    %2624 = vmatpush.msra.mxu0 %v395
    %2625 = vmatpush.msra.mxu0 %v391
    %2626 = vmatpush.msra.mxu0 %v387
    %2627 = vmatpush.msra.mxu0 %v383
    %2628 = vmatpush.msra.mxu0 %v379
    %2629 = vmatpush.msra.mxu0 %v375
    %2630 = vmatpush.msra.mxu0 %v371
    %2631 = vmatpush.msra.mxu0 %v367
    %2632 = vmatpush.msra.mxu0 %v363
    %2633 = vmatpush.msra.mxu0 %v359
    %2634 = vmatpush.msra.mxu0 %v355
    %2635 = vmatmul.f32.gmra.mxu0 %v2578
    %v2636 = vpop.f32.mrf.mxu0
    %v2637 = vadd.f32 %v485, %v2636
    %2638 = vdwg.mxu0
    %2639 = vmatpush.msra.mxu0 %v479
    %2640 = vmatpush.msra.mxu0 %v475
    %2641 = vmatpush.msra.mxu0 %v471
    %2642 = vmatpush.msra.mxu0 %v467
    %2643 = vmatpush.msra.mxu0 %v463
    %2644 = vmatpush.msra.mxu0 %v459
    %2645 = vmatpush.msra.mxu0 %v455
    %2646 = vmatpush.msra.mxu0 %v451
    %2647 = vmatpush.msra.mxu0 %v447
    %2648 = vmatpush.msra.mxu0 %v443
    %2649 = vmatpush.msra.mxu0 %v439
    %2650 = vmatpush.msra.mxu0 %v435
    %2651 = vmatpush.msra.mxu0 %v431
    %2652 = vmatpush.msra.mxu0 %v427
    %2653 = vmatpush.msra.mxu0 %v423
    %2654 = vmatpush.msra.mxu0 %v419
    %2655 = vmatmul.f32.gmra.mxu0 %v2416
    %v2656 = vpop.f32.mrf.mxu0
    %v2657 = vadd.f32 %v2637, %v2656
    %2658 = vdwg.mxu0
    %2659 = vmatpush.msra.mxu0 %v416
    %2660 = vmatpush.msra.mxu0 %v412
    %2661 = vmatpush.msra.mxu0 %v408
    %2662 = vmatpush.msra.mxu0 %v404
    %2663 = vmatpush.msra.mxu0 %v400
    %2664 = vmatpush.msra.mxu0 %v396
    %2665 = vmatpush.msra.mxu0 %v392
    %2666 = vmatpush.msra.mxu0 %v388
    %2667 = vmatpush.msra.mxu0 %v384
    %2668 = vmatpush.msra.mxu0 %v380
    %2669 = vmatpush.msra.mxu0 %v376
    %2670 = vmatpush.msra.mxu0 %v372
    %2671 = vmatpush.msra.mxu0 %v368
    %2672 = vmatpush.msra.mxu0 %v364
    %2673 = vmatpush.msra.mxu0 %v360
    %2674 = vmatpush.msra.mxu0 %v356
    %2675 = vmatmul.f32.gmra.mxu0 %v2578
    %v2676 = vpop.f32.mrf.mxu0
    %v2677 = vadd.f32 %v486, %v2676
    %2678 = vdwg.mxu0
    %2679 = vmatpush.msra.mxu0 %v480
    %2680 = vmatpush.msra.mxu0 %v476
    %2681 = vmatpush.msra.mxu0 %v472
    %2682 = vmatpush.msra.mxu0 %v468
    %2683 = vmatpush.msra.mxu0 %v464
    %2684 = vmatpush.msra.mxu0 %v460
    %2685 = vmatpush.msra.mxu0 %v456
    %2686 = vmatpush.msra.mxu0 %v452
    %2687 = vmatpush.msra.mxu0 %v448
    %2688 = vmatpush.msra.mxu0 %v444
    %2689 = vmatpush.msra.mxu0 %v440
    %2690 = vmatpush.msra.mxu0 %v436
    %2691 = vmatpush.msra.mxu0 %v432
    %2692 = vmatpush.msra.mxu0 %v428
    %2693 = vmatpush.msra.mxu0 %v424
    %2694 = vmatpush.msra.mxu0 %v420
    %2695 = vmatmul.f32.gmra.mxu0 %v2416
    %v2696 = vpop.f32.mrf.mxu0
    %v2697 = vadd.f32 %v2677, %v2696
    %2698 = vdwg.mxu0
    %2699 = vmatpush.msra.mxu0 %v417
    %2700 = vmatpush.msra.mxu0 %v413
    %2701 = vmatpush.msra.mxu0 %v409
    %2702 = vmatpush.msra.mxu0 %v405
    %2703 = vmatpush.msra.mxu0 %v401
    %2704 = vmatpush.msra.mxu0 %v397
    %2705 = vmatpush.msra.mxu0 %v393
    %2706 = vmatpush.msra.mxu0 %v389
    %2707 = vmatpush.msra.mxu0 %v385
    %2708 = vmatpush.msra.mxu0 %v381
    %2709 = vmatpush.msra.mxu0 %v377
    %2710 = vmatpush.msra.mxu0 %v373
    %2711 = vmatpush.msra.mxu0 %v369
    %2712 = vmatpush.msra.mxu0 %v365
    %2713 = vmatpush.msra.mxu0 %v361
    %2714 = vmatpush.msra.mxu0 %v357
    %2715 = vmatmul.f32.gmra.mxu0 %v2578
    %v2716 = vpop.f32.mrf.mxu0
    %v2717 = vadd.f32 %v487, %v2716
    %2718 = vdwg.mxu0
    %2719 = vmatpush.msra.mxu0 %v481
    %2720 = vmatpush.msra.mxu0 %v477
    %2721 = vmatpush.msra.mxu0 %v473
    %2722 = vmatpush.msra.mxu0 %v469
    %2723 = vmatpush.msra.mxu0 %v465
    %2724 = vmatpush.msra.mxu0 %v461
    %2725 = vmatpush.msra.mxu0 %v457
    %2726 = vmatpush.msra.mxu0 %v453
    %2727 = vmatpush.msra.mxu0 %v449
    %2728 = vmatpush.msra.mxu0 %v445
    %2729 = vmatpush.msra.mxu0 %v441
    %2730 = vmatpush.msra.mxu0 %v437
    %2731 = vmatpush.msra.mxu0 %v433
    %2732 = vmatpush.msra.mxu0 %v429
    %2733 = vmatpush.msra.mxu0 %v425
    %2734 = vmatpush.msra.mxu0 %v421
    %2735 = vmatmul.f32.gmra.mxu0 %v2416
    %v2736 = vpop.f32.mrf.mxu0
    %v2737 = vadd.f32 %v2717, %v2736
    %2738 = vdwg.mxu0
    %v2739 = vxor.u32 %v2617, 2147483648
    %v2740 = vmul.f32 %v2739, 1.442695
    %v2741 = vpow.pop %v2740
    %v2742 = vadd.f32 %v2741, 1.0
    %v2743 = vrcp.pop %v2742
    %v2744 = vmul.f32 %v2742, %v2743
    %v2745 = vsub.f32 1.0, %v2744
    %v2746 = vmul.f32 %v2743, %v2745
    %v2747 = vadd.f32 %v2743, %v2746
    %vm2748 = vweird.f32 %v2742
    %vm2749 = vweird.f32 %v2743
    %vm2750 = vmor %vm2748, %vm2749
    %v2751 = vsel %vm2750, %v2743, %v2747
    %v2752 = vand.u32 2147483647, %v2742
    %vm2753 = vcmp.eq.f32.partialorder %v2752, 8.507059e+37
    %v2754 = vand.u32 %v2742, 2147483648
    %v2755 = vor.u32 1.1754944e-38, %v2754
    %v2756 = vsel %vm2753, %v2755, %v2751
    %v2757 = vmul.f32 1.0, %v2756
    %v2758 = vxor.u32 %v2657, 2147483648
    %v2759 = vmul.f32 %v2758, 1.442695
    %v2760 = vpow.pop %v2759
    %v2761 = vadd.f32 %v2760, 1.0
    %v2762 = vrcp.pop %v2761
    %v2763 = vmul.f32 %v2761, %v2762
    %v2764 = vsub.f32 1.0, %v2763
    %v2765 = vmul.f32 %v2762, %v2764
    %v2766 = vadd.f32 %v2762, %v2765
    %vm2767 = vweird.f32 %v2761
    %vm2768 = vweird.f32 %v2762
    %vm2769 = vmor %vm2767, %vm2768
    %v2770 = vsel %vm2769, %v2762, %v2766
    %v2771 = vand.u32 2147483647, %v2761
    %vm2772 = vcmp.eq.f32.partialorder %v2771, 8.507059e+37
    %v2773 = vand.u32 %v2761, 2147483648
    %v2774 = vor.u32 1.1754944e-38, %v2773
    %v2775 = vsel %vm2772, %v2774, %v2770
    %v2776 = vmul.f32 1.0, %v2775
    %v2777 = vtanh.pop %v2697
    %v2778 = vxor.u32 %v2737, 2147483648
    %v2779 = vmul.f32 %v2778, 1.442695
    %v2780 = vpow.pop %v2779
    %v2781 = vadd.f32 %v2780, 1.0
    %v2782 = vrcp.pop %v2781
    %v2783 = vmul.f32 %v2781, %v2782
    %v2784 = vsub.f32 1.0, %v2783
    %v2785 = vmul.f32 %v2782, %v2784
    %v2786 = vadd.f32 %v2782, %v2785
    %vm2787 = vweird.f32 %v2781
    %vm2788 = vweird.f32 %v2782
    %vm2789 = vmor %vm2787, %vm2788
    %v2790 = vsel %vm2789, %v2782, %v2786
    %v2791 = vand.u32 2147483647, %v2781
    %vm2792 = vcmp.eq.f32.partialorder %v2791, 8.507059e+37
    %v2793 = vand.u32 %v2781, 2147483648
    %v2794 = vor.u32 1.1754944e-38, %v2793
    %v2795 = vsel %vm2792, %v2794, %v2790
    %v2796 = vmul.f32 1.0, %v2795
    %v2797 = vmul.f32 %v2776, %v2414
    %v2798 = vmul.f32 %v2757, %v2777
    %v2799 = vadd.f32 %v2797, %v2798
    %v2800 = vtanh.pop %v2799
    %v2801 = vmul.f32 %v2796, %v2800
    %2802 = vmatpush.msra.mxu0 %v350
    %2803 = vmatpush.msra.mxu0 %v346
    %2804 = vmatpush.msra.mxu0 %v342
    %2805 = vmatpush.msra.mxu0 %v338
    %2806 = vmatpush.msra.mxu0 %v334
    %2807 = vmatpush.msra.mxu0 %v330
    %2808 = vmatpush.msra.mxu0 %v326
    %2809 = vmatpush.msra.mxu0 %v322
    %2810 = vmatpush.msra.mxu0 %v318
    %2811 = vmatpush.msra.mxu0 %v314
    %2812 = vmatpush.msra.mxu0 %v310
    %2813 = vmatpush.msra.mxu0 %v306
    %2814 = vmatpush.msra.mxu0 %v302
    %2815 = vmatpush.msra.mxu0 %v298
    %2816 = vmatpush.msra.mxu0 %v294
    %2817 = vmatpush.msra.mxu0 %v290
    %2818 = vmatmul.f32.gmra.mxu0 %v2578
    %v2819 = vpop.f32.mrf.mxu0
    %v2820 = vadd.f32 0.0, %v2819
    %2821 = vdwg.mxu0
    %2822 = vmatpush.msra.mxu0 %v351
    %2823 = vmatpush.msra.mxu0 %v347
    %2824 = vmatpush.msra.mxu0 %v343
    %2825 = vmatpush.msra.mxu0 %v339
    %2826 = vmatpush.msra.mxu0 %v335
    %2827 = vmatpush.msra.mxu0 %v331
    %2828 = vmatpush.msra.mxu0 %v327
    %2829 = vmatpush.msra.mxu0 %v323
    %2830 = vmatpush.msra.mxu0 %v319
    %2831 = vmatpush.msra.mxu0 %v315
    %2832 = vmatpush.msra.mxu0 %v311
    %2833 = vmatpush.msra.mxu0 %v307
    %2834 = vmatpush.msra.mxu0 %v303
    %2835 = vmatpush.msra.mxu0 %v299
    %2836 = vmatpush.msra.mxu0 %v295
    %2837 = vmatpush.msra.mxu0 %v291
    %2838 = vmatmul.f32.gmra.mxu0 %v2578
    %v2839 = vpop.f32.mrf.mxu0
    %v2840 = vadd.f32 0.0, %v2839
    %2841 = vdwg.mxu0
    %2842 = vmatpush.msra.mxu0 %v352
    %2843 = vmatpush.msra.mxu0 %v348
    %2844 = vmatpush.msra.mxu0 %v344
    %2845 = vmatpush.msra.mxu0 %v340
    %2846 = vmatpush.msra.mxu0 %v336
    %2847 = vmatpush.msra.mxu0 %v332
    %2848 = vmatpush.msra.mxu0 %v328
    %2849 = vmatpush.msra.mxu0 %v324
    %2850 = vmatpush.msra.mxu0 %v320
    %2851 = vmatpush.msra.mxu0 %v316
    %2852 = vmatpush.msra.mxu0 %v312
    %2853 = vmatpush.msra.mxu0 %v308
    %2854 = vmatpush.msra.mxu0 %v304
    %2855 = vmatpush.msra.mxu0 %v300
    %2856 = vmatpush.msra.mxu0 %v296
    %2857 = vmatpush.msra.mxu0 %v292
    %2858 = vmatmul.f32.gmra.mxu0 %v2578
    %v2859 = vpop.f32.mrf.mxu0
    %v2860 = vadd.f32 0.0, %v2859
    %2861 = vdwg.mxu0
    %2862 = vmatpush.msra.mxu0 %v353
    %2863 = vmatpush.msra.mxu0 %v349
    %2864 = vmatpush.msra.mxu0 %v345
    %2865 = vmatpush.msra.mxu0 %v341
    %2866 = vmatpush.msra.mxu0 %v337
    %2867 = vmatpush.msra.mxu0 %v333
    %2868 = vmatpush.msra.mxu0 %v329
    %2869 = vmatpush.msra.mxu0 %v325
    %2870 = vmatpush.msra.mxu0 %v321
    %2871 = vmatpush.msra.mxu0 %v317
    %2872 = vmatpush.msra.mxu0 %v313
    %2873 = vmatpush.msra.mxu0 %v309
    %2874 = vmatpush.msra.mxu0 %v305
    %2875 = vmatpush.msra.mxu0 %v301
    %2876 = vmatpush.msra.mxu0 %v297
    %2877 = vmatpush.msra.mxu0 %v293
    %2878 = vmatmul.f32.gmra.mxu0 %v2578
    %v2879 = vpop.f32.mrf.mxu0
    %v2880 = vadd.f32 0.0, %v2879
    %2881 = vdwg.mxu0
    %v2886 = vrot.slane %v2840, 6
    %v2887 = vrot.slane %v2860, 4
    %v2888 = vrot.slane %v2880, 2
    %v2889 = vsel %vm247, %v2820, %v2886
    %v2890 = vsel %vm249, %v2887, %v2888
    %v2891 = vsel %vm251, %v2889, %v2890
    %v2893 = vadd.f32 %v277, %v2891
    %v2894 = vxor.u32 %v2893, 2147483648
    %v2895 = vmul.f32 %v2894, 1.442695
    %v2896 = vpow.pop %v2895
    %v2897 = vadd.f32 %v2896, 1.0
    %v2898 = vrcp.pop %v2897
    %v2899 = vmul.f32 %v2897, %v2898
    %v2900 = vsub.f32 1.0, %v2899
    %v2901 = vmul.f32 %v2898, %v2900
    %v2902 = vadd.f32 %v2898, %v2901
    %vm2903 = vweird.f32 %v2897
    %vm2904 = vweird.f32 %v2898
    %vm2905 = vmor %vm2903, %vm2904
    %v2906 = vsel %vm2905, %v2898, %v2902
    %v2907 = vand.u32 2147483647, %v2897
    %vm2908 = vcmp.eq.f32.partialorder %v2907, 8.507059e+37
    %v2909 = vand.u32 %v2897, 2147483648
    %v2910 = vor.u32 1.1754944e-38, %v2909
    %v2911 = vsel %vm2908, %v2910, %v2906
    %v2912 = vmul.f32 1.0, %v2911
    %v2914 = vrot.slane %v2893, 2
    %v2916 = vxor.u32 %v2914, 2147483648
    %v2917 = vmul.f32 %v2916, 1.442695
    %v2918 = vpow.pop %v2917
    %v2919 = vadd.f32 %v2918, 1.0
    %v2920 = vrcp.pop %v2919
    %v2921 = vmul.f32 %v2919, %v2920
    %v2922 = vsub.f32 1.0, %v2921
    %v2923 = vmul.f32 %v2920, %v2922
    %v2924 = vadd.f32 %v2920, %v2923
    %vm2925 = vweird.f32 %v2919
    %vm2926 = vweird.f32 %v2920
    %vm2927 = vmor %vm2925, %vm2926
    %v2928 = vsel %vm2927, %v2920, %v2924
    %v2929 = vand.u32 2147483647, %v2919
    %vm2930 = vcmp.eq.f32.partialorder %v2929, 8.507059e+37
    %v2931 = vand.u32 %v2919, 2147483648
    %v2932 = vor.u32 1.1754944e-38, %v2931
    %v2933 = vsel %vm2930, %v2932, %v2928
    %v2934 = vmul.f32 1.0, %v2933
    %v2935 = vrot.slane %v2893, 4
    %v2937 = vtanh.pop %v2935
    %v2938 = vrot.slane %v2893, 6
    %v2940 = vxor.u32 %v2938, 2147483648
    %v2941 = vmul.f32 %v2940, 1.442695
    %v2942 = vpow.pop %v2941
    %v2943 = vadd.f32 %v2942, 1.0
    %v2944 = vrcp.pop %v2943
    %v2945 = vmul.f32 %v2943, %v2944
    %v2946 = vsub.f32 1.0, %v2945
    %v2947 = vmul.f32 %v2944, %v2946
    %v2948 = vadd.f32 %v2944, %v2947
    %vm2949 = vweird.f32 %v2943
    %vm2950 = vweird.f32 %v2944
    %vm2951 = vmor %vm2949, %vm2950
    %v2952 = vsel %vm2951, %v2944, %v2948
    %v2953 = vand.u32 2147483647, %v2943
    %vm2954 = vcmp.eq.f32.partialorder %v2953, 8.507059e+37
    %v2955 = vand.u32 %v2943, 2147483648
    %v2956 = vor.u32 1.1754944e-38, %v2955
    %v2957 = vsel %vm2954, %v2956, %v2952
    %v2958 = vmul.f32 1.0, %v2957
    %v2959 = vmul.f32 %v2934, %v2576
    %v2960 = vmul.f32 %v2912, %v2937
    %v2961 = vadd.f32 %v2959, %v2960
    %v2962 = vtanh.pop %v2961
    %v2963 = vmul.f32 %v2958, %v2962
    %2964 = vmatpush.msra.mxu0 %v414
    %2965 = vmatpush.msra.mxu0 %v410
    %2966 = vmatpush.msra.mxu0 %v406
    %2967 = vmatpush.msra.mxu0 %v402
    %2968 = vmatpush.msra.mxu0 %v398
    %2969 = vmatpush.msra.mxu0 %v394
    %2970 = vmatpush.msra.mxu0 %v390
    %2971 = vmatpush.msra.mxu0 %v386
    %2972 = vmatpush.msra.mxu0 %v382
    %2973 = vmatpush.msra.mxu0 %v378
    %2974 = vmatpush.msra.mxu0 %v374
    %2975 = vmatpush.msra.mxu0 %v370
    %2976 = vmatpush.msra.mxu0 %v366
    %2977 = vmatpush.msra.mxu0 %v362
    %2978 = vmatpush.msra.mxu0 %v358
    %2979 = vmatpush.msra.mxu0 %v354
    %2980 = vmatmul.f32.gmra.mxu0 %v2963
    %v2981 = vpop.f32.mrf.mxu0
    %v2982 = vadd.f32 %v484, %v2981
    %2983 = vdwg.mxu0
    %2984 = vmatpush.msra.mxu0 %v478
    %2985 = vmatpush.msra.mxu0 %v474
    %2986 = vmatpush.msra.mxu0 %v470
    %2987 = vmatpush.msra.mxu0 %v466
    %2988 = vmatpush.msra.mxu0 %v462
    %2989 = vmatpush.msra.mxu0 %v458
    %2990 = vmatpush.msra.mxu0 %v454
    %2991 = vmatpush.msra.mxu0 %v450
    %2992 = vmatpush.msra.mxu0 %v446
    %2993 = vmatpush.msra.mxu0 %v442
    %2994 = vmatpush.msra.mxu0 %v438
    %2995 = vmatpush.msra.mxu0 %v434
    %2996 = vmatpush.msra.mxu0 %v430
    %2997 = vmatpush.msra.mxu0 %v426
    %2998 = vmatpush.msra.mxu0 %v422
    %2999 = vmatpush.msra.mxu0 %v418
    %3000 = vmatmul.f32.gmra.mxu0 %v2801
    %v3001 = vpop.f32.mrf.mxu0
    %v3002 = vadd.f32 %v2982, %v3001
    %3003 = vdwg.mxu0
    %3004 = vmatpush.msra.mxu0 %v415
    %3005 = vmatpush.msra.mxu0 %v411
    %3006 = vmatpush.msra.mxu0 %v407
    %3007 = vmatpush.msra.mxu0 %v403
    %3008 = vmatpush.msra.mxu0 %v399
    %3009 = vmatpush.msra.mxu0 %v395
    %3010 = vmatpush.msra.mxu0 %v391
    %3011 = vmatpush.msra.mxu0 %v387
    %3012 = vmatpush.msra.mxu0 %v383
    %3013 = vmatpush.msra.mxu0 %v379
    %3014 = vmatpush.msra.mxu0 %v375
    %3015 = vmatpush.msra.mxu0 %v371
    %3016 = vmatpush.msra.mxu0 %v367
    %3017 = vmatpush.msra.mxu0 %v363
    %3018 = vmatpush.msra.mxu0 %v359
    %3019 = vmatpush.msra.mxu0 %v355
    %3020 = vmatmul.f32.gmra.mxu0 %v2963
    %v3021 = vpop.f32.mrf.mxu0
    %v3022 = vadd.f32 %v485, %v3021
    %3023 = vdwg.mxu0
    %3024 = vmatpush.msra.mxu0 %v479
    %3025 = vmatpush.msra.mxu0 %v475
    %3026 = vmatpush.msra.mxu0 %v471
    %3027 = vmatpush.msra.mxu0 %v467
    %3028 = vmatpush.msra.mxu0 %v463
    %3029 = vmatpush.msra.mxu0 %v459
    %3030 = vmatpush.msra.mxu0 %v455
    %3031 = vmatpush.msra.mxu0 %v451
    %3032 = vmatpush.msra.mxu0 %v447
    %3033 = vmatpush.msra.mxu0 %v443
    %3034 = vmatpush.msra.mxu0 %v439
    %3035 = vmatpush.msra.mxu0 %v435
    %3036 = vmatpush.msra.mxu0 %v431
    %3037 = vmatpush.msra.mxu0 %v427
    %3038 = vmatpush.msra.mxu0 %v423
    %3039 = vmatpush.msra.mxu0 %v419
    %3040 = vmatmul.f32.gmra.mxu0 %v2801
    %v3041 = vpop.f32.mrf.mxu0
    %v3042 = vadd.f32 %v3022, %v3041
    %3043 = vdwg.mxu0
    %3044 = vmatpush.msra.mxu0 %v416
    %3045 = vmatpush.msra.mxu0 %v412
    %3046 = vmatpush.msra.mxu0 %v408
    %3047 = vmatpush.msra.mxu0 %v404
    %3048 = vmatpush.msra.mxu0 %v400
    %3049 = vmatpush.msra.mxu0 %v396
    %3050 = vmatpush.msra.mxu0 %v392
    %3051 = vmatpush.msra.mxu0 %v388
    %3052 = vmatpush.msra.mxu0 %v384
    %3053 = vmatpush.msra.mxu0 %v380
    %3054 = vmatpush.msra.mxu0 %v376
    %3055 = vmatpush.msra.mxu0 %v372
    %3056 = vmatpush.msra.mxu0 %v368
    %3057 = vmatpush.msra.mxu0 %v364
    %3058 = vmatpush.msra.mxu0 %v360
    %3059 = vmatpush.msra.mxu0 %v356
    %3060 = vmatmul.f32.gmra.mxu0 %v2963
    %v3061 = vpop.f32.mrf.mxu0
    %v3062 = vadd.f32 %v486, %v3061
    %3063 = vdwg.mxu0
    %3064 = vmatpush.msra.mxu0 %v480
    %3065 = vmatpush.msra.mxu0 %v476
    %3066 = vmatpush.msra.mxu0 %v472
    %3067 = vmatpush.msra.mxu0 %v468
    %3068 = vmatpush.msra.mxu0 %v464
    %3069 = vmatpush.msra.mxu0 %v460
    %3070 = vmatpush.msra.mxu0 %v456
    %3071 = vmatpush.msra.mxu0 %v452
    %3072 = vmatpush.msra.mxu0 %v448
    %3073 = vmatpush.msra.mxu0 %v444
    %3074 = vmatpush.msra.mxu0 %v440
    %3075 = vmatpush.msra.mxu0 %v436
    %3076 = vmatpush.msra.mxu0 %v432
    %3077 = vmatpush.msra.mxu0 %v428
    %3078 = vmatpush.msra.mxu0 %v424
    %3079 = vmatpush.msra.mxu0 %v420
    %3080 = vmatmul.f32.gmra.mxu0 %v2801
    %v3081 = vpop.f32.mrf.mxu0
    %v3082 = vadd.f32 %v3062, %v3081
    %3083 = vdwg.mxu0
    %3084 = vmatpush.msra.mxu0 %v417
    %3085 = vmatpush.msra.mxu0 %v413
    %3086 = vmatpush.msra.mxu0 %v409
    %3087 = vmatpush.msra.mxu0 %v405
    %3088 = vmatpush.msra.mxu0 %v401
    %3089 = vmatpush.msra.mxu0 %v397
    %3090 = vmatpush.msra.mxu0 %v393
    %3091 = vmatpush.msra.mxu0 %v389
    %3092 = vmatpush.msra.mxu0 %v385
    %3093 = vmatpush.msra.mxu0 %v381
    %3094 = vmatpush.msra.mxu0 %v377
    %3095 = vmatpush.msra.mxu0 %v373
    %3096 = vmatpush.msra.mxu0 %v369
    %3097 = vmatpush.msra.mxu0 %v365
    %3098 = vmatpush.msra.mxu0 %v361
    %3099 = vmatpush.msra.mxu0 %v357
    %3100 = vmatmul.f32.gmra.mxu0 %v2963
    %v3101 = vpop.f32.mrf.mxu0
    %v3102 = vadd.f32 %v487, %v3101
    %3103 = vdwg.mxu0
    %3104 = vmatpush.msra.mxu0 %v481
    %3105 = vmatpush.msra.mxu0 %v477
    %3106 = vmatpush.msra.mxu0 %v473
    %3107 = vmatpush.msra.mxu0 %v469
    %3108 = vmatpush.msra.mxu0 %v465
    %3109 = vmatpush.msra.mxu0 %v461
    %3110 = vmatpush.msra.mxu0 %v457
    %3111 = vmatpush.msra.mxu0 %v453
    %3112 = vmatpush.msra.mxu0 %v449
    %3113 = vmatpush.msra.mxu0 %v445
    %3114 = vmatpush.msra.mxu0 %v441
    %3115 = vmatpush.msra.mxu0 %v437
    %3116 = vmatpush.msra.mxu0 %v433
    %3117 = vmatpush.msra.mxu0 %v429
    %3118 = vmatpush.msra.mxu0 %v425
    %3119 = vmatpush.msra.mxu0 %v421
    %3120 = vmatmul.f32.gmra.mxu0 %v2801
    %v3121 = vpop.f32.mrf.mxu0
    %v3122 = vadd.f32 %v3102, %v3121
    %3123 = vdwg.mxu0
    %v3124 = vxor.u32 %v3002, 2147483648
    %v3125 = vmul.f32 %v3124, 1.442695
    %v3126 = vpow.pop %v3125
    %v3127 = vadd.f32 %v3126, 1.0
    %v3128 = vrcp.pop %v3127
    %v3129 = vmul.f32 %v3127, %v3128
    %v3130 = vsub.f32 1.0, %v3129
    %v3131 = vmul.f32 %v3128, %v3130
    %v3132 = vadd.f32 %v3128, %v3131
    %vm3133 = vweird.f32 %v3127
    %vm3134 = vweird.f32 %v3128
    %vm3135 = vmor %vm3133, %vm3134
    %v3136 = vsel %vm3135, %v3128, %v3132
    %v3137 = vand.u32 2147483647, %v3127
    %vm3138 = vcmp.eq.f32.partialorder %v3137, 8.507059e+37
    %v3139 = vand.u32 %v3127, 2147483648
    %v3140 = vor.u32 1.1754944e-38, %v3139
    %v3141 = vsel %vm3138, %v3140, %v3136
    %v3142 = vmul.f32 1.0, %v3141
    %v3143 = vxor.u32 %v3042, 2147483648
    %v3144 = vmul.f32 %v3143, 1.442695
    %v3145 = vpow.pop %v3144
    %v3146 = vadd.f32 %v3145, 1.0
    %v3147 = vrcp.pop %v3146
    %v3148 = vmul.f32 %v3146, %v3147
    %v3149 = vsub.f32 1.0, %v3148
    %v3150 = vmul.f32 %v3147, %v3149
    %v3151 = vadd.f32 %v3147, %v3150
    %vm3152 = vweird.f32 %v3146
    %vm3153 = vweird.f32 %v3147
    %vm3154 = vmor %vm3152, %vm3153
    %v3155 = vsel %vm3154, %v3147, %v3151
    %v3156 = vand.u32 2147483647, %v3146
    %vm3157 = vcmp.eq.f32.partialorder %v3156, 8.507059e+37
    %v3158 = vand.u32 %v3146, 2147483648
    %v3159 = vor.u32 1.1754944e-38, %v3158
    %v3160 = vsel %vm3157, %v3159, %v3155
    %v3161 = vmul.f32 1.0, %v3160
    %v3162 = vtanh.pop %v3082
    %v3163 = vxor.u32 %v3122, 2147483648
    %v3164 = vmul.f32 %v3163, 1.442695
    %v3165 = vpow.pop %v3164
    %v3166 = vadd.f32 %v3165, 1.0
    %v3167 = vrcp.pop %v3166
    %v3168 = vmul.f32 %v3166, %v3167
    %v3169 = vsub.f32 1.0, %v3168
    %v3170 = vmul.f32 %v3167, %v3169
    %v3171 = vadd.f32 %v3167, %v3170
    %vm3172 = vweird.f32 %v3166
    %vm3173 = vweird.f32 %v3167
    %vm3174 = vmor %vm3172, %vm3173
    %v3175 = vsel %vm3174, %v3167, %v3171
    %v3176 = vand.u32 2147483647, %v3166
    %vm3177 = vcmp.eq.f32.partialorder %v3176, 8.507059e+37
    %v3178 = vand.u32 %v3166, 2147483648
    %v3179 = vor.u32 1.1754944e-38, %v3178
    %v3180 = vsel %vm3177, %v3179, %v3175
    %v3181 = vmul.f32 1.0, %v3180
    %v3182 = vmul.f32 %v3161, %v2799
    %v3183 = vmul.f32 %v3142, %v3162
    %v3184 = vadd.f32 %v3182, %v3183
    %v3185 = vtanh.pop %v3184
    %v3186 = vmul.f32 %v3181, %v3185
    %3187 = vmatpush.msra.mxu0 %v350
    %3188 = vmatpush.msra.mxu0 %v346
    %3189 = vmatpush.msra.mxu0 %v342
    %3190 = vmatpush.msra.mxu0 %v338
    %3191 = vmatpush.msra.mxu0 %v334
    %3192 = vmatpush.msra.mxu0 %v330
    %3193 = vmatpush.msra.mxu0 %v326
    %3194 = vmatpush.msra.mxu0 %v322
    %3195 = vmatpush.msra.mxu0 %v318
    %3196 = vmatpush.msra.mxu0 %v314
    %3197 = vmatpush.msra.mxu0 %v310
    %3198 = vmatpush.msra.mxu0 %v306
    %3199 = vmatpush.msra.mxu0 %v302
    %3200 = vmatpush.msra.mxu0 %v298
    %3201 = vmatpush.msra.mxu0 %v294
    %3202 = vmatpush.msra.mxu0 %v290
    %3203 = vmatmul.f32.gmra.mxu0 %v2963
    %v3204 = vpop.f32.mrf.mxu0
    %v3205 = vadd.f32 0.0, %v3204
    %3206 = vdwg.mxu0
    %3207 = vmatpush.msra.mxu0 %v351
    %3208 = vmatpush.msra.mxu0 %v347
    %3209 = vmatpush.msra.mxu0 %v343
    %3210 = vmatpush.msra.mxu0 %v339
    %3211 = vmatpush.msra.mxu0 %v335
    %3212 = vmatpush.msra.mxu0 %v331
    %3213 = vmatpush.msra.mxu0 %v327
    %3214 = vmatpush.msra.mxu0 %v323
    %3215 = vmatpush.msra.mxu0 %v319
    %3216 = vmatpush.msra.mxu0 %v315
    %3217 = vmatpush.msra.mxu0 %v311
    %3218 = vmatpush.msra.mxu0 %v307
    %3219 = vmatpush.msra.mxu0 %v303
    %3220 = vmatpush.msra.mxu0 %v299
    %3221 = vmatpush.msra.mxu0 %v295
    %3222 = vmatpush.msra.mxu0 %v291
    %3223 = vmatmul.f32.gmra.mxu0 %v2963
    %v3224 = vpop.f32.mrf.mxu0
    %v3225 = vadd.f32 0.0, %v3224
    %3226 = vdwg.mxu0
    %3227 = vmatpush.msra.mxu0 %v352
    %3228 = vmatpush.msra.mxu0 %v348
    %3229 = vmatpush.msra.mxu0 %v344
    %3230 = vmatpush.msra.mxu0 %v340
    %3231 = vmatpush.msra.mxu0 %v336
    %3232 = vmatpush.msra.mxu0 %v332
    %3233 = vmatpush.msra.mxu0 %v328
    %3234 = vmatpush.msra.mxu0 %v324
    %3235 = vmatpush.msra.mxu0 %v320
    %3236 = vmatpush.msra.mxu0 %v316
    %3237 = vmatpush.msra.mxu0 %v312
    %3238 = vmatpush.msra.mxu0 %v308
    %3239 = vmatpush.msra.mxu0 %v304
    %3240 = vmatpush.msra.mxu0 %v300
    %3241 = vmatpush.msra.mxu0 %v296
    %3242 = vmatpush.msra.mxu0 %v292
    %3243 = vmatmul.f32.gmra.mxu0 %v2963
    %v3244 = vpop.f32.mrf.mxu0
    %v3245 = vadd.f32 0.0, %v3244
    %3246 = vdwg.mxu0
    %3247 = vmatpush.msra.mxu0 %v353
    %3248 = vmatpush.msra.mxu0 %v349
    %3249 = vmatpush.msra.mxu0 %v345
    %3250 = vmatpush.msra.mxu0 %v341
    %3251 = vmatpush.msra.mxu0 %v337
    %3252 = vmatpush.msra.mxu0 %v333
    %3253 = vmatpush.msra.mxu0 %v329
    %3254 = vmatpush.msra.mxu0 %v325
    %3255 = vmatpush.msra.mxu0 %v321
    %3256 = vmatpush.msra.mxu0 %v317
    %3257 = vmatpush.msra.mxu0 %v313
    %3258 = vmatpush.msra.mxu0 %v309
    %3259 = vmatpush.msra.mxu0 %v305
    %3260 = vmatpush.msra.mxu0 %v301
    %3261 = vmatpush.msra.mxu0 %v297
    %3262 = vmatpush.msra.mxu0 %v293
    %3263 = vmatmul.f32.gmra.mxu0 %v2963
    %v3264 = vpop.f32.mrf.mxu0
    %v3265 = vadd.f32 0.0, %v3264
    %3266 = vdwg.mxu0
    %v3271 = vrot.slane %v3225, 6
    %v3272 = vrot.slane %v3245, 4
    %v3273 = vrot.slane %v3265, 2
    %v3274 = vsel %vm247, %v3205, %v3271
    %v3275 = vsel %vm249, %v3272, %v3273
    %v3276 = vsel %vm251, %v3274, %v3275
    %v3278 = vadd.f32 %v281, %v3276
    %v3279 = vxor.u32 %v3278, 2147483648
    %v3280 = vmul.f32 %v3279, 1.442695
    %v3281 = vpow.pop %v3280
    %v3282 = vadd.f32 %v3281, 1.0
    %v3283 = vrcp.pop %v3282
    %v3284 = vmul.f32 %v3282, %v3283
    %v3285 = vsub.f32 1.0, %v3284
    %v3286 = vmul.f32 %v3283, %v3285
    %v3287 = vadd.f32 %v3283, %v3286
    %vm3288 = vweird.f32 %v3282
    %vm3289 = vweird.f32 %v3283
    %vm3290 = vmor %vm3288, %vm3289
    %v3291 = vsel %vm3290, %v3283, %v3287
    %v3292 = vand.u32 2147483647, %v3282
    %vm3293 = vcmp.eq.f32.partialorder %v3292, 8.507059e+37
    %v3294 = vand.u32 %v3282, 2147483648
    %v3295 = vor.u32 1.1754944e-38, %v3294
    %v3296 = vsel %vm3293, %v3295, %v3291
    %v3297 = vmul.f32 1.0, %v3296
    %v3299 = vrot.slane %v3278, 2
    %v3301 = vxor.u32 %v3299, 2147483648
    %v3302 = vmul.f32 %v3301, 1.442695
    %v3303 = vpow.pop %v3302
    %v3304 = vadd.f32 %v3303, 1.0
    %v3305 = vrcp.pop %v3304
    %v3306 = vmul.f32 %v3304, %v3305
    %v3307 = vsub.f32 1.0, %v3306
    %v3308 = vmul.f32 %v3305, %v3307
    %v3309 = vadd.f32 %v3305, %v3308
    %vm3310 = vweird.f32 %v3304
    %vm3311 = vweird.f32 %v3305
    %vm3312 = vmor %vm3310, %vm3311
    %v3313 = vsel %vm3312, %v3305, %v3309
    %v3314 = vand.u32 2147483647, %v3304
    %vm3315 = vcmp.eq.f32.partialorder %v3314, 8.507059e+37
    %v3316 = vand.u32 %v3304, 2147483648
    %v3317 = vor.u32 1.1754944e-38, %v3316
    %v3318 = vsel %vm3315, %v3317, %v3313
    %v3319 = vmul.f32 1.0, %v3318
    %v3320 = vrot.slane %v3278, 4
    %v3322 = vtanh.pop %v3320
    %v3323 = vrot.slane %v3278, 6
    %v3325 = vxor.u32 %v3323, 2147483648
    %v3326 = vmul.f32 %v3325, 1.442695
    %v3327 = vpow.pop %v3326
    %v3328 = vadd.f32 %v3327, 1.0
    %v3329 = vrcp.pop %v3328
    %v3330 = vmul.f32 %v3328, %v3329
    %v3331 = vsub.f32 1.0, %v3330
    %v3332 = vmul.f32 %v3329, %v3331
    %v3333 = vadd.f32 %v3329, %v3332
    %vm3334 = vweird.f32 %v3328
    %vm3335 = vweird.f32 %v3329
    %vm3336 = vmor %vm3334, %vm3335
    %v3337 = vsel %vm3336, %v3329, %v3333
    %v3338 = vand.u32 2147483647, %v3328
    %vm3339 = vcmp.eq.f32.partialorder %v3338, 8.507059e+37
    %v3340 = vand.u32 %v3328, 2147483648
    %v3341 = vor.u32 1.1754944e-38, %v3340
    %v3342 = vsel %vm3339, %v3341, %v3337
    %v3343 = vmul.f32 1.0, %v3342
    %v3344 = vmul.f32 %v3319, %v2961
    %v3345 = vmul.f32 %v3297, %v3322
    %v3346 = vadd.f32 %v3344, %v3345
    %v3347 = vtanh.pop %v3346
    %v3348 = vmul.f32 %v3343, %v3347
    %3349 = vmatpush.msra.mxu0 %v414
    %3350 = vmatpush.msra.mxu0 %v410
    %3351 = vmatpush.msra.mxu0 %v406
    %3352 = vmatpush.msra.mxu0 %v402
    %3353 = vmatpush.msra.mxu0 %v398
    %3354 = vmatpush.msra.mxu0 %v394
    %3355 = vmatpush.msra.mxu0 %v390
    %3356 = vmatpush.msra.mxu0 %v386
    %3357 = vmatpush.msra.mxu0 %v382
    %3358 = vmatpush.msra.mxu0 %v378
    %3359 = vmatpush.msra.mxu0 %v374
    %3360 = vmatpush.msra.mxu0 %v370
    %3361 = vmatpush.msra.mxu0 %v366
    %3362 = vmatpush.msra.mxu0 %v362
    %3363 = vmatpush.msra.mxu0 %v358
    %3364 = vmatpush.msra.mxu0 %v354
    %3365 = vmatmul.f32.gmra.mxu0 %v3348
    %v3366 = vpop.f32.mrf.mxu0
    %v3367 = vadd.f32 %v484, %v3366
    %3368 = vdwg.mxu0
    %3369 = vmatpush.msra.mxu0 %v478
    %3370 = vmatpush.msra.mxu0 %v474
    %3371 = vmatpush.msra.mxu0 %v470
    %3372 = vmatpush.msra.mxu0 %v466
    %3373 = vmatpush.msra.mxu0 %v462
    %3374 = vmatpush.msra.mxu0 %v458
    %3375 = vmatpush.msra.mxu0 %v454
    %3376 = vmatpush.msra.mxu0 %v450
    %3377 = vmatpush.msra.mxu0 %v446
    %3378 = vmatpush.msra.mxu0 %v442
    %3379 = vmatpush.msra.mxu0 %v438
    %3380 = vmatpush.msra.mxu0 %v434
    %3381 = vmatpush.msra.mxu0 %v430
    %3382 = vmatpush.msra.mxu0 %v426
    %3383 = vmatpush.msra.mxu0 %v422
    %3384 = vmatpush.msra.mxu0 %v418
    %3385 = vmatmul.f32.gmra.mxu0 %v3186
    %v3386 = vpop.f32.mrf.mxu0
    %v3387 = vadd.f32 %v3367, %v3386
    %3388 = vdwg.mxu0
    %3389 = vmatpush.msra.mxu0 %v415
    %3390 = vmatpush.msra.mxu0 %v411
    %3391 = vmatpush.msra.mxu0 %v407
    %3392 = vmatpush.msra.mxu0 %v403
    %3393 = vmatpush.msra.mxu0 %v399
    %3394 = vmatpush.msra.mxu0 %v395
    %3395 = vmatpush.msra.mxu0 %v391
    %3396 = vmatpush.msra.mxu0 %v387
    %3397 = vmatpush.msra.mxu0 %v383
    %3398 = vmatpush.msra.mxu0 %v379
    %3399 = vmatpush.msra.mxu0 %v375
    %3400 = vmatpush.msra.mxu0 %v371
    %3401 = vmatpush.msra.mxu0 %v367
    %3402 = vmatpush.msra.mxu0 %v363
    %3403 = vmatpush.msra.mxu0 %v359
    %3404 = vmatpush.msra.mxu0 %v355
    %3405 = vmatmul.f32.gmra.mxu0 %v3348
    %v3406 = vpop.f32.mrf.mxu0
    %v3407 = vadd.f32 %v485, %v3406
    %3408 = vdwg.mxu0
    %3409 = vmatpush.msra.mxu0 %v479
    %3410 = vmatpush.msra.mxu0 %v475
    %3411 = vmatpush.msra.mxu0 %v471
    %3412 = vmatpush.msra.mxu0 %v467
    %3413 = vmatpush.msra.mxu0 %v463
    %3414 = vmatpush.msra.mxu0 %v459
    %3415 = vmatpush.msra.mxu0 %v455
    %3416 = vmatpush.msra.mxu0 %v451
    %3417 = vmatpush.msra.mxu0 %v447
    %3418 = vmatpush.msra.mxu0 %v443
    %3419 = vmatpush.msra.mxu0 %v439
    %3420 = vmatpush.msra.mxu0 %v435
    %3421 = vmatpush.msra.mxu0 %v431
    %3422 = vmatpush.msra.mxu0 %v427
    %3423 = vmatpush.msra.mxu0 %v423
    %3424 = vmatpush.msra.mxu0 %v419
    %3425 = vmatmul.f32.gmra.mxu0 %v3186
    %v3426 = vpop.f32.mrf.mxu0
    %v3427 = vadd.f32 %v3407, %v3426
    %3428 = vdwg.mxu0
    %3429 = vmatpush.msra.mxu0 %v416
    %3430 = vmatpush.msra.mxu0 %v412
    %3431 = vmatpush.msra.mxu0 %v408
    %3432 = vmatpush.msra.mxu0 %v404
    %3433 = vmatpush.msra.mxu0 %v400
    %3434 = vmatpush.msra.mxu0 %v396
    %3435 = vmatpush.msra.mxu0 %v392
    %3436 = vmatpush.msra.mxu0 %v388
    %3437 = vmatpush.msra.mxu0 %v384
    %3438 = vmatpush.msra.mxu0 %v380
    %3439 = vmatpush.msra.mxu0 %v376
    %3440 = vmatpush.msra.mxu0 %v372
    %3441 = vmatpush.msra.mxu0 %v368
    %3442 = vmatpush.msra.mxu0 %v364
    %3443 = vmatpush.msra.mxu0 %v360
    %3444 = vmatpush.msra.mxu0 %v356
    %3445 = vmatmul.f32.gmra.mxu0 %v3348
    %v3446 = vpop.f32.mrf.mxu0
    %v3447 = vadd.f32 %v486, %v3446
    %3448 = vdwg.mxu0
    %3449 = vmatpush.msra.mxu0 %v480
    %3450 = vmatpush.msra.mxu0 %v476
    %3451 = vmatpush.msra.mxu0 %v472
    %3452 = vmatpush.msra.mxu0 %v468
    %3453 = vmatpush.msra.mxu0 %v464
    %3454 = vmatpush.msra.mxu0 %v460
    %3455 = vmatpush.msra.mxu0 %v456
    %3456 = vmatpush.msra.mxu0 %v452
    %3457 = vmatpush.msra.mxu0 %v448
    %3458 = vmatpush.msra.mxu0 %v444
    %3459 = vmatpush.msra.mxu0 %v440
    %3460 = vmatpush.msra.mxu0 %v436
    %3461 = vmatpush.msra.mxu0 %v432
    %3462 = vmatpush.msra.mxu0 %v428
    %3463 = vmatpush.msra.mxu0 %v424
    %3464 = vmatpush.msra.mxu0 %v420
    %3465 = vmatmul.f32.gmra.mxu0 %v3186
    %v3466 = vpop.f32.mrf.mxu0
    %v3467 = vadd.f32 %v3447, %v3466
    %3468 = vdwg.mxu0
    %3469 = vmatpush.msra.mxu0 %v417
    %3470 = vmatpush.msra.mxu0 %v413
    %3471 = vmatpush.msra.mxu0 %v409
    %3472 = vmatpush.msra.mxu0 %v405
    %3473 = vmatpush.msra.mxu0 %v401
    %3474 = vmatpush.msra.mxu0 %v397
    %3475 = vmatpush.msra.mxu0 %v393
    %3476 = vmatpush.msra.mxu0 %v389
    %3477 = vmatpush.msra.mxu0 %v385
    %3478 = vmatpush.msra.mxu0 %v381
    %3479 = vmatpush.msra.mxu0 %v377
    %3480 = vmatpush.msra.mxu0 %v373
    %3481 = vmatpush.msra.mxu0 %v369
    %3482 = vmatpush.msra.mxu0 %v365
    %3483 = vmatpush.msra.mxu0 %v361
    %3484 = vmatpush.msra.mxu0 %v357
    %3485 = vmatmul.f32.gmra.mxu0 %v3348
    %v3486 = vpop.f32.mrf.mxu0
    %v3487 = vadd.f32 %v487, %v3486
    %3488 = vdwg.mxu0
    %3489 = vmatpush.msra.mxu0 %v481
    %3490 = vmatpush.msra.mxu0 %v477
    %3491 = vmatpush.msra.mxu0 %v473
    %3492 = vmatpush.msra.mxu0 %v469
    %3493 = vmatpush.msra.mxu0 %v465
    %3494 = vmatpush.msra.mxu0 %v461
    %3495 = vmatpush.msra.mxu0 %v457
    %3496 = vmatpush.msra.mxu0 %v453
    %3497 = vmatpush.msra.mxu0 %v449
    %3498 = vmatpush.msra.mxu0 %v445
    %3499 = vmatpush.msra.mxu0 %v441
    %3500 = vmatpush.msra.mxu0 %v437
    %3501 = vmatpush.msra.mxu0 %v433
    %3502 = vmatpush.msra.mxu0 %v429
    %3503 = vmatpush.msra.mxu0 %v425
    %3504 = vmatpush.msra.mxu0 %v421
    %3505 = vmatmul.f32.gmra.mxu0 %v3186
    %v3506 = vpop.f32.mrf.mxu0
    %v3507 = vadd.f32 %v3487, %v3506
    %3508 = vdwg.mxu0
    %v3509 = vxor.u32 %v3387, 2147483648
    %v3510 = vmul.f32 %v3509, 1.442695
    %v3511 = vpow.pop %v3510
    %v3512 = vadd.f32 %v3511, 1.0
    %v3513 = vrcp.pop %v3512
    %v3514 = vmul.f32 %v3512, %v3513
    %v3515 = vsub.f32 1.0, %v3514
    %v3516 = vmul.f32 %v3513, %v3515
    %v3517 = vadd.f32 %v3513, %v3516
    %vm3518 = vweird.f32 %v3512
    %vm3519 = vweird.f32 %v3513
    %vm3520 = vmor %vm3518, %vm3519
    %v3521 = vsel %vm3520, %v3513, %v3517
    %v3522 = vand.u32 2147483647, %v3512
    %vm3523 = vcmp.eq.f32.partialorder %v3522, 8.507059e+37
    %v3524 = vand.u32 %v3512, 2147483648
    %v3525 = vor.u32 1.1754944e-38, %v3524
    %v3526 = vsel %vm3523, %v3525, %v3521
    %v3527 = vmul.f32 1.0, %v3526
    %v3528 = vxor.u32 %v3427, 2147483648
    %v3529 = vmul.f32 %v3528, 1.442695
    %v3530 = vpow.pop %v3529
    %v3531 = vadd.f32 %v3530, 1.0
    %v3532 = vrcp.pop %v3531
    %v3533 = vmul.f32 %v3531, %v3532
    %v3534 = vsub.f32 1.0, %v3533
    %v3535 = vmul.f32 %v3532, %v3534
    %v3536 = vadd.f32 %v3532, %v3535
    %vm3537 = vweird.f32 %v3531
    %vm3538 = vweird.f32 %v3532
    %vm3539 = vmor %vm3537, %vm3538
    %v3540 = vsel %vm3539, %v3532, %v3536
    %v3541 = vand.u32 2147483647, %v3531
    %vm3542 = vcmp.eq.f32.partialorder %v3541, 8.507059e+37
    %v3543 = vand.u32 %v3531, 2147483648
    %v3544 = vor.u32 1.1754944e-38, %v3543
    %v3545 = vsel %vm3542, %v3544, %v3540
    %v3546 = vmul.f32 1.0, %v3545
    %v3547 = vtanh.pop %v3467
    %v3548 = vxor.u32 %v3507, 2147483648
    %v3549 = vmul.f32 %v3548, 1.442695
    %v3550 = vpow.pop %v3549
    %v3551 = vadd.f32 %v3550, 1.0
    %v3552 = vrcp.pop %v3551
    %v3553 = vmul.f32 %v3551, %v3552
    %v3554 = vsub.f32 1.0, %v3553
    %v3555 = vmul.f32 %v3552, %v3554
    %v3556 = vadd.f32 %v3552, %v3555
    %vm3557 = vweird.f32 %v3551
    %vm3558 = vweird.f32 %v3552
    %vm3559 = vmor %vm3557, %vm3558
    %v3560 = vsel %vm3559, %v3552, %v3556
    %v3561 = vand.u32 2147483647, %v3551
    %vm3562 = vcmp.eq.f32.partialorder %v3561, 8.507059e+37
    %v3563 = vand.u32 %v3551, 2147483648
    %v3564 = vor.u32 1.1754944e-38, %v3563
    %v3565 = vsel %vm3562, %v3564, %v3560
    %v3566 = vmul.f32 1.0, %v3565
    %v3567 = vmul.f32 %v3546, %v3184
    %v3568 = vmul.f32 %v3527, %v3547
    %v3569 = vadd.f32 %v3567, %v3568
    %v3570 = vtanh.pop %v3569
    %v3571 = vmul.f32 %v3566, %v3570
    %v3572 = vld [vmem:[%s6] sm:$0x1]
    %v3574 = vperm.slane %v3572, 0
    %v3576 = vmul.f32 %v3571, %v3574
    %v3577 = vsel %vm247, %v3576, 0.0
    %3578 = vadd.xlane.f32.xlu0 %v3577
    %v3579 = vpop.xlane.xlu0 %3578
    %v3580 = vld [vmem:[#allocation2] sm:$0x1]
    %v3582 = vperm.slane %v3580, 0
    %v3584 = vadd.f32 %v3579, %v3582
    %v3585 = vmax.f32 %v3584, 0.0
    %vm3586 = vcmask 1024
    %3587 = vst.msk [vmem:[%s8] sm:$0x3] %vm3586, %v3585
    // Predicated region
    $region46: #{tpu_custom_call.1} parent=1 // pred_check
      _
    $region47: #{tpu_custom_call.1} parent=1 // pred_check_branch
      %3589 = sbr.rel (0) target = $region49
    $region48: #{tpu_custom_call.1} parent=1 // pred_region
      _
    $region49: #{tpu_custom_call.1} parent=1 // pred_fallthru
      _
    // Predicated region
    $region50: #{tpu_custom_call.1} parent=1 // pred_check
      _
    $region51: #{tpu_custom_call.1} parent=1 // pred_check_branch
      %3591 = sbr.rel (0) target = $region53
    $region52: #{tpu_custom_call.1} parent=1 // pred_region
      _
    $region53: #{tpu_custom_call.1} parent=1 // pred_fallthru
      _
    %3592 = vsyncpa [#allocation4], 1
    %3593 = vsyncpa [#allocation6], 1

</llo_original>
